<compile_context>
chip_gen: v7x
topology: tpu7x:2x2x1
jax: 0.10.0
libtpu: 0.0.40
codegen_flags: <defaults>
</compile_context>

<pallas_src>
import functools
import math

import jax
import jax.numpy as jnp
from jax.experimental import pallas as pl
from jax.experimental.pallas import tpu as pltpu


# ----------------------------------------------------------------------------
# small helpers
# ----------------------------------------------------------------------------
def _choose_tb(batch, tokens_per_batch, max_rows=512):
    """Batch elements per tile: big row tiles for the MXU, but always >= 2 grid
    steps so megacore (v7x) has work for both TensorCores and DMA pipelines."""
    divisors = [d for d in range(1, batch + 1) if batch % d == 0]
    fitting = [d for d in divisors if d * tokens_per_batch <= max_rows] or [1]
    tb = max(fitting)
    if batch >= 2:
        tb = min(tb, max(d for d in divisors if d <= batch // 2))
    return tb


def _const_spec(shape):
    """Whole-array weight block with a constant index.  Single-buffered: constant
    index gains nothing from double buffering and 2x weight residency is what
    overflows v7x's 64 MiB VMEM at production D."""
    zeros = (0,) * len(shape)
    return pl.BlockSpec(shape, lambda i, _z=zeros: _z,
                        pipeline_mode=pl.Buffered(1))


def _layer_spec(stacked_shape):
    """Per-layer weight slab of a (depth, ...) stacked array, selected by the layer
    grid axis.  Default double buffering = next layer's weights prefetch under the
    current layer's compute."""
    rest = tuple(int(s) for s in stacked_shape[1:])
    zeros = (0,) * len(rest)
    return pl.BlockSpec((1,) + rest, lambda i, l, _z=zeros: (l,) + _z)


def _layernorm(h, w, b, eps=1e-5):
    """f32 LayerNorm over the last dim.  h:(M,D)  w,b:(1,D)."""
    mu = jnp.mean(h, axis=-1, keepdims=True)
    var = jnp.mean(jnp.square(h - mu), axis=-1, keepdims=True)
    return (h - mu) * jax.lax.rsqrt(var + eps) * w + b


# ----------------------------------------------------------------------------
# Pallas kernels
# ----------------------------------------------------------------------------
def _patch_embed_kernel(x_ref, w_ref, b_ref, pos_ref, o_ref):
    """Per-patch linear projection + positional embedding.

    x:(tb,N,Kp) bf16 (Kp lane-padded), w:(Kp,D) bf16, b:(1,D) f32, pos:(1,N,D) f32
    -> (tb,N,D) bf16
    """
    TB, N, K = x_ref.shape
    D = w_ref.shape[1]
    x = x_ref[...].reshape(TB * N, K)
    y = jnp.dot(x, w_ref[...], preferred_element_type=jnp.float32) + b_ref[...]
    y = y.reshape(TB, N, D) + pos_ref[...]
    o_ref[...] = y.astype(o_ref.dtype)


def _blocks_kernel(x_ref, cond_ref,
                   ln1w_ref, ln1b_ref, qkvw_ref, qkvb_ref, projw_ref, projb_ref,
                   ln2w_ref, ln2b_ref, fc1w_ref, fc1b_ref, fc2w_ref, fc2b_ref,
                   o_ref, res_ref, *, num_heads):
    """All transformer blocks for one token tile.  Grid = (batch_tiles, depth):
    weights are selected per layer, the f32 residual stream stays resident in a
    VMEM scratch across the whole depth loop, output is written once at the end.

    x:(tb,N,D) bf16, cond:(tb,1,D) f32 (broadcast over tokens in-kernel).
    x = x + Attn(LN1(x + cond)); x = x + MLP(LN2(x + cond))
    """
    layer = pl.program_id(1)
    TB, N, D = x_ref.shape
    T = TB * N
    H = num_heads
    hd = D // H

    @pl.when(layer == 0)
    def _():
        res_ref[...] = x_ref[...].astype(jnp.float32)

    x = res_ref[...]                                  # (TB, N, D) f32 resident carry
    cond = cond_ref[...]                              # (TB, 1, D) f32

    # ---- attention branch:  x = x + Attn(LN1(x + cond)) ----
    h1 = _layernorm((x + cond).reshape(T, D), ln1w_ref[0], ln1b_ref[0])
    qkv = jnp.dot(h1.astype(jnp.bfloat16), qkvw_ref[0],
                  preferred_element_type=jnp.float32) + qkvb_ref[0]        # (T, 3D)
    qkv = qkv.reshape(TB, N, 3 * D)                   # major split of rows: free

    # Static head loop (H small), batched over the batch tile inside: no per-batch
    # unroll, no stacks; only H lane slices per q/k/v and one final concat.
    ctx = []
    for h in range(H):
        qh = qkv[:, :, h * hd:(h + 1) * hd].astype(jnp.bfloat16)           # (TB,N,hd)
        kh = qkv[:, :, D + h * hd:D + (h + 1) * hd].astype(jnp.bfloat16)
        vh = qkv[:, :, 2 * D + h * hd:2 * D + (h + 1) * hd].astype(jnp.bfloat16)
        # head scale already folded into the q projection weights/bias
        s = jnp.einsum("bnd,bmd->bnm", qh, kh,
                       preferred_element_type=jnp.float32)                 # (TB,N,N)
        s = s - jnp.max(s, axis=-1, keepdims=True)
        p = jnp.exp(s)
        p = p / jnp.sum(p, axis=-1, keepdims=True)    # exact softmax (torch parity)
        ctx.append(jnp.einsum("bnm,bmd->bnd", p.astype(jnp.bfloat16), vh,
                              preferred_element_type=jnp.float32))         # (TB,N,hd)
    attn = jnp.concatenate(ctx, axis=-1).reshape(T, D)
    attn = jnp.dot(attn.astype(jnp.bfloat16), projw_ref[0],
                   preferred_element_type=jnp.float32) + projb_ref[0]
    x1 = x.reshape(T, D) + attn

    # ---- MLP branch:  x = x + MLP(LN2(x + cond)) ----
    h2 = _layernorm((x1.reshape(TB, N, D) + cond).reshape(T, D),
                    ln2w_ref[0], ln2b_ref[0])
    m = jnp.dot(h2.astype(jnp.bfloat16), fc1w_ref[0],
                preferred_element_type=jnp.float32) + fc1b_ref[0]
    m = jax.nn.gelu(m, approximate=True)  # TODO(synk): torch nn.GELU is erf-exact
    m = jnp.dot(m.astype(jnp.bfloat16), fc2w_ref[0],
                preferred_element_type=jnp.float32) + fc2b_ref[0]
    x2 = (x1 + m).reshape(TB, N, D)

    res_ref[...] = x2
    @pl.when(layer == pl.num_programs(1) - 1)
    def _():
        o_ref[...] = x2.astype(o_ref.dtype)


def _final_kernel(x_ref, lnw_ref, lnb_ref, pw_ref, pb_ref, o_ref):
    """Final LayerNorm + (lane-padded) output projection over tb*N token rows."""
    TB, N, D = x_ref.shape
    Pp = pw_ref.shape[1]
    x = x_ref[...].astype(jnp.float32).reshape(TB * N, D)
    h = _layernorm(x, lnw_ref[...], lnb_ref[...])
    y = jnp.dot(h.astype(jnp.bfloat16), pw_ref[...],
                preferred_element_type=jnp.float32) + pb_ref[...]
    o_ref[...] = y.reshape(TB, N, Pp).astype(o_ref.dtype)


# ----------------------------------------------------------------------------
# Pallas wrappers
# ----------------------------------------------------------------------------
def pallas_patch_embed(xp, w, b, pos, *, tb):
    B, N, K = xp.shape
    D = w.shape[1]
    cost = pl.CostEstimate(
        flops=2 * B * N * K * D, transcendentals=0,
        bytes_accessed=B * N * K * 2 + K * D * 2 + D * 4 + N * D * 4 + B * N * D * 2)
    return pl.pallas_call(
        _patch_embed_kernel,
        out_shape=jax.ShapeDtypeStruct((B, N, D), jnp.bfloat16),
        grid=(B // tb,),
        in_specs=[
            pl.BlockSpec((tb, N, K), lambda i: (i, 0, 0)),
            _const_spec((K, D)), _const_spec((1, D)), _const_spec((1, N, D)),
        ],
        out_specs=pl.BlockSpec((tb, N, D), lambda i: (i, 0, 0)),
        compiler_params=pltpu.CompilerParams(dimension_semantics=("parallel",)),
        cost_estimate=cost,
    )(xp, w, b, pos)


def pallas_transformer_blocks(x, cond3, sp, *, num_heads, tb):
    B, N, D = x.shape
    depth = int(sp["qkv_w"].shape[0])
    Hm = int(sp["fc1_w"].shape[2])

    flops = depth * 2 * B * N * D * (3 * D + D + 2 * Hm + 2 * N)
    transcendentals = depth * (B * num_heads * N * N + B * N * Hm)
    bytes_accessed = (2 * B * N * D * 2 + B * D * 4
                      + depth * 2 * (3 * D * D + D * D + 2 * D * Hm))
    cost = pl.CostEstimate(flops=flops, transcendentals=transcendentals,
                           bytes_accessed=bytes_accessed)

    tok_spec = pl.BlockSpec((tb, N, D), lambda i, l: (i, 0, 0))
    cond_spec = pl.BlockSpec((tb, 1, D), lambda i, l: (i, 0, 0))

    return pl.pallas_call(
        functools.partial(_blocks_kernel, num_heads=num_heads),
        out_shape=jax.ShapeDtypeStruct((B, N, D), jnp.bfloat16),
        grid=(B // tb, depth),
        in_specs=[
            tok_spec, cond_spec,
            _layer_spec(sp["ln1_w"].shape), _layer_spec(sp["ln1_b"].shape),
            _layer_spec(sp["qkv_w"].shape), _layer_spec(sp["qkv_b"].shape),
            _layer_spec(sp["proj_w"].shape), _layer_spec(sp["proj_b"].shape),
            _layer_spec(sp["ln2_w"].shape), _layer_spec(sp["ln2_b"].shape),
            _layer_spec(sp["fc1_w"].shape), _layer_spec(sp["fc1_b"].shape),
            _layer_spec(sp["fc2_w"].shape), _layer_spec(sp["fc2_b"].shape),
        ],
        out_specs=pl.BlockSpec((tb, N, D), lambda i, l: (i, 0, 0)),
        scratch_shapes=[pltpu.VMEM((tb, N, D), jnp.float32)],   # resident residual
        compiler_params=pltpu.CompilerParams(
            dimension_semantics=("parallel", "arbitrary")),
        cost_estimate=cost,
    )(x, cond3,
      sp["ln1_w"], sp["ln1_b"], sp["qkv_w"], sp["qkv_b"],
      sp["proj_w"], sp["proj_b"], sp["ln2_w"], sp["ln2_b"],
      sp["fc1_w"], sp["fc1_b"], sp["fc2_w"], sp["fc2_b"])


def pallas_final(x, ln_w, ln_b, pw, pb, *, tb):
    B, N, D = x.shape
    Pp = pw.shape[1]
    cost = pl.CostEstimate(
        flops=2 * B * N * D * Pp, transcendentals=0,
        bytes_accessed=B * N * D * 2 + D * Pp * 2 + Pp * 4 + 2 * D * 4 + B * N * Pp * 4)
    return pl.pallas_call(
        _final_kernel,
        out_shape=jax.ShapeDtypeStruct((B, N, Pp), jnp.float32),
        grid=(B // tb,),
        in_specs=[
            pl.BlockSpec((tb, N, D), lambda i: (i, 0, 0)),
            _const_spec((1, D)), _const_spec((1, D)),
            _const_spec((D, Pp)), _const_spec((1, Pp)),
        ],
        out_specs=pl.BlockSpec((tb, N, Pp), lambda i: (i, 0, 0)),
        compiler_params=pltpu.CompilerParams(dimension_semantics=("parallel",)),
        cost_estimate=cost,
    )(x, ln_w, ln_b, pw, pb)


# ----------------------------------------------------------------------------
# Parameter init (deterministic, synthetic — mirrors the module's __init__ shapes)
# ----------------------------------------------------------------------------
def _trunc_normal(key, shape, std=0.02):
    return std * jax.random.truncated_normal(key, -2.0, 2.0, shape, jnp.float32)


def init_dit_params(key, *, img_size, patch_size, in_channels, embed_dim,
                    depth, num_heads, mlp_ratio, num_classes):
    D = embed_dim
    p = patch_size
    N = (img_size // p) ** 2
    Hm = int(D * mlp_ratio)
    Pdim = p * p * in_channels

    keys = iter(jax.random.split(key, 8 + depth * 6))
    params = {
        "patch_w": _trunc_normal(next(keys), (in_channels * p * p, D)),
        "patch_b": jnp.zeros((1, D), jnp.float32),
        "pos_embed": _trunc_normal(next(keys), (1, N, D)),
        "time_w1": _trunc_normal(next(keys), (D, 4 * D)),
        "time_b1": jnp.zeros((1, 4 * D), jnp.float32),
        "time_w2": _trunc_normal(next(keys), (4 * D, D)),
        "time_b2": jnp.zeros((1, D), jnp.float32),
        "class_embed": _trunc_normal(next(keys), (num_classes, D)),
        "norm_w": jnp.ones((1, D), jnp.float32),
        "norm_b": jnp.zeros((1, D), jnp.float32),
        "out_w": _trunc_normal(next(keys), (D, Pdim)),
        "out_b": jnp.zeros((1, Pdim), jnp.float32),
        "blocks": [],
    }
    for _ in range(depth):
        params["blocks"].append({
            "ln1_w": jnp.ones((1, D), jnp.float32),
            "ln1_b": jnp.zeros((1, D), jnp.float32),
            "qkv_w": _trunc_normal(next(keys), (D, 3 * D)),
            "qkv_b": jnp.zeros((1, 3 * D), jnp.float32),
            "proj_w": _trunc_normal(next(keys), (D, D)),
            "proj_b": jnp.zeros((1, D), jnp.float32),
            "ln2_w": jnp.ones((1, D), jnp.float32),
            "ln2_b": jnp.zeros((1, D), jnp.float32),
            "fc1_w": _trunc_normal(next(keys), (D, Hm)),
            "fc1_b": jnp.zeros((1, Hm), jnp.float32),
            "fc2_w": _trunc_normal(next(keys), (Hm, D)),
            "fc2_b": jnp.zeros((1, D), jnp.float32),
        })
    return params


def prepare_inference_params(params, *, num_heads):
    """Inference-time repack: bf16 weights, attention scale folded into the q
    projection, per-layer weights stacked (depth, ...), patch-feature dim and
    output projection lane-padded to multiples of 128."""
    bf = jnp.bfloat16
    D = params["patch_w"].shape[1]
    hd = D // num_heads
    scale = hd ** -0.5

    # lane-pad the output projection
    P = params["out_w"].shape[1]
    Pp = ((P + 127) // 128) * 128
    out_w, out_b = params["out_w"], params["out_b"]
    if Pp != P:
        out_w = jnp.pad(out_w, ((0, 0), (0, Pp - P)))
        out_b = jnp.pad(out_b, ((0, 0), (0, Pp - P)))

    # lane-pad the patchified feature dim
    K = params["patch_w"].shape[0]
    Kp = ((K + 127) // 128) * 128
    patch_w = params["patch_w"]
    if Kp != K:
        patch_w = jnp.pad(patch_w, ((0, Kp - K), (0, 0)))

    def stack(name):
        return jnp.stack([blk[name] for blk in params["blocks"]], axis=0)

    qkv_w = stack("qkv_w")                         # (depth, D, 3D)
    qkv_b = stack("qkv_b")                         # (depth, 1, 3D)
    qkv_w = qkv_w.at[:, :, :D].multiply(scale)     # fold 1/sqrt(hd) into q
    qkv_b = qkv_b.at[:, :, :D].multiply(scale)

    stacked = {
        "ln1_w": stack("ln1_w"), "ln1_b": stack("ln1_b"),
        "qkv_w": qkv_w.astype(bf), "qkv_b": qkv_b,
        "proj_w": stack("proj_w").astype(bf), "proj_b": stack("proj_b"),
        "ln2_w": stack("ln2_w"), "ln2_b": stack("ln2_b"),
        "fc1_w": stack("fc1_w").astype(bf), "fc1_b": stack("fc1_b"),
        "fc2_w": stack("fc2_w").astype(bf), "fc2_b": stack("fc2_b"),
    }
    return {
        "patch_w": patch_w.astype(bf),
        "patch_b": params["patch_b"],
        "pos_embed": params["pos_embed"],
        "time_w1": params["time_w1"], "time_b1": params["time_b1"],   # f32 (XLA path)
        "time_w2": params["time_w2"], "time_b2": params["time_b2"],
        "class_embed": params["class_embed"],
        "norm_w": params["norm_w"], "norm_b": params["norm_b"],
        "out_w": out_w.astype(bf), "out_b": out_b,
        "stacked": stacked,
    }


# ----------------------------------------------------------------------------
# DiT forward
# ----------------------------------------------------------------------------
def dit_forward(params, x, timesteps, class_labels, *, patch_size, num_heads):
    B, C, Himg, Wimg = x.shape
    p = patch_size
    h = Himg // p
    w = Wimg // p
    N = h * w
    D = params["patch_w"].shape[1]
    Kp = params["patch_w"].shape[0]                 # lane-padded feature dim
    P = p * p * C
    tb = _choose_tb(B, N)

    # PatchEmbed: strided conv == per-patch linear projection.  Patchify is layout
    # glue (XLA); projection + pos-embed add run in one Pallas kernel, bf16 in,
    # feature dim zero-padded to 128 lanes.
    xp = (x.reshape(B, C, h, p, w, p)
            .transpose(0, 2, 4, 1, 3, 5)            # (B, h, w, C, p, p)
            .reshape(B, N, P))
    if Kp != P:
        xp = jnp.pad(xp, ((0, 0), (0, 0), (0, Kp - P)))
    xp = xp.astype(jnp.bfloat16)
    tok = pallas_patch_embed(xp, params["patch_w"], params["patch_b"],
                             params["pos_embed"], tb=tb)               # (B,N,D) bf16

    # Sinusoidal time embedding + time-MLP + class-embed in plain XLA (tiny; fuses;
    # f32 with exact erf-GELU -> no precision loss on high-frequency components).
    half = D // 2
    freqs = jnp.exp(jnp.arange(half, dtype=jnp.float32) *
                    -(math.log(10000.0) / (half - 1)))
    ang = timesteps.astype(jnp.float32)[:, None] * freqs[None, :]
    temb = jnp.concatenate([jnp.sin(ang), jnp.cos(ang)], axis=-1)      # (B, D)
    hmid = jax.nn.gelu(temb @ params["time_w1"] + params["time_b1"], approximate=False)
    cond = hmid @ params["time_w2"] + params["time_b2"]                # (B, D) f32
    if class_labels is not None:
        cond = cond + params["class_embed"][class_labels.astype(jnp.int32).reshape(-1)]
    cond3 = cond[:, None, :].astype(jnp.float32)                       # (B, 1, D)

    # All transformer blocks in ONE pallas_call (layer grid axis, VMEM-resident
    # residual stream).
    tok = pallas_transformer_blocks(tok, cond3, params["stacked"],
                                    num_heads=num_heads, tb=tb)        # (B,N,D) bf16

    out_tok = pallas_final(tok, params["norm_w"], params["norm_b"],
                           params["out_w"], params["out_b"], tb=tb)    # (B,N,Pp) f32
    out_tok = out_tok[:, :, :P]                                        # strip lane pad

    # unpatchify: (B, N, p*p*C) -> (B, C, H, W)
    y = (out_tok.reshape(B, h, w, p, p, C)
                .transpose(0, 5, 1, 3, 2, 4)         # n h w p q c -> n c h p w q
                .reshape(B, C, h * p, w * p))
    return y


# ----------------------------------------------------------------------------
if __name__ == "__main__":
    cfg = dict(img_size=32, patch_size=8, in_channels=1, embed_dim=128,
               depth=2, num_heads=4, mlp_ratio=4.0, num_classes=2)

    params = init_dit_params(jax.random.PRNGKey(0), **cfg)
    iparams = prepare_inference_params(params, num_heads=cfg["num_heads"])

    kx, _ = jax.random.split(jax.random.PRNGKey(0))
    B = 2
    x = jax.random.normal(kx, (B, cfg["in_channels"], cfg["img_size"], cfg["img_size"]),
                          jnp.float32)
    timesteps = jnp.array([3.0, 17.0], jnp.float32)
    class_labels = jnp.array([0, 1], jnp.int32)

    fwd = jax.jit(functools.partial(dit_forward,
                                    patch_size=cfg["patch_size"],
                                    num_heads=cfg["num_heads"]))
    out = fwd(iparams, x, timesteps, class_labels)
    jax.block_until_ready(out)
    assert out.shape == (B, cfg["in_channels"], cfg["img_size"], cfg["img_size"]), out.shape
    assert out.dtype == jnp.float32
    assert bool(jnp.isfinite(out).all())
    print("KERNEL_OK")
</pallas_src>

<mosaic_0001>
module attributes {stable_mosaic.version = 11 : i64} {
  func.func @_patch_embed_kernel(%arg0: i32, %arg1: memref<1x16x128xbf16, #tpu.memory_space<vmem>>, %arg2: memref<128x128xbf16, #tpu.memory_space<vmem>>, %arg3: memref<1x128xf32, #tpu.memory_space<vmem>>, %arg4: memref<1x16x128xf32, #tpu.memory_space<vmem>>, %arg5: memref<1x16x128xbf16, #tpu.memory_space<vmem>>) attributes {dimension_semantics = [#tpu.dimension_semantics<parallel>], iteration_bounds = array<i64: 2>, scalar_prefetch = 0 : i64, scratch_operands = 0 : i64, tpu.core_type = #tpu.core_type<tc>, window_params = [{transform_indices = @transform_0, window_bounds = array<i64: 1, 16, 128>}, {pipeline_mode = #tpu.pipeline_mode<synchronous>, transform_indices = @transform_1, window_bounds = array<i64: 128, 128>}, {pipeline_mode = #tpu.pipeline_mode<synchronous>, transform_indices = @transform_2, window_bounds = array<i64: 1, 128>}, {pipeline_mode = #tpu.pipeline_mode<synchronous>, transform_indices = @transform_3, window_bounds = array<i64: 1, 16, 128>}, {transform_indices = @transform_4, window_bounds = array<i64: 1, 16, 128>}]} {
    %c0 = arith.constant 0 : index
    %c0_0 = arith.constant 0 : index
    %c0_1 = arith.constant 0 : index
    %0 = vector.load %arg1[%c0, %c0_0, %c0_1] : memref<1x16x128xbf16, #tpu.memory_space<vmem>>, vector<1x16x128xbf16>
    %1 = vector.shape_cast %0 : vector<1x16x128xbf16> to vector<16x128xbf16>
    %c0_2 = arith.constant 0 : index
    %c0_3 = arith.constant 0 : index
    %2 = vector.load %arg2[%c0_2, %c0_3] : memref<128x128xbf16, #tpu.memory_space<vmem>>, vector<128x128xbf16>
    %cst = arith.constant dense<0.000000e+00> : vector<16x128xf32>
    %3 = tpu.matmul %1, %2, %cst {dimension_numbers = #tpu.dot_dimension_numbers<[1], [0], [0], [1], [0, 0, 1, 1], [], []>} : vector<16x128xbf16>, vector<128x128xbf16>, vector<16x128xf32> -> vector<16x128xf32>
    %c0_4 = arith.constant 0 : index
    %c0_5 = arith.constant 0 : index
    %4 = vector.load %arg3[%c0_4, %c0_5] : memref<1x128xf32, #tpu.memory_space<vmem>>, vector<1x128xf32>
    %5 = vector.broadcast %4 : vector<1x128xf32> to vector<16x128xf32>
    %6 = arith.addf %3, %5 : vector<16x128xf32>
    %7 = vector.shape_cast %6 : vector<16x128xf32> to vector<1x16x128xf32>
    %c0_6 = arith.constant 0 : index
    %c0_7 = arith.constant 0 : index
    %c0_8 = arith.constant 0 : index
    %8 = vector.load %arg4[%c0_6, %c0_7, %c0_8] : memref<1x16x128xf32, #tpu.memory_space<vmem>>, vector<1x16x128xf32>
    %9 = arith.addf %7, %8 : vector<1x16x128xf32>
    %10 = arith.truncf %9 : vector<1x16x128xf32> to vector<1x16x128xbf16>
    %c0_9 = arith.constant 0 : index
    %c0_10 = arith.constant 0 : index
    %c0_11 = arith.constant 0 : index
    %11 = vector.load %arg5[%c0_9, %c0_10, %c0_11] : memref<1x16x128xbf16, #tpu.memory_space<vmem>>, vector<1x16x128xbf16>
    tpu.vector_store %arg5[%c0_9, %c0_10, %c0_11], %10 {strides = array<i32>} : memref<1x16x128xbf16, #tpu.memory_space<vmem>>, vector<1x16x128xbf16>,
    return
  }
  func.func @transform_0(%arg0: i32) -> (i32, i32, i32) {
    %c0_i32 = arith.constant 0 : i32
    %c0_i32_0 = arith.constant 0 : i32
    %c0_i32_1 = arith.constant 0 : i32
    return %arg0, %c0_i32, %c0_i32_0 : i32, i32, i32
  }
  func.func @transform_1(%arg0: i32) -> (i32, i32) {
    %c0_i32 = arith.constant 0 : i32
    %c0_i32_0 = arith.constant 0 : i32
    %c0_i32_1 = arith.constant 0 : i32
    return %c0_i32, %c0_i32_0 : i32, i32
  }
  func.func @transform_2(%arg0: i32) -> (i32, i32) {
    %c0_i32 = arith.constant 0 : i32
    %c0_i32_0 = arith.constant 0 : i32
    %c0_i32_1 = arith.constant 0 : i32
    return %c0_i32, %c0_i32_0 : i32, i32
  }
  func.func @transform_3(%arg0: i32) -> (i32, i32, i32) {
    %c0_i32 = arith.constant 0 : i32
    %c0_i32_0 = arith.constant 0 : i32
    %c0_i32_1 = arith.constant 0 : i32
    %c0_i32_2 = arith.constant 0 : i32
    return %c0_i32, %c0_i32_0, %c0_i32_1 : i32, i32, i32
  }
  func.func @transform_4(%arg0: i32) -> (i32, i32, i32) {
    %c0_i32 = arith.constant 0 : i32
    %c0_i32_0 = arith.constant 0 : i32
    %c0_i32_1 = arith.constant 0 : i32
    return %arg0, %c0_i32, %c0_i32_0 : i32, i32, i32
  }
}

module attributes {stable_mosaic.version = 11 : i64} {
  func.func @_final_kernel(%arg0: i32, %arg1: memref<1x16x128xbf16, #tpu.memory_space<vmem>>, %arg2: memref<1x128xf32, #tpu.memory_space<vmem>>, %arg3: memref<1x128xf32, #tpu.memory_space<vmem>>, %arg4: memref<128x128xbf16, #tpu.memory_space<vmem>>, %arg5: memref<1x128xf32, #tpu.memory_space<vmem>>, %arg6: memref<1x16x128xf32, #tpu.memory_space<vmem>>) attributes {dimension_semantics = [#tpu.dimension_semantics<parallel>], iteration_bounds = array<i64: 2>, scalar_prefetch = 0 : i64, scratch_operands = 0 : i64, tpu.core_type = #tpu.core_type<tc>, window_params = [{transform_indices = @transform_0, window_bounds = array<i64: 1, 16, 128>}, {pipeline_mode = #tpu.pipeline_mode<synchronous>, transform_indices = @transform_1, window_bounds = array<i64: 1, 128>}, {pipeline_mode = #tpu.pipeline_mode<synchronous>, transform_indices = @transform_2, window_bounds = array<i64: 1, 128>}, {pipeline_mode = #tpu.pipeline_mode<synchronous>, transform_indices = @transform_3, window_bounds = array<i64: 128, 128>}, {pipeline_mode = #tpu.pipeline_mode<synchronous>, transform_indices = @transform_4, window_bounds = array<i64: 1, 128>}, {transform_indices = @transform_5, window_bounds = array<i64: 1, 16, 128>}]} {
    %c0 = arith.constant 0 : index
    %c0_0 = arith.constant 0 : index
    %c0_1 = arith.constant 0 : index
    %0 = vector.load %arg1[%c0, %c0_0, %c0_1] : memref<1x16x128xbf16, #tpu.memory_space<vmem>>, vector<1x16x128xbf16>
    %1 = arith.extf %0 : vector<1x16x128xbf16> to vector<1x16x128xf32>
    %2 = vector.shape_cast %1 : vector<1x16x128xf32> to vector<16x128xf32>
    %c0_2 = arith.constant 0 : index
    %c0_3 = arith.constant 0 : index
    %3 = vector.load %arg2[%c0_2, %c0_3] : memref<1x128xf32, #tpu.memory_space<vmem>>, vector<1x128xf32>
    %c0_4 = arith.constant 0 : index
    %c0_5 = arith.constant 0 : index
    %4 = vector.load %arg3[%c0_4, %c0_5] : memref<1x128xf32, #tpu.memory_space<vmem>>, vector<1x128xf32>
    %cst = arith.constant dense<0.000000e+00> : vector<16xf32>
    %5 = vector.multi_reduction <add>, %2, %cst [1] : vector<16x128xf32> to vector<16xf32>
    %6 = vector.shape_cast %5 : vector<16xf32> to vector<16x1xf32>
    %cst_6 = arith.constant 1.280000e+02 : f32
    %7 = vector.broadcast %cst_6 : f32 to vector<16x1xf32>
    %8 = arith.divf %6, %7 : vector<16x1xf32>
    %9 = vector.broadcast %8 : vector<16x1xf32> to vector<16x128xf32>
    %10 = arith.subf %2, %9 : vector<16x128xf32>
    %11 = arith.mulf %10, %10 : vector<16x128xf32>
    %cst_7 = arith.constant dense<0.000000e+00> : vector<16xf32>
    %12 = vector.multi_reduction <add>, %11, %cst_7 [1] : vector<16x128xf32> to vector<16xf32>
    %13 = vector.shape_cast %12 : vector<16xf32> to vector<16x1xf32>
    %cst_8 = arith.constant 1.280000e+02 : f32
    %14 = vector.broadcast %cst_8 : f32 to vector<16x1xf32>
    %15 = arith.divf %13, %14 : vector<16x1xf32>
    %16 = vector.broadcast %8 : vector<16x1xf32> to vector<16x128xf32>
    %17 = arith.subf %2, %16 : vector<16x128xf32>
    %cst_9 = arith.constant 9.99999974E-6 : f32
    %18 = vector.broadcast %cst_9 : f32 to vector<16x1xf32>
    %19 = arith.addf %15, %18 : vector<16x1xf32>
    %20 = math.rsqrt %19 : vector<16x1xf32>
    %21 = vector.broadcast %20 : vector<16x1xf32> to vector<16x128xf32>
    %22 = arith.mulf %17, %21 : vector<16x128xf32>
    %23 = vector.broadcast %3 : vector<1x128xf32> to vector<16x128xf32>
    %24 = arith.mulf %22, %23 : vector<16x128xf32>
    %25 = vector.broadcast %4 : vector<1x128xf32> to vector<16x128xf32>
    %26 = arith.addf %24, %25 : vector<16x128xf32>
    %27 = arith.truncf %26 : vector<16x128xf32> to vector<16x128xbf16>
    %c0_10 = arith.constant 0 : index
    %c0_11 = arith.constant 0 : index
    %28 = vector.load %arg4[%c0_10, %c0_11] : memref<128x128xbf16, #tpu.memory_space<vmem>>, vector<128x128xbf16>
    %cst_12 = arith.constant dense<0.000000e+00> : vector<16x128xf32>
    %29 = tpu.matmul %27, %28, %cst_12 {dimension_numbers = #tpu.dot_dimension_numbers<[1], [0], [0], [1], [0, 0, 1, 1], [], []>} : vector<16x128xbf16>, vector<128x128xbf16>, vector<16x128xf32> -> vector<16x128xf32>
    %c0_13 = arith.constant 0 : index
    %c0_14 = arith.constant 0 : index
    %30 = vector.load %arg5[%c0_13, %c0_14] : memref<1x128xf32, #tpu.memory_space<vmem>>, vector<1x128xf32>
    %31 = vector.broadcast %30 : vector<1x128xf32> to vector<16x128xf32>
    %32 = arith.addf %29, %31 : vector<16x128xf32>
    %33 = vector.shape_cast %32 : vector<16x128xf32> to vector<1x16x128xf32>
    %c0_15 = arith.constant 0 : index
    %c0_16 = arith.constant 0 : index
    %c0_17 = arith.constant 0 : index
    %34 = vector.load %arg6[%c0_15, %c0_16, %c0_17] : memref<1x16x128xf32, #tpu.memory_space<vmem>>, vector<1x16x128xf32>
    tpu.vector_store %arg6[%c0_15, %c0_16, %c0_17], %33 {strides = array<i32>} : memref<1x16x128xf32, #tpu.memory_space<vmem>>, vector<1x16x128xf32>,
    return
  }
  func.func @transform_0(%arg0: i32) -> (i32, i32, i32) {
    %c0_i32 = arith.constant 0 : i32
    %c0_i32_0 = arith.constant 0 : i32
    %c0_i32_1 = arith.constant 0 : i32
    return %arg0, %c0_i32, %c0_i32_0 : i32, i32, i32
  }
  func.func @transform_1(%arg0: i32) -> (i32, i32) {
    %c0_i32 = arith.constant 0 : i32
    %c0_i32_0 = arith.constant 0 : i32
    %c0_i32_1 = arith.constant 0 : i32
    return %c0_i32, %c0_i32_0 : i32, i32
  }
  func.func @transform_2(%arg0: i32) -> (i32, i32) {
    %c0_i32 = arith.constant 0 : i32
    %c0_i32_0 = arith.constant 0 : i32
    %c0_i32_1 = arith.constant 0 : i32
    return %c0_i32, %c0_i32_0 : i32, i32
  }
  func.func @transform_3(%arg0: i32) -> (i32, i32) {
    %c0_i32 = arith.constant 0 : i32
    %c0_i32_0 = arith.constant 0 : i32
    %c0_i32_1 = arith.constant 0 : i32
    return %c0_i32, %c0_i32_0 : i32, i32
  }
  func.func @transform_4(%arg0: i32) -> (i32, i32) {
    %c0_i32 = arith.constant 0 : i32
    %c0_i32_0 = arith.constant 0 : i32
    %c0_i32_1 = arith.constant 0 : i32
    return %c0_i32, %c0_i32_0 : i32, i32
  }
  func.func @transform_5(%arg0: i32) -> (i32, i32, i32) {
    %c0_i32 = arith.constant 0 : i32
    %c0_i32_0 = arith.constant 0 : i32
    %c0_i32_1 = arith.constant 0 : i32
    return %arg0, %c0_i32, %c0_i32_0 : i32, i32, i32
  }
}

module attributes {stable_mosaic.version = 11 : i64} {
  func.func @_blocks_kernel(%arg0: i32, %arg1: i32, %arg2: memref<1x16x128xbf16, #tpu.memory_space<vmem>>, %arg3: memref<1x1x128xf32, #tpu.memory_space<vmem>>, %arg4: memref<1x1x128xf32, #tpu.memory_space<vmem>>, %arg5: memref<1x1x128xf32, #tpu.memory_space<vmem>>, %arg6: memref<1x128x384xbf16, #tpu.memory_space<vmem>>, %arg7: memref<1x1x384xf32, #tpu.memory_space<vmem>>, %arg8: memref<1x128x128xbf16, #tpu.memory_space<vmem>>, %arg9: memref<1x1x128xf32, #tpu.memory_space<vmem>>, %arg10: memref<1x1x128xf32, #tpu.memory_space<vmem>>, %arg11: memref<1x1x128xf32, #tpu.memory_space<vmem>>, %arg12: memref<1x128x512xbf16, #tpu.memory_space<vmem>>, %arg13: memref<1x1x512xf32, #tpu.memory_space<vmem>>, %arg14: memref<1x512x128xbf16, #tpu.memory_space<vmem>>, %arg15: memref<1x1x128xf32, #tpu.memory_space<vmem>>, %arg16: memref<1x16x128xbf16, #tpu.memory_space<vmem>>, %arg17: memref<1x16x128xf32, #tpu.memory_space<vmem>>) attributes {dimension_semantics = [#tpu.dimension_semantics<parallel>, #tpu.dimension_semantics<arbitrary>], iteration_bounds = array<i64: 2, 2>, scalar_prefetch = 0 : i64, scratch_operands = 1 : i64, tpu.core_type = #tpu.core_type<tc>, window_params = [{transform_indices = @transform_0, window_bounds = array<i64: 1, 16, 128>}, {transform_indices = @transform_1, window_bounds = array<i64: 1, 1, 128>}, {transform_indices = @transform_2, window_bounds = array<i64: 1, 1, 128>}, {transform_indices = @transform_3, window_bounds = array<i64: 1, 1, 128>}, {transform_indices = @transform_4, window_bounds = array<i64: 1, 128, 384>}, {transform_indices = @transform_5, window_bounds = array<i64: 1, 1, 384>}, {transform_indices = @transform_6, window_bounds = array<i64: 1, 128, 128>}, {transform_indices = @transform_7, window_bounds = array<i64: 1, 1, 128>}, {transform_indices = @transform_8, window_bounds = array<i64: 1, 1, 128>}, {transform_indices = @transform_9, window_bounds = array<i64: 1, 1, 128>}, {transform_indices = @transform_10, window_bounds = array<i64: 1, 128, 512>}, {transform_indices = @transform_11, window_bounds = array<i64: 1, 1, 512>}, {transform_indices = @transform_12, window_bounds = array<i64: 1, 512, 128>}, {transform_indices = @transform_13, window_bounds = array<i64: 1, 1, 128>}, {transform_indices = @transform_14, window_bounds = array<i64: 1, 16, 128>}]} {
    %c0_i32 = arith.constant 0 : i32
    %0 = arith.cmpi eq, %arg1, %c0_i32 : i32
    %1 = arith.extui %0 : i1 to i32
    %c0_i32_0 = arith.constant 0 : i32
    %2 = arith.cmpi ne, %1, %c0_i32_0 : i32
    scf.if %2 {
      %c0_79 = arith.constant 0 : index
      %c0_80 = arith.constant 0 : index
      %c0_81 = arith.constant 0 : index
      %192 = vector.load %arg2[%c0_79, %c0_80, %c0_81] : memref<1x16x128xbf16, #tpu.memory_space<vmem>>, vector<1x16x128xbf16>
      %193 = arith.extf %192 : vector<1x16x128xbf16> to vector<1x16x128xf32>
      %c0_82 = arith.constant 0 : index
      %c0_83 = arith.constant 0 : index
      %c0_84 = arith.constant 0 : index
      %194 = vector.load %arg17[%c0_82, %c0_83, %c0_84] : memref<1x16x128xf32, #tpu.memory_space<vmem>>, vector<1x16x128xf32>
      tpu.vector_store %arg17[%c0_82, %c0_83, %c0_84], %193 {strides = array<i32>} : memref<1x16x128xf32, #tpu.memory_space<vmem>>, vector<1x16x128xf32>,
    } else {
    }
    %c0 = arith.constant 0 : index
    %c0_1 = arith.constant 0 : index
    %c0_2 = arith.constant 0 : index
    %3 = vector.load %arg17[%c0, %c0_1, %c0_2] : memref<1x16x128xf32, #tpu.memory_space<vmem>>, vector<1x16x128xf32>
    %c0_3 = arith.constant 0 : index
    %c0_4 = arith.constant 0 : index
    %c0_5 = arith.constant 0 : index
    %4 = vector.load %arg3[%c0_3, %c0_4, %c0_5] : memref<1x1x128xf32, #tpu.memory_space<vmem>>, vector<1x1x128xf32>
    %5 = vector.broadcast %4 : vector<1x1x128xf32> to vector<1x16x128xf32>
    %6 = arith.addf %3, %5 : vector<1x16x128xf32>
    %7 = vector.shape_cast %6 : vector<1x16x128xf32> to vector<16x128xf32>
    %c0_6 = arith.constant 0 : index
    %c0_7 = arith.constant 0 : index
    %c0_8 = arith.constant 0 : index
    %8 = vector.load %arg4[%c0_6, %c0_7, %c0_8] : memref<1x1x128xf32, #tpu.memory_space<vmem>>, vector<1x1x128xf32>
    %9 = vector.shape_cast %8 : vector<1x1x128xf32> to vector<1x128xf32>
    %c0_9 = arith.constant 0 : index
    %c0_10 = arith.constant 0 : index
    %c0_11 = arith.constant 0 : index
    %10 = vector.load %arg5[%c0_9, %c0_10, %c0_11] : memref<1x1x128xf32, #tpu.memory_space<vmem>>, vector<1x1x128xf32>
    %11 = vector.shape_cast %10 : vector<1x1x128xf32> to vector<1x128xf32>
    %cst = arith.constant dense<0.000000e+00> : vector<16xf32>
    %12 = vector.multi_reduction <add>, %7, %cst [1] : vector<16x128xf32> to vector<16xf32>
    %13 = vector.shape_cast %12 : vector<16xf32> to vector<16x1xf32>
    %cst_12 = arith.constant 1.280000e+02 : f32
    %14 = vector.broadcast %cst_12 : f32 to vector<16x1xf32>
    %15 = arith.divf %13, %14 : vector<16x1xf32>
    %16 = vector.broadcast %15 : vector<16x1xf32> to vector<16x128xf32>
    %17 = arith.subf %7, %16 : vector<16x128xf32>
    %18 = arith.mulf %17, %17 : vector<16x128xf32>
    %cst_13 = arith.constant dense<0.000000e+00> : vector<16xf32>
    %19 = vector.multi_reduction <add>, %18, %cst_13 [1] : vector<16x128xf32> to vector<16xf32>
    %20 = vector.shape_cast %19 : vector<16xf32> to vector<16x1xf32>
    %cst_14 = arith.constant 1.280000e+02 : f32
    %21 = vector.broadcast %cst_14 : f32 to vector<16x1xf32>
    %22 = arith.divf %20, %21 : vector<16x1xf32>
    %23 = vector.broadcast %15 : vector<16x1xf32> to vector<16x128xf32>
    %24 = arith.subf %7, %23 : vector<16x128xf32>
    %cst_15 = arith.constant 9.99999974E-6 : f32
    %25 = vector.broadcast %cst_15 : f32 to vector<16x1xf32>
    %26 = arith.addf %22, %25 : vector<16x1xf32>
    %27 = math.rsqrt %26 : vector<16x1xf32>
    %28 = vector.broadcast %27 : vector<16x1xf32> to vector<16x128xf32>
    %29 = arith.mulf %24, %28 : vector<16x128xf32>
    %30 = vector.broadcast %9 : vector<1x128xf32> to vector<16x128xf32>
    %31 = arith.mulf %29, %30 : vector<16x128xf32>
    %32 = vector.broadcast %11 : vector<1x128xf32> to vector<16x128xf32>
    %33 = arith.addf %31, %32 : vector<16x128xf32>
    %34 = arith.truncf %33 : vector<16x128xf32> to vector<16x128xbf16>
    %c0_16 = arith.constant 0 : index
    %c0_17 = arith.constant 0 : index
    %c0_18 = arith.constant 0 : index
    %35 = vector.load %arg6[%c0_16, %c0_17, %c0_18] : memref<1x128x384xbf16, #tpu.memory_space<vmem>>, vector<1x128x384xbf16>
    %36 = vector.shape_cast %35 : vector<1x128x384xbf16> to vector<128x384xbf16>
    %cst_19 = arith.constant dense<0.000000e+00> : vector<16x384xf32>
    %37 = tpu.matmul %34, %36, %cst_19 {dimension_numbers = #tpu.dot_dimension_numbers<[1], [0], [0], [1], [0, 0, 1, 1], [], []>} : vector<16x128xbf16>, vector<128x384xbf16>, vector<16x384xf32> -> vector<16x384xf32>
    %c0_20 = arith.constant 0 : index
    %c0_21 = arith.constant 0 : index
    %c0_22 = arith.constant 0 : index
    %38 = vector.load %arg7[%c0_20, %c0_21, %c0_22] : memref<1x1x384xf32, #tpu.memory_space<vmem>>, vector<1x1x384xf32>
    %39 = vector.shape_cast %38 : vector<1x1x384xf32> to vector<1x384xf32>
    %40 = vector.broadcast %39 : vector<1x384xf32> to vector<16x384xf32>
    %41 = arith.addf %37, %40 : vector<16x384xf32>
    %42 = vector.shape_cast %41 : vector<16x384xf32> to vector<1x16x384xf32>
    %43 = vector.extract_strided_slice %42 {offsets = [0, 0, 0], sizes = [1, 16, 32], strides = [1, 1, 1]} : vector<1x16x384xf32> to vector<1x16x32xf32>
    %44 = arith.truncf %43 : vector<1x16x32xf32> to vector<1x16x32xbf16>
    %45 = vector.extract_strided_slice %42 {offsets = [0, 0, 128], sizes = [1, 16, 32], strides = [1, 1, 1]} : vector<1x16x384xf32> to vector<1x16x32xf32>
    %46 = arith.truncf %45 : vector<1x16x32xf32> to vector<1x16x32xbf16>
    %47 = vector.extract_strided_slice %42 {offsets = [0, 0, 256], sizes = [1, 16, 32], strides = [1, 1, 1]} : vector<1x16x384xf32> to vector<1x16x32xf32>
    %48 = arith.truncf %47 : vector<1x16x32xf32> to vector<1x16x32xbf16>
    "tpu.trace_start"() <{level = 10 : i32, message = "bnd,bmd->bnm"}> : () -> ()
    %cst_23 = arith.constant dense<0.000000e+00> : vector<1x16x16xf32>
    %49 = tpu.matmul %44, %46, %cst_23 {dimension_numbers = #tpu.dot_dimension_numbers<[2], [2], [1], [1], [0, 0, 0, 1, 1, 1], [0], [0]>} : vector<1x16x32xbf16>, vector<1x16x32xbf16>, vector<1x16x16xf32> -> vector<1x16x16xf32>
    "tpu.trace_stop"() : () -> ()
    %cst_24 = arith.constant dense<0xFF800000> : vector<1x16xf32>
    %50 = vector.multi_reduction <maximumf>, %49, %cst_24 [2] : vector<1x16x16xf32> to vector<1x16xf32>
    %51 = vector.shape_cast %50 : vector<1x16xf32> to vector<1x16x1xf32>
    %52 = vector.broadcast %51 : vector<1x16x1xf32> to vector<1x16x16xf32>
    %53 = arith.subf %49, %52 : vector<1x16x16xf32>
    %54 = math.exp %53 : vector<1x16x16xf32>
    %cst_25 = arith.constant dense<0.000000e+00> : vector<1x16xf32>
    %55 = vector.multi_reduction <add>, %54, %cst_25 [2] : vector<1x16x16xf32> to vector<1x16xf32>
    %56 = vector.shape_cast %55 : vector<1x16xf32> to vector<1x16x1xf32>
    %57 = vector.broadcast %56 : vector<1x16x1xf32> to vector<1x16x16xf32>
    %58 = arith.divf %54, %57 : vector<1x16x16xf32>
    %59 = arith.truncf %58 : vector<1x16x16xf32> to vector<1x16x16xbf16>
    "tpu.trace_start"() <{level = 10 : i32, message = "bnm,bmd->bnd"}> : () -> ()
    %cst_26 = arith.constant dense<0.000000e+00> : vector<1x16x32xf32>
    %60 = tpu.matmul %59, %48, %cst_26 {dimension_numbers = #tpu.dot_dimension_numbers<[2], [1], [1], [2], [0, 0, 0, 1, 1, 2], [0], [0]>} : vector<1x16x16xbf16>, vector<1x16x32xbf16>, vector<1x16x32xf32> -> vector<1x16x32xf32>
    "tpu.trace_stop"() : () -> ()
    %61 = vector.extract_strided_slice %42 {offsets = [0, 0, 32], sizes = [1, 16, 32], strides = [1, 1, 1]} : vector<1x16x384xf32> to vector<1x16x32xf32>
    %62 = arith.truncf %61 : vector<1x16x32xf32> to vector<1x16x32xbf16>
    %63 = vector.extract_strided_slice %42 {offsets = [0, 0, 160], sizes = [1, 16, 32], strides = [1, 1, 1]} : vector<1x16x384xf32> to vector<1x16x32xf32>
    %64 = arith.truncf %63 : vector<1x16x32xf32> to vector<1x16x32xbf16>
    %65 = vector.extract_strided_slice %42 {offsets = [0, 0, 288], sizes = [1, 16, 32], strides = [1, 1, 1]} : vector<1x16x384xf32> to vector<1x16x32xf32>
    %66 = arith.truncf %65 : vector<1x16x32xf32> to vector<1x16x32xbf16>
    "tpu.trace_start"() <{level = 10 : i32, message = "bnd,bmd->bnm"}> : () -> ()
    %cst_27 = arith.constant dense<0.000000e+00> : vector<1x16x16xf32>
    %67 = tpu.matmul %62, %64, %cst_27 {dimension_numbers = #tpu.dot_dimension_numbers<[2], [2], [1], [1], [0, 0, 0, 1, 1, 1], [0], [0]>} : vector<1x16x32xbf16>, vector<1x16x32xbf16>, vector<1x16x16xf32> -> vector<1x16x16xf32>
    "tpu.trace_stop"() : () -> ()
    %cst_28 = arith.constant dense<0xFF800000> : vector<1x16xf32>
    %68 = vector.multi_reduction <maximumf>, %67, %cst_28 [2] : vector<1x16x16xf32> to vector<1x16xf32>
    %69 = vector.shape_cast %68 : vector<1x16xf32> to vector<1x16x1xf32>
    %70 = vector.broadcast %69 : vector<1x16x1xf32> to vector<1x16x16xf32>
    %71 = arith.subf %67, %70 : vector<1x16x16xf32>
    %72 = math.exp %71 : vector<1x16x16xf32>
    %cst_29 = arith.constant dense<0.000000e+00> : vector<1x16xf32>
    %73 = vector.multi_reduction <add>, %72, %cst_29 [2] : vector<1x16x16xf32> to vector<1x16xf32>
    %74 = vector.shape_cast %73 : vector<1x16xf32> to vector<1x16x1xf32>
    %75 = vector.broadcast %74 : vector<1x16x1xf32> to vector<1x16x16xf32>
    %76 = arith.divf %72, %75 : vector<1x16x16xf32>
    %77 = arith.truncf %76 : vector<1x16x16xf32> to vector<1x16x16xbf16>
    "tpu.trace_start"() <{level = 10 : i32, message = "bnm,bmd->bnd"}> : () -> ()
    %cst_30 = arith.constant dense<0.000000e+00> : vector<1x16x32xf32>
    %78 = tpu.matmul %77, %66, %cst_30 {dimension_numbers = #tpu.dot_dimension_numbers<[2], [1], [1], [2], [0, 0, 0, 1, 1, 2], [0], [0]>} : vector<1x16x16xbf16>, vector<1x16x32xbf16>, vector<1x16x32xf32> -> vector<1x16x32xf32>
    "tpu.trace_stop"() : () -> ()
    %79 = vector.extract_strided_slice %42 {offsets = [0, 0, 64], sizes = [1, 16, 32], strides = [1, 1, 1]} : vector<1x16x384xf32> to vector<1x16x32xf32>
    %80 = arith.truncf %79 : vector<1x16x32xf32> to vector<1x16x32xbf16>
    %81 = vector.extract_strided_slice %42 {offsets = [0, 0, 192], sizes = [1, 16, 32], strides = [1, 1, 1]} : vector<1x16x384xf32> to vector<1x16x32xf32>
    %82 = arith.truncf %81 : vector<1x16x32xf32> to vector<1x16x32xbf16>
    %83 = vector.extract_strided_slice %42 {offsets = [0, 0, 320], sizes = [1, 16, 32], strides = [1, 1, 1]} : vector<1x16x384xf32> to vector<1x16x32xf32>
    %84 = arith.truncf %83 : vector<1x16x32xf32> to vector<1x16x32xbf16>
    "tpu.trace_start"() <{level = 10 : i32, message = "bnd,bmd->bnm"}> : () -> ()
    %cst_31 = arith.constant dense<0.000000e+00> : vector<1x16x16xf32>
    %85 = tpu.matmul %80, %82, %cst_31 {dimension_numbers = #tpu.dot_dimension_numbers<[2], [2], [1], [1], [0, 0, 0, 1, 1, 1], [0], [0]>} : vector<1x16x32xbf16>, vector<1x16x32xbf16>, vector<1x16x16xf32> -> vector<1x16x16xf32>
    "tpu.trace_stop"() : () -> ()
    %cst_32 = arith.constant dense<0xFF800000> : vector<1x16xf32>
    %86 = vector.multi_reduction <maximumf>, %85, %cst_32 [2] : vector<1x16x16xf32> to vector<1x16xf32>
    %87 = vector.shape_cast %86 : vector<1x16xf32> to vector<1x16x1xf32>
    %88 = vector.broadcast %87 : vector<1x16x1xf32> to vector<1x16x16xf32>
    %89 = arith.subf %85, %88 : vector<1x16x16xf32>
    %90 = math.exp %89 : vector<1x16x16xf32>
    %cst_33 = arith.constant dense<0.000000e+00> : vector<1x16xf32>
    %91 = vector.multi_reduction <add>, %90, %cst_33 [2] : vector<1x16x16xf32> to vector<1x16xf32>
    %92 = vector.shape_cast %91 : vector<1x16xf32> to vector<1x16x1xf32>
    %93 = vector.broadcast %92 : vector<1x16x1xf32> to vector<1x16x16xf32>
    %94 = arith.divf %90, %93 : vector<1x16x16xf32>
    %95 = arith.truncf %94 : vector<1x16x16xf32> to vector<1x16x16xbf16>
    "tpu.trace_start"() <{level = 10 : i32, message = "bnm,bmd->bnd"}> : () -> ()
    %cst_34 = arith.constant dense<0.000000e+00> : vector<1x16x32xf32>
    %96 = tpu.matmul %95, %84, %cst_34 {dimension_numbers = #tpu.dot_dimension_numbers<[2], [1], [1], [2], [0, 0, 0, 1, 1, 2], [0], [0]>} : vector<1x16x16xbf16>, vector<1x16x32xbf16>, vector<1x16x32xf32> -> vector<1x16x32xf32>
    "tpu.trace_stop"() : () -> ()
    %97 = vector.extract_strided_slice %42 {offsets = [0, 0, 96], sizes = [1, 16, 32], strides = [1, 1, 1]} : vector<1x16x384xf32> to vector<1x16x32xf32>
    %98 = arith.truncf %97 : vector<1x16x32xf32> to vector<1x16x32xbf16>
    %99 = vector.extract_strided_slice %42 {offsets = [0, 0, 224], sizes = [1, 16, 32], strides = [1, 1, 1]} : vector<1x16x384xf32> to vector<1x16x32xf32>
    %100 = arith.truncf %99 : vector<1x16x32xf32> to vector<1x16x32xbf16>
    %101 = vector.extract_strided_slice %42 {offsets = [0, 0, 352], sizes = [1, 16, 32], strides = [1, 1, 1]} : vector<1x16x384xf32> to vector<1x16x32xf32>
    %102 = arith.truncf %101 : vector<1x16x32xf32> to vector<1x16x32xbf16>
    "tpu.trace_start"() <{level = 10 : i32, message = "bnd,bmd->bnm"}> : () -> ()
    %cst_35 = arith.constant dense<0.000000e+00> : vector<1x16x16xf32>
    %103 = tpu.matmul %98, %100, %cst_35 {dimension_numbers = #tpu.dot_dimension_numbers<[2], [2], [1], [1], [0, 0, 0, 1, 1, 1], [0], [0]>} : vector<1x16x32xbf16>, vector<1x16x32xbf16>, vector<1x16x16xf32> -> vector<1x16x16xf32>
    "tpu.trace_stop"() : () -> ()
    %cst_36 = arith.constant dense<0xFF800000> : vector<1x16xf32>
    %104 = vector.multi_reduction <maximumf>, %103, %cst_36 [2] : vector<1x16x16xf32> to vector<1x16xf32>
    %105 = vector.shape_cast %104 : vector<1x16xf32> to vector<1x16x1xf32>
    %106 = vector.broadcast %105 : vector<1x16x1xf32> to vector<1x16x16xf32>
    %107 = arith.subf %103, %106 : vector<1x16x16xf32>
    %108 = math.exp %107 : vector<1x16x16xf32>
    %cst_37 = arith.constant dense<0.000000e+00> : vector<1x16xf32>
    %109 = vector.multi_reduction <add>, %108, %cst_37 [2] : vector<1x16x16xf32> to vector<1x16xf32>
    %110 = vector.shape_cast %109 : vector<1x16xf32> to vector<1x16x1xf32>
    %111 = vector.broadcast %110 : vector<1x16x1xf32> to vector<1x16x16xf32>
    %112 = arith.divf %108, %111 : vector<1x16x16xf32>
    %113 = arith.truncf %112 : vector<1x16x16xf32> to vector<1x16x16xbf16>
    "tpu.trace_start"() <{level = 10 : i32, message = "bnm,bmd->bnd"}> : () -> ()
    %cst_38 = arith.constant dense<0.000000e+00> : vector<1x16x32xf32>
    %114 = tpu.matmul %113, %102, %cst_38 {dimension_numbers = #tpu.dot_dimension_numbers<[2], [1], [1], [2], [0, 0, 0, 1, 1, 2], [0], [0]>} : vector<1x16x16xbf16>, vector<1x16x32xbf16>, vector<1x16x32xf32> -> vector<1x16x32xf32>
    "tpu.trace_stop"() : () -> ()
    %115 = tpu.concatenate %60, %78, %96, %114 in 2 : vector<1x16x32xf32>, vector<1x16x32xf32>, vector<1x16x32xf32>, vector<1x16x32xf32> -> vector<1x16x128xf32>
    %116 = vector.shape_cast %115 : vector<1x16x128xf32> to vector<16x128xf32>
    %117 = arith.truncf %116 : vector<16x128xf32> to vector<16x128xbf16>
    %c0_39 = arith.constant 0 : index
    %c0_40 = arith.constant 0 : index
    %c0_41 = arith.constant 0 : index
    %118 = vector.load %arg8[%c0_39, %c0_40, %c0_41] : memref<1x128x128xbf16, #tpu.memory_space<vmem>>, vector<1x128x128xbf16>
    %119 = vector.shape_cast %118 : vector<1x128x128xbf16> to vector<128x128xbf16>
    %cst_42 = arith.constant dense<0.000000e+00> : vector<16x128xf32>
    %120 = tpu.matmul %117, %119, %cst_42 {dimension_numbers = #tpu.dot_dimension_numbers<[1], [0], [0], [1], [0, 0, 1, 1], [], []>} : vector<16x128xbf16>, vector<128x128xbf16>, vector<16x128xf32> -> vector<16x128xf32>
    %c0_43 = arith.constant 0 : index
    %c0_44 = arith.constant 0 : index
    %c0_45 = arith.constant 0 : index
    %121 = vector.load %arg9[%c0_43, %c0_44, %c0_45] : memref<1x1x128xf32, #tpu.memory_space<vmem>>, vector<1x1x128xf32>
    %122 = vector.shape_cast %121 : vector<1x1x128xf32> to vector<1x128xf32>
    %123 = vector.broadcast %122 : vector<1x128xf32> to vector<16x128xf32>
    %124 = arith.addf %120, %123 : vector<16x128xf32>
    %125 = vector.shape_cast %3 : vector<1x16x128xf32> to vector<16x128xf32>
    %126 = arith.addf %125, %124 : vector<16x128xf32>
    %127 = vector.shape_cast %126 : vector<16x128xf32> to vector<1x16x128xf32>
    %128 = vector.broadcast %4 : vector<1x1x128xf32> to vector<1x16x128xf32>
    %129 = arith.addf %127, %128 : vector<1x16x128xf32>
    %130 = vector.shape_cast %129 : vector<1x16x128xf32> to vector<16x128xf32>
    %c0_46 = arith.constant 0 : index
    %c0_47 = arith.constant 0 : index
    %c0_48 = arith.constant 0 : index
    %131 = vector.load %arg10[%c0_46, %c0_47, %c0_48] : memref<1x1x128xf32, #tpu.memory_space<vmem>>, vector<1x1x128xf32>
    %132 = vector.shape_cast %131 : vector<1x1x128xf32> to vector<1x128xf32>
    %c0_49 = arith.constant 0 : index
    %c0_50 = arith.constant 0 : index
    %c0_51 = arith.constant 0 : index
    %133 = vector.load %arg11[%c0_49, %c0_50, %c0_51] : memref<1x1x128xf32, #tpu.memory_space<vmem>>, vector<1x1x128xf32>
    %134 = vector.shape_cast %133 : vector<1x1x128xf32> to vector<1x128xf32>
    %cst_52 = arith.constant dense<0.000000e+00> : vector<16xf32>
    %135 = vector.multi_reduction <add>, %130, %cst_52 [1] : vector<16x128xf32> to vector<16xf32>
    %136 = vector.shape_cast %135 : vector<16xf32> to vector<16x1xf32>
    %cst_53 = arith.constant 1.280000e+02 : f32
    %137 = vector.broadcast %cst_53 : f32 to vector<16x1xf32>
    %138 = arith.divf %136, %137 : vector<16x1xf32>
    %139 = vector.broadcast %138 : vector<16x1xf32> to vector<16x128xf32>
    %140 = arith.subf %130, %139 : vector<16x128xf32>
    %141 = arith.mulf %140, %140 : vector<16x128xf32>
    %cst_54 = arith.constant dense<0.000000e+00> : vector<16xf32>
    %142 = vector.multi_reduction <add>, %141, %cst_54 [1] : vector<16x128xf32> to vector<16xf32>
    %143 = vector.shape_cast %142 : vector<16xf32> to vector<16x1xf32>
    %cst_55 = arith.constant 1.280000e+02 : f32
    %144 = vector.broadcast %cst_55 : f32 to vector<16x1xf32>
    %145 = arith.divf %143, %144 : vector<16x1xf32>
    %146 = vector.broadcast %138 : vector<16x1xf32> to vector<16x128xf32>
    %147 = arith.subf %130, %146 : vector<16x128xf32>
    %cst_56 = arith.constant 9.99999974E-6 : f32
    %148 = vector.broadcast %cst_56 : f32 to vector<16x1xf32>
    %149 = arith.addf %145, %148 : vector<16x1xf32>
    %150 = math.rsqrt %149 : vector<16x1xf32>
    %151 = vector.broadcast %150 : vector<16x1xf32> to vector<16x128xf32>
    %152 = arith.mulf %147, %151 : vector<16x128xf32>
    %153 = vector.broadcast %132 : vector<1x128xf32> to vector<16x128xf32>
    %154 = arith.mulf %152, %153 : vector<16x128xf32>
    %155 = vector.broadcast %134 : vector<1x128xf32> to vector<16x128xf32>
    %156 = arith.addf %154, %155 : vector<16x128xf32>
    %157 = arith.truncf %156 : vector<16x128xf32> to vector<16x128xbf16>
    %c0_57 = arith.constant 0 : index
    %c0_58 = arith.constant 0 : index
    %c0_59 = arith.constant 0 : index
    %158 = vector.load %arg12[%c0_57, %c0_58, %c0_59] : memref<1x128x512xbf16, #tpu.memory_space<vmem>>, vector<1x128x512xbf16>
    %159 = vector.shape_cast %158 : vector<1x128x512xbf16> to vector<128x512xbf16>
    %cst_60 = arith.constant dense<0.000000e+00> : vector<16x512xf32>
    %160 = tpu.matmul %157, %159, %cst_60 {dimension_numbers = #tpu.dot_dimension_numbers<[1], [0], [0], [1], [0, 0, 1, 1], [], []>} : vector<16x128xbf16>, vector<128x512xbf16>, vector<16x512xf32> -> vector<16x512xf32>
    %c0_61 = arith.constant 0 : index
    %c0_62 = arith.constant 0 : index
    %c0_63 = arith.constant 0 : index
    %161 = vector.load %arg13[%c0_61, %c0_62, %c0_63] : memref<1x1x512xf32, #tpu.memory_space<vmem>>, vector<1x1x512xf32>
    %162 = vector.shape_cast %161 : vector<1x1x512xf32> to vector<1x512xf32>
    %163 = vector.broadcast %162 : vector<1x512xf32> to vector<16x512xf32>
    %164 = arith.addf %160, %163 : vector<16x512xf32>
    %165 = arith.mulf %164, %164 : vector<16x512xf32>
    %166 = arith.mulf %164, %165 : vector<16x512xf32>
    %cst_64 = arith.constant 4.471500e-02 : f32
    %167 = vector.broadcast %cst_64 : f32 to vector<16x512xf32>
    %168 = arith.mulf %167, %166 : vector<16x512xf32>
    %169 = arith.addf %164, %168 : vector<16x512xf32>
    %cst_65 = arith.constant 0.797884583 : f32
    %170 = vector.broadcast %cst_65 : f32 to vector<16x512xf32>
    %171 = arith.mulf %170, %169 : vector<16x512xf32>
    %172 = math.tanh %171 : vector<16x512xf32>
    %cst_66 = arith.constant 1.000000e+00 : f32
    %173 = vector.broadcast %cst_66 : f32 to vector<16x512xf32>
    %174 = arith.addf %173, %172 : vector<16x512xf32>
    %cst_67 = arith.constant 5.000000e-01 : f32
    %175 = vector.broadcast %cst_67 : f32 to vector<16x512xf32>
    %176 = arith.mulf %175, %174 : vector<16x512xf32>
    %177 = arith.mulf %164, %176 : vector<16x512xf32>
    %178 = arith.truncf %177 : vector<16x512xf32> to vector<16x512xbf16>
    %c0_68 = arith.constant 0 : index
    %c0_69 = arith.constant 0 : index
    %c0_70 = arith.constant 0 : index
    %179 = vector.load %arg14[%c0_68, %c0_69, %c0_70] : memref<1x512x128xbf16, #tpu.memory_space<vmem>>, vector<1x512x128xbf16>
    %180 = vector.shape_cast %179 : vector<1x512x128xbf16> to vector<512x128xbf16>
    %cst_71 = arith.constant dense<0.000000e+00> : vector<16x128xf32>
    %181 = tpu.matmul %178, %180, %cst_71 {dimension_numbers = #tpu.dot_dimension_numbers<[1], [0], [0], [1], [0, 0, 1, 1], [], []>} : vector<16x512xbf16>, vector<512x128xbf16>, vector<16x128xf32> -> vector<16x128xf32>
    %c0_72 = arith.constant 0 : index
    %c0_73 = arith.constant 0 : index
    %c0_74 = arith.constant 0 : index
    %182 = vector.load %arg15[%c0_72, %c0_73, %c0_74] : memref<1x1x128xf32, #tpu.memory_space<vmem>>, vector<1x1x128xf32>
    %183 = vector.shape_cast %182 : vector<1x1x128xf32> to vector<1x128xf32>
    %184 = vector.broadcast %183 : vector<1x128xf32> to vector<16x128xf32>
    %185 = arith.addf %181, %184 : vector<16x128xf32>
    %186 = arith.addf %126, %185 : vector<16x128xf32>
    %187 = vector.shape_cast %186 : vector<16x128xf32> to vector<1x16x128xf32>
    %c0_75 = arith.constant 0 : index
    %c0_76 = arith.constant 0 : index
    %c0_77 = arith.constant 0 : index
    %188 = vector.load %arg17[%c0_75, %c0_76, %c0_77] : memref<1x16x128xf32, #tpu.memory_space<vmem>>, vector<1x16x128xf32>
    tpu.vector_store %arg17[%c0_75, %c0_76, %c0_77], %187 {strides = array<i32>} : memref<1x16x128xf32, #tpu.memory_space<vmem>>, vector<1x16x128xf32>,
    %c1_i32 = arith.constant 1 : i32
    %189 = arith.cmpi eq, %arg1, %c1_i32 : i32
    %190 = arith.extui %189 : i1 to i32
    %c0_i32_78 = arith.constant 0 : i32
    %191 = arith.cmpi ne, %190, %c0_i32_78 : i32
    scf.if %191 {
      %192 = arith.truncf %187 : vector<1x16x128xf32> to vector<1x16x128xbf16>
      %c0_79 = arith.constant 0 : index
      %c0_80 = arith.constant 0 : index
      %c0_81 = arith.constant 0 : index
      %193 = vector.load %arg16[%c0_79, %c0_80, %c0_81] : memref<1x16x128xbf16, #tpu.memory_space<vmem>>, vector<1x16x128xbf16>
      tpu.vector_store %arg16[%c0_79, %c0_80, %c0_81], %192 {strides = array<i32>} : memref<1x16x128xbf16, #tpu.memory_space<vmem>>, vector<1x16x128xbf16>,
    } else {
    }
    return
  }
  func.func @transform_0(%arg0: i32, %arg1: i32) -> (i32, i32, i32) {
    %c0_i32 = arith.constant 0 : i32
    %c0_i32_0 = arith.constant 0 : i32
    %c0_i32_1 = arith.constant 0 : i32
    return %arg0, %c0_i32, %c0_i32_0 : i32, i32, i32
  }
  func.func @transform_1(%arg0: i32, %arg1: i32) -> (i32, i32, i32) {
    %c0_i32 = arith.constant 0 : i32
    %c0_i32_0 = arith.constant 0 : i32
    %c0_i32_1 = arith.constant 0 : i32
    return %arg0, %c0_i32, %c0_i32_0 : i32, i32, i32
  }
  func.func @transform_2(%arg0: i32, %arg1: i32) -> (i32, i32, i32) {
    %c0_i32 = arith.constant 0 : i32
    %c0_i32_0 = arith.constant 0 : i32
    %c0_i32_1 = arith.constant 0 : i32
    return %arg1, %c0_i32, %c0_i32_0 : i32, i32, i32
  }
  func.func @transform_3(%arg0: i32, %arg1: i32) -> (i32, i32, i32) {
    %c0_i32 = arith.constant 0 : i32
    %c0_i32_0 = arith.constant 0 : i32
    %c0_i32_1 = arith.constant 0 : i32
    return %arg1, %c0_i32, %c0_i32_0 : i32, i32, i32
  }
  func.func @transform_4(%arg0: i32, %arg1: i32) -> (i32, i32, i32) {
    %c0_i32 = arith.constant 0 : i32
    %c0_i32_0 = arith.constant 0 : i32
    %c0_i32_1 = arith.constant 0 : i32
    return %arg1, %c0_i32, %c0_i32_0 : i32, i32, i32
  }
  func.func @transform_5(%arg0: i32, %arg1: i32) -> (i32, i32, i32) {
    %c0_i32 = arith.constant 0 : i32
    %c0_i32_0 = arith.constant 0 : i32
    %c0_i32_1 = arith.constant 0 : i32
    return %arg1, %c0_i32, %c0_i32_0 : i32, i32, i32
  }
  func.func @transform_6(%arg0: i32, %arg1: i32) -> (i32, i32, i32) {
    %c0_i32 = arith.constant 0 : i32
    %c0_i32_0 = arith.constant 0 : i32
    %c0_i32_1 = arith.constant 0 : i32
    return %arg1, %c0_i32, %c0_i32_0 : i32, i32, i32
  }
  func.func @transform_7(%arg0: i32, %arg1: i32) -> (i32, i32, i32) {
    %c0_i32 = arith.constant 0 : i32
    %c0_i32_0 = arith.constant 0 : i32
    %c0_i32_1 = arith.constant 0 : i32
    return %arg1, %c0_i32, %c0_i32_0 : i32, i32, i32
  }
  func.func @transform_8(%arg0: i32, %arg1: i32) -> (i32, i32, i32) {
    %c0_i32 = arith.constant 0 : i32
    %c0_i32_0 = arith.constant 0 : i32
    %c0_i32_1 = arith.constant 0 : i32
    return %arg1, %c0_i32, %c0_i32_0 : i32, i32, i32
  }
  func.func @transform_9(%arg0: i32, %arg1: i32) -> (i32, i32, i32) {
    %c0_i32 = arith.constant 0 : i32
    %c0_i32_0 = arith.constant 0 : i32
    %c0_i32_1 = arith.constant 0 : i32
    return %arg1, %c0_i32, %c0_i32_0 : i32, i32, i32
  }
  func.func @transform_10(%arg0: i32, %arg1: i32) -> (i32, i32, i32) {
    %c0_i32 = arith.constant 0 : i32
    %c0_i32_0 = arith.constant 0 : i32
    %c0_i32_1 = arith.constant 0 : i32
    return %arg1, %c0_i32, %c0_i32_0 : i32, i32, i32
  }
  func.func @transform_11(%arg0: i32, %arg1: i32) -> (i32, i32, i32) {
    %c0_i32 = arith.constant 0 : i32
    %c0_i32_0 = arith.constant 0 : i32
    %c0_i32_1 = arith.constant 0 : i32
    return %arg1, %c0_i32, %c0_i32_0 : i32, i32, i32
  }
  func.func @transform_12(%arg0: i32, %arg1: i32) -> (i32, i32, i32) {
    %c0_i32 = arith.constant 0 : i32
    %c0_i32_0 = arith.constant 0 : i32
    %c0_i32_1 = arith.constant 0 : i32
    return %arg1, %c0_i32, %c0_i32_0 : i32, i32, i32
  }
  func.func @transform_13(%arg0: i32, %arg1: i32) -> (i32, i32, i32) {
    %c0_i32 = arith.constant 0 : i32
    %c0_i32_0 = arith.constant 0 : i32
    %c0_i32_1 = arith.constant 0 : i32
    return %arg1, %c0_i32, %c0_i32_0 : i32, i32, i32
  }
  func.func @transform_14(%arg0: i32, %arg1: i32) -> (i32, i32, i32) {
    %c0_i32 = arith.constant 0 : i32
    %c0_i32_0 = arith.constant 0 : i32
    %c0_i32_1 = arith.constant 0 : i32
    return %arg0, %c0_i32, %c0_i32_0 : i32, i32, i32
  }
}

</mosaic_0001>

<llo_original>
// kernel: dit_forward.5
$region0: #{dit_forward.5}
  #allocation0 [shape = 'u32[]', space=smem, size = 0x4, offset = 0x4, fixed_abs, tag = 'smem constant byte address 0x4 - core index']
  #allocation1 [shape = 'u32[144,128]{1,0:T(1,128)}', space=vmem, size = 0x12000, scoped, tag = 'internal scratch']
  %s0 = inlined_call_operand.vmem [shape: bf16[2,16,128], index: 0, kind: input, shape index: {}]
  %s1 = inlined_call_operand.vmem [shape: f32[1,128], index: 1, kind: input, shape index: {}]
  %s2 = inlined_call_operand.vmem [shape: f32[1,128], index: 2, kind: input, shape index: {}]
  %s3 = inlined_call_operand.vmem [shape: bf16[128,128], index: 3, kind: input, shape index: {}]
  %s4 = inlined_call_operand.vmem [shape: f32[1,128], index: 4, kind: input, shape index: {}]
  %s5 = inlined_call_operand.vmem [shape: f32[2,16,128], index: 5, kind: output, shape index: {}]
  %s6 = sld [smem:[#allocation0]]
  $region53: #{dit_forward.5} parent=0
    _
  %s8 = ssub.s32 1, %s6
  %s9 = scalar_select 0, %s8, %s6
  loop: start=0, step=1, limit=4
  $region2: #{dit_forward.5} parent=0 // loop_pre_header
    _
  $region3: #{dit_forward.5} parent=0 // loop_header
    %s11 = sphi 0, %s15
    %p12 = scmp.ge.s32.totalorder %s11, 4
    %s21 = sphi 0, %s23
    %s24 = sphi 0, %s21
    %s25 = sphi 0, %s24
    %s41 = sphi 0, %s25
    %s45 = sphi 0, %s45
    %s47 = sphi 0, %s45
    %s48 = sphi 0, %s47
    %s62 = sphi 0, %s48
    %s66 = sphi 0, %s66
    %s68 = sphi 0, %s66
    %s69 = sphi 0, %s68
    %s83 = sphi 0, %s69
    %s87 = sphi 0, %s87
    %s89 = sphi 0, %s87
    %s90 = sphi 0, %s89
    %s104 = sphi 0, %s90
    %s108 = sphi 0, %s108
    %s110 = sphi 0, %s108
    %s111 = sphi 0, %s110
    %s125 = sphi 0, %s111
    %s131 = sphi 0, %s133
    %s134 = sphi 0, %s131
    %s135 = sphi 0, %s134
    %s151 = sphi 0, %s135
  $region4: #{dit_forward.5} parent=0 // loop_header_branch
    %14 = sbr.rel (%p12) target = $region8
  $region5: #{dit_forward.5} parent=0 // loop_body
    %s16 = ssub.s32 %s11, 1
    %s17 = ssub.s32 %s11, 2
    %s18 = sadd.s32 %s11, 1
    %s19 = ssub.s32 %s11, %s18
    %p20 = scmp.eq.s32.totalorder %s19, 0
    %s22 = sadd.s32 %s21, 1
    %s23 = scalar_select %p20, %s21, %s22
    %p26 = pneg %p20
    %p27 = scmp.eq.s32.totalorder %s11, 1
    %p28 = por %p26, %p27
    %p29 = scmp.ne.s32.totalorder %s21, %s24
    %p30 = scmp.eq.s32.totalorder %s11, 0
    %p31 = por %p29, %p30
    %p32 = scmp.ne.s32.totalorder %s21, %s24
    %p33 = scmp.eq.s32.totalorder %s16, 1
    %p34 = por %p32, %p33
    %p35 = scmp.ne.s32.totalorder %s24, %s25
    %p36 = scmp.eq.s32.totalorder %s16, 0
    %p37 = por %p35, %p36
    %p38 = scmp.ne.s32.totalorder %s24, %s25
    %p39 = scmp.eq.s32.totalorder %s17, 1
    %p40 = por %p38, %p39
    %p42 = scmp.ne.s32.totalorder %s25, %s41
    %p43 = scmp.eq.s32.totalorder %s17, 0
    %p44 = por %p42, %p43
    %s46 = sadd.s32 %s45, 1
    %p49 = scmp.eq.s32.totalorder %s11, 1
    %p50 = scmp.ne.s32.totalorder %s45, %s47
    %p51 = scmp.eq.s32.totalorder %s11, 0
    %p52 = por %p50, %p51
    %p53 = scmp.ne.s32.totalorder %s45, %s47
    %p54 = scmp.eq.s32.totalorder %s16, 1
    %p55 = por %p53, %p54
    %p56 = scmp.ne.s32.totalorder %s47, %s48
    %p57 = scmp.eq.s32.totalorder %s16, 0
    %p58 = por %p56, %p57
    %p59 = scmp.ne.s32.totalorder %s47, %s48
    %p60 = scmp.eq.s32.totalorder %s17, 1
    %p61 = por %p59, %p60
    %p63 = scmp.ne.s32.totalorder %s48, %s62
    %p64 = scmp.eq.s32.totalorder %s17, 0
    %p65 = por %p63, %p64
    %s67 = sadd.s32 %s66, 1
    %p70 = scmp.eq.s32.totalorder %s11, 1
    %p71 = scmp.ne.s32.totalorder %s66, %s68
    %p72 = scmp.eq.s32.totalorder %s11, 0
    %p73 = por %p71, %p72
    %p74 = scmp.ne.s32.totalorder %s66, %s68
    %p75 = scmp.eq.s32.totalorder %s16, 1
    %p76 = por %p74, %p75
    %p77 = scmp.ne.s32.totalorder %s68, %s69
    %p78 = scmp.eq.s32.totalorder %s16, 0
    %p79 = por %p77, %p78
    %p80 = scmp.ne.s32.totalorder %s68, %s69
    %p81 = scmp.eq.s32.totalorder %s17, 1
    %p82 = por %p80, %p81
    %p84 = scmp.ne.s32.totalorder %s69, %s83
    %p85 = scmp.eq.s32.totalorder %s17, 0
    %p86 = por %p84, %p85
    %s88 = sadd.s32 %s87, 1
    %p91 = scmp.eq.s32.totalorder %s11, 1
    %p92 = scmp.ne.s32.totalorder %s87, %s89
    %p93 = scmp.eq.s32.totalorder %s11, 0
    %p94 = por %p92, %p93
    %p95 = scmp.ne.s32.totalorder %s87, %s89
    %p96 = scmp.eq.s32.totalorder %s16, 1
    %p97 = por %p95, %p96
    %p98 = scmp.ne.s32.totalorder %s89, %s90
    %p99 = scmp.eq.s32.totalorder %s16, 0
    %p100 = por %p98, %p99
    %p101 = scmp.ne.s32.totalorder %s89, %s90
    %p102 = scmp.eq.s32.totalorder %s17, 1
    %p103 = por %p101, %p102
    %p105 = scmp.ne.s32.totalorder %s90, %s104
    %p106 = scmp.eq.s32.totalorder %s17, 0
    %p107 = por %p105, %p106
    %s109 = sadd.s32 %s108, 1
    %p112 = scmp.eq.s32.totalorder %s11, 1
    %p113 = scmp.ne.s32.totalorder %s108, %s110
    %p114 = scmp.eq.s32.totalorder %s11, 0
    %p115 = por %p113, %p114
    %p116 = scmp.ne.s32.totalorder %s108, %s110
    %p117 = scmp.eq.s32.totalorder %s16, 1
    %p118 = por %p116, %p117
    %p119 = scmp.ne.s32.totalorder %s110, %s111
    %p120 = scmp.eq.s32.totalorder %s16, 0
    %p121 = por %p119, %p120
    %p122 = scmp.ne.s32.totalorder %s110, %s111
    %p123 = scmp.eq.s32.totalorder %s17, 1
    %p124 = por %p122, %p123
    %p126 = scmp.ne.s32.totalorder %s111, %s125
    %p127 = scmp.eq.s32.totalorder %s17, 0
    %p128 = por %p126, %p127
    %s129 = ssub.s32 %s11, %s18
    %p130 = scmp.eq.s32.totalorder %s129, 0
    %s132 = sadd.s32 %s131, 1
    %s133 = scalar_select %p130, %s131, %s132
    %p136 = pneg %p130
    %p137 = scmp.eq.s32.totalorder %s11, 1
    %p138 = por %p136, %p137
    %p139 = scmp.ne.s32.totalorder %s131, %s134
    %p140 = scmp.eq.s32.totalorder %s11, 0
    %p141 = por %p139, %p140
    %p142 = scmp.ne.s32.totalorder %s131, %s134
    %p143 = scmp.eq.s32.totalorder %s16, 1
    %p144 = por %p142, %p143
    %p145 = scmp.ne.s32.totalorder %s134, %s135
    %p146 = scmp.eq.s32.totalorder %s16, 0
    %p147 = por %p145, %p146
    %p148 = scmp.ne.s32.totalorder %s134, %s135
    %p149 = scmp.eq.s32.totalorder %s17, 1
    %p150 = por %p148, %p149
    %p152 = scmp.ne.s32.totalorder %s135, %s151
    %p153 = scmp.eq.s32.totalorder %s17, 0
    %p154 = por %p152, %p153
    %p155 = scmp.le.s32.totalorder 1, %s11
    %p156 = scmp.lt.s32.totalorder %s11, 3
    %p157 = pnand %p155, %p156
    %p158 = pneg %p157
    // Predicated region
    $region9: #{dit_forward.5} parent=5 // pred_check
      _
    $region10: #{dit_forward.5} parent=5 // pred_check_branch
      %160 = sbr.rel (%p157) target = $region12
    $region11: #{dit_forward.5} parent=5 // pred_region
      %s161 = ssub.s32 %s11, 1
      // Predicated region
      $region13: #{dit_forward.5} parent=11 // pred_check
        %p162 = pneg %p58
      $region14: #{dit_forward.5} parent=11 // pred_check_branch
        %164 = sbr.rel (%p162) target = $region16
      $region15: #{dit_forward.5} parent=11 // pred_region
        _
      $region16: #{dit_forward.5} parent=11 // pred_fallthru
        _
      // Predicated region
      $region17: #{dit_forward.5} parent=11 // pred_check
        %p165 = pneg %p79
      $region18: #{dit_forward.5} parent=11 // pred_check_branch
        %167 = sbr.rel (%p165) target = $region20
      $region19: #{dit_forward.5} parent=11 // pred_region
        _
      $region20: #{dit_forward.5} parent=11 // pred_fallthru
        _
      // Predicated region
      $region21: #{dit_forward.5} parent=11 // pred_check
        %p168 = pneg %p100
      $region22: #{dit_forward.5} parent=11 // pred_check_branch
        %170 = sbr.rel (%p168) target = $region24
      $region23: #{dit_forward.5} parent=11 // pred_region
        _
      $region24: #{dit_forward.5} parent=11 // pred_fallthru
        _
      // Predicated region
      $region25: #{dit_forward.5} parent=11 // pred_check
        %p171 = pneg %p121
      $region26: #{dit_forward.5} parent=11 // pred_check_branch
        %173 = sbr.rel (%p171) target = $region28
      $region27: #{dit_forward.5} parent=11 // pred_region
        _
      $region28: #{dit_forward.5} parent=11 // pred_fallthru
        _
    $region12: #{dit_forward.5} parent=5 // pred_fallthru
      _
    %p174 = scmp.lt.s32.totalorder %s11, 2
    // Predicated region
    $region29: #{dit_forward.5} parent=5 // pred_check
      %p175 = pneg %p174
    $region30: #{dit_forward.5} parent=5 // pred_check_branch
      %177 = sbr.rel (%p175) target = $region32
    $region31: #{dit_forward.5} parent=5 // pred_region
      // Predicated region
      $region33: #{dit_forward.5} parent=31 // pred_check
        %p178 = pneg %p31
      $region34: #{dit_forward.5} parent=31 // pred_check_branch
        %180 = sbr.rel (%p178) target = $region36
      $region35: #{dit_forward.5} parent=31 // pred_region
        %p181 = scmp.lt.s32.totalorder %s11, 1
        %s182 = scalar_select %p181, %s11, 1
        %s183 = smul.addr %s182, 2
        %s184 = smul.addr %s183, 4
        %s185 = scalar_lea.vmem %s0, %s184
      $region36: #{dit_forward.5} parent=31 // pred_fallthru
        _
    $region32: #{dit_forward.5} parent=5 // pred_fallthru
      _
    %p186 = scmp.le.s32.totalorder 1, %s11
    %p187 = scmp.lt.s32.totalorder %s11, 3
    %p188 = pnand %p186, %p187
    %p189 = pneg %p188
    // Predicated region
    $region37: #{dit_forward.5} parent=5 // pred_check
      _
    $region38: #{dit_forward.5} parent=5 // pred_check_branch
      %191 = sbr.rel (%p188) target = $region40
    $region39: #{dit_forward.5} parent=5 // pred_region
      %s192 = ssub.s32 %s11, 1
      %p193 = scmp.lt.s32.totalorder %s16, 1
      %s194 = scalar_select %p193, %s16, 1
      %s195 = smul.addr %s194, 2
      %s196 = smul.addr %s195, 4
      %s197 = scalar_lea.vmem %s0, %s196
      %p198 = pneg %p37
      %p199 = pneg %p34
      %p200 = pneg %p58
      %p201 = pneg %p55
      %p202 = pneg %p79
      %p203 = pneg %p76
      %p204 = pneg %p100
      %p205 = pneg %p97
      %p206 = pneg %p121
      %p207 = pneg %p118
      %p208 = pneg %p147
      %p209 = pneg %p144
      %p210 = scmp.lt.s32.totalorder %s16, 1
      %s211 = scalar_select %p210, %s16, 1
      %s212 = smul.addr %s211, 2
      %s213 = smul.addr %s212, 8
      %s214 = scalar_lea.vmem %s5, %s213
      %p215 = scmp.lt.s32.totalorder %s16, 1
      %s216 = scalar_select %p215, %s16, 1
      %s217 = smul.addr %s216, 2
      %s218 = smul.addr %s217, 4
      %s219 = scalar_lea.vmem %s0, %s218
      %p220 = scmp.lt.s32.totalorder %s16, 1
      %s221 = scalar_select %p220, %s16, 1
      %s222 = smul.addr %s221, 2
      %s223 = smul.addr %s222, 8
      %s224 = scalar_lea.vmem %s5, %s223
      %v226 = vld [vmem:[%s219] sm:$0xf]
      %v227 = vld [vmem:[%s219 + $0x4] sm:$0xf]
      %v228 = vunpack.c.l.bf16 %v226
      %v229 = vunpack.c.l.bf16 %v227
      %v230 = vld [vmem:[%s1] sm:$0x1]
      %v231 = vld [vmem:[%s2] sm:$0x1]
      %232 = vadd.xlane.f32.xlu0 %v228
      %v233 = vpop.xlane.xlu0 %232
      %234 = vadd.xlane.f32.xlu0 %v229
      %v235 = vpop.xlane.xlu0 %234
      %v236 = vrcp.pop 128.0
      %v237 = vmul.f32 %v233, %v236
      %v238 = vmul.f32 %v235, %v236
      %v239 = vsub.f32 %v228, %v237
      %v240 = vsub.f32 %v229, %v238
      %v241 = vmul.f32 %v239, %v239
      %v242 = vmul.f32 %v240, %v240
      %243 = vadd.xlane.f32.xlu0 %v241
      %v244 = vpop.xlane.xlu0 %243
      %245 = vadd.xlane.f32.xlu0 %v242
      %v246 = vpop.xlane.xlu0 %245
      %v247 = vmul.f32 %v244, %v236
      %v248 = vmul.f32 %v246, %v236
      %v249 = vadd.f32 %v247, 1e-05
      %v250 = vadd.f32 %v248, 1e-05
      %v251 = vrsqrt.pop %v249
      %v252 = vrsqrt.pop %v250
      %v253 = vmul.f32 %v239, %v251
      %v254 = vmul.f32 %v240, %v252
      %v256 = vlaneseq
      %v257 = vshrl.u32 %v256, 7
      %v258 = vsub.s32 0, %v257
      %v259 = vrot.slane %v230, %v258
      %v261 = vmul.f32 %v253, %v259
      %v262 = vmul.f32 %v254, %v259
      %v264 = vlaneseq
      %v265 = vshrl.u32 %v264, 7
      %v266 = vsub.s32 0, %v265
      %v267 = vrot.slane %v231, %v266
      %v269 = vadd.f32 %v261, %v267
      %v270 = vadd.f32 %v262, %v267
      %v271 = vpack.c.bf16 %v270, %v269
      %v272 = vld [vmem:[%s3] sm:$0xf]
      %v273 = vld [vmem:[%s3 + $0x4] sm:$0xf]
      %v274 = vld [vmem:[%s3 + $0x8] sm:$0xf]
      %v275 = vld [vmem:[%s3 + $0xc] sm:$0xf]
      %v276 = vld [vmem:[%s3 + $0x10] sm:$0xf]
      %v277 = vld [vmem:[%s3 + $0x14] sm:$0xf]
      %v278 = vld [vmem:[%s3 + $0x18] sm:$0xf]
      %v279 = vld [vmem:[%s3 + $0x1c] sm:$0xf]
      %v280 = vld [vmem:[%s3 + $0x20] sm:$0xf]
      %v281 = vld [vmem:[%s3 + $0x24] sm:$0xf]
      %v282 = vld [vmem:[%s3 + $0x28] sm:$0xf]
      %v283 = vld [vmem:[%s3 + $0x2c] sm:$0xf]
      %v284 = vld [vmem:[%s3 + $0x30] sm:$0xf]
      %v285 = vld [vmem:[%s3 + $0x34] sm:$0xf]
      %v286 = vld [vmem:[%s3 + $0x38] sm:$0xf]
      %v287 = vld [vmem:[%s3 + $0x3c] sm:$0xf]
      %v288 = vld [vmem:[%s4] sm:$0x1]
      %v290 = vlaneseq
      %v291 = vshrl.u32 %v290, 7
      %v292 = vsub.s32 0, %v291
      %v293 = vrot.slane %v288, %v292
      %v311 = vunpack.c.l.b16 %v272
      %v312 = vunpack.c.l.b16 %v273
      %v313 = vunpack.c.l.b16 %v274
      %v314 = vunpack.c.l.b16 %v275
      %v315 = vunpack.c.l.b16 %v276
      %v316 = vunpack.c.l.b16 %v277
      %v317 = vunpack.c.l.b16 %v278
      %v318 = vunpack.c.l.b16 %v279
      %v319 = vunpack.c.l.b16 %v280
      %v320 = vunpack.c.l.b16 %v281
      %v321 = vunpack.c.l.b16 %v282
      %v322 = vunpack.c.l.b16 %v283
      %v323 = vunpack.c.l.b16 %v284
      %v324 = vunpack.c.l.b16 %v285
      %v325 = vunpack.c.l.b16 %v286
      %v326 = vunpack.c.l.b16 %v287
      %v327 = vpack.c.b16 %v312, %v311
      %v328 = vpack.c.b16 %v314, %v313
      %v329 = vpack.c.b16 %v316, %v315
      %v330 = vpack.c.b16 %v318, %v317
      %v331 = vpack.c.b16 %v320, %v319
      %v332 = vpack.c.b16 %v322, %v321
      %v333 = vpack.c.b16 %v324, %v323
      %v334 = vpack.c.b16 %v326, %v325
      %343 = vmatprep.subr.bf16.mxu0 0
      %344 = vmatpush1.bf16.msra.mxu0 %v327
      %345 = vmatprep.subr.bf16.mxu0 0
      %346 = vmatpush1.bf16.msra.mxu0 %v328
      %347 = vmatprep.subr.bf16.mxu0 0
      %348 = vmatpush1.bf16.msra.mxu0 %v329
      %349 = vmatprep.subr.bf16.mxu0 0
      %350 = vmatpush1.bf16.msra.mxu0 %v330
      %351 = vmatprep.subr.bf16.mxu0 0
      %352 = vmatpush1.bf16.msra.mxu0 %v331
      %353 = vmatprep.subr.bf16.mxu0 0
      %354 = vmatpush1.bf16.msra.mxu0 %v332
      %355 = vmatprep.subr.bf16.mxu0 0
      %356 = vmatpush1.bf16.msra.mxu0 %v333
      %357 = vmatprep.subr.bf16.mxu0 0
      %358 = vmatpush1.bf16.msra.mxu0 %v334
      %359 = vmatprep.subr.bf16.mxu0 0
      %360 = vmatpush1.bf16.msra.mxu0 0
      %361 = vmatprep.subr.bf16.mxu0 0
      %362 = vmatpush1.bf16.msra.mxu0 0
      %363 = vmatprep.subr.bf16.mxu0 0
      %364 = vmatpush1.bf16.msra.mxu0 0
      %365 = vmatprep.subr.bf16.mxu0 0
      %366 = vmatpush1.bf16.msra.mxu0 0
      %367 = vmatprep.subr.bf16.mxu0 0
      %368 = vmatpush1.bf16.msra.mxu0 0
      %369 = vmatprep.subr.bf16.mxu0 0
      %370 = vmatpush1.bf16.msra.mxu0 0
      %371 = vmatprep.subr.bf16.mxu0 0
      %372 = vmatpush1.bf16.msra.mxu0 0
      %373 = vmatprep.subr.bf16.mxu0 0
      %374 = vmatpush1.bf16.msra.mxu0 0
      %375 = vmatprep.mubr.bf16.mxu0 0
      %376 = vmatmul.mubr.bf16.gmra.mrb[0].mxu0 %v271
      %v377 = vpop.f32.mrb[0].mxu0
      %v378 = vadd.f32 %v293, %v377
      %v379 = vpop.f32.mrb[0].mxu0
      %v380 = vpop.f32.mrb[0].mxu0
      %v381 = vadd.f32 %v293, %v380
      %v382 = vpop.f32.mrb[0].mxu0
      %383 = vdwg.mxu0
      %384 = vst [vmem:[%s224] sm:$0xff] %v378
      %385 = vst [vmem:[%s224 + $0x8] sm:$0xff] %v381
      %p386 = scmp.lt.s32.totalorder %s16, 1
      %s387 = scalar_select %p386, %s16, 1
      %s388 = smul.addr %s387, 2
      %s389 = smul.addr %s388, 8
      %s390 = scalar_lea.vmem %s5, %s389
      // Predicated region
      $region41: #{dit_forward.5} parent=39 // pred_check
        %p391 = pneg %p144
      $region42: #{dit_forward.5} parent=39 // pred_check_branch
        %393 = sbr.rel (%p391) target = $region44
      $region43: #{dit_forward.5} parent=39 // pred_region
        _
      $region44: #{dit_forward.5} parent=39 // pred_fallthru
        _
    $region40: #{dit_forward.5} parent=5 // pred_fallthru
      _
    %p394 = scmp.le.s32.totalorder 2, %s11
    // Predicated region
    $region45: #{dit_forward.5} parent=5 // pred_check
      %p395 = pneg %p394
    $region46: #{dit_forward.5} parent=5 // pred_check_branch
      %397 = sbr.rel (%p395) target = $region48
    $region47: #{dit_forward.5} parent=5 // pred_region
      %s398 = ssub.s32 %s11, 2
      // Predicated region
      $region49: #{dit_forward.5} parent=47 // pred_check
        %p399 = pneg %p150
      $region50: #{dit_forward.5} parent=47 // pred_check_branch
        %401 = sbr.rel (%p399) target = $region52
      $region51: #{dit_forward.5} parent=47 // pred_region
        %p402 = scmp.lt.s32.totalorder %s17, 1
        %s403 = scalar_select %p402, %s17, 1
        %s404 = smul.addr %s403, 2
        %s405 = smul.addr %s404, 8
        %s406 = scalar_lea.vmem %s5, %s405
      $region52: #{dit_forward.5} parent=47 // pred_fallthru
        _
    $region48: #{dit_forward.5} parent=5 // pred_fallthru
      _
  $region6: #{dit_forward.5} parent=0 // loop_footer
    %s15 = sadd.s32 1, %s11
  $region7: #{dit_forward.5} parent=0 // loop_footer_branch
    %10 = sbr.rel target = $region3
  $region8: #{dit_forward.5} parent=0 // loop_exit
    _

// kernel: dit_forward.3
$region0: #{dit_forward.3}
  #allocation0 [shape = 'u32[]', space=smem, size = 0x4, offset = 0x4, fixed_abs, tag = 'smem constant byte address 0x4 - core index']
  #allocation1 [shape = 'u32[144,128]{1,0:T(1,128)}', space=vmem, size = 0x12000, scoped, tag = 'internal scratch']
  %s0 = inlined_call_operand.vmem [shape: bf16[2,16,128], index: 0, kind: input, shape index: {}]
  %s1 = inlined_call_operand.vmem [shape: bf16[128,128], index: 1, kind: input, shape index: {}]
  %s2 = inlined_call_operand.vmem [shape: f32[1,128], index: 2, kind: input, shape index: {}]
  %s3 = inlined_call_operand.vmem [shape: f32[1,16,128], index: 3, kind: input, shape index: {}]
  %s4 = inlined_call_operand.vmem [shape: bf16[2,16,128], index: 4, kind: output, shape index: {}]
  %s5 = sld [smem:[#allocation0]]
  $region49: #{dit_forward.3} parent=0
    _
  %s7 = ssub.s32 1, %s5
  %s8 = scalar_select 0, %s7, %s5
  loop: start=0, step=1, limit=4
  $region2: #{dit_forward.3} parent=0 // loop_pre_header
    _
  $region3: #{dit_forward.3} parent=0 // loop_header
    %s10 = sphi 0, %s14
    %p11 = scmp.ge.s32.totalorder %s10, 4
    %s20 = sphi 0, %s22
    %s23 = sphi 0, %s20
    %s24 = sphi 0, %s23
    %s40 = sphi 0, %s24
    %s44 = sphi 0, %s44
    %s46 = sphi 0, %s44
    %s47 = sphi 0, %s46
    %s61 = sphi 0, %s47
    %s65 = sphi 0, %s65
    %s67 = sphi 0, %s65
    %s68 = sphi 0, %s67
    %s82 = sphi 0, %s68
    %s86 = sphi 0, %s86
    %s88 = sphi 0, %s86
    %s89 = sphi 0, %s88
    %s103 = sphi 0, %s89
    %s109 = sphi 0, %s111
    %s112 = sphi 0, %s109
    %s113 = sphi 0, %s112
    %s129 = sphi 0, %s113
  $region4: #{dit_forward.3} parent=0 // loop_header_branch
    %13 = sbr.rel (%p11) target = $region8
  $region5: #{dit_forward.3} parent=0 // loop_body
    %s15 = ssub.s32 %s10, 1
    %s16 = ssub.s32 %s10, 2
    %s17 = sadd.s32 %s10, 1
    %s18 = ssub.s32 %s10, %s17
    %p19 = scmp.eq.s32.totalorder %s18, 0
    %s21 = sadd.s32 %s20, 1
    %s22 = scalar_select %p19, %s20, %s21
    %p25 = pneg %p19
    %p26 = scmp.eq.s32.totalorder %s10, 1
    %p27 = por %p25, %p26
    %p28 = scmp.ne.s32.totalorder %s20, %s23
    %p29 = scmp.eq.s32.totalorder %s10, 0
    %p30 = por %p28, %p29
    %p31 = scmp.ne.s32.totalorder %s20, %s23
    %p32 = scmp.eq.s32.totalorder %s15, 1
    %p33 = por %p31, %p32
    %p34 = scmp.ne.s32.totalorder %s23, %s24
    %p35 = scmp.eq.s32.totalorder %s15, 0
    %p36 = por %p34, %p35
    %p37 = scmp.ne.s32.totalorder %s23, %s24
    %p38 = scmp.eq.s32.totalorder %s16, 1
    %p39 = por %p37, %p38
    %p41 = scmp.ne.s32.totalorder %s24, %s40
    %p42 = scmp.eq.s32.totalorder %s16, 0
    %p43 = por %p41, %p42
    %s45 = sadd.s32 %s44, 1
    %p48 = scmp.eq.s32.totalorder %s10, 1
    %p49 = scmp.ne.s32.totalorder %s44, %s46
    %p50 = scmp.eq.s32.totalorder %s10, 0
    %p51 = por %p49, %p50
    %p52 = scmp.ne.s32.totalorder %s44, %s46
    %p53 = scmp.eq.s32.totalorder %s15, 1
    %p54 = por %p52, %p53
    %p55 = scmp.ne.s32.totalorder %s46, %s47
    %p56 = scmp.eq.s32.totalorder %s15, 0
    %p57 = por %p55, %p56
    %p58 = scmp.ne.s32.totalorder %s46, %s47
    %p59 = scmp.eq.s32.totalorder %s16, 1
    %p60 = por %p58, %p59
    %p62 = scmp.ne.s32.totalorder %s47, %s61
    %p63 = scmp.eq.s32.totalorder %s16, 0
    %p64 = por %p62, %p63
    %s66 = sadd.s32 %s65, 1
    %p69 = scmp.eq.s32.totalorder %s10, 1
    %p70 = scmp.ne.s32.totalorder %s65, %s67
    %p71 = scmp.eq.s32.totalorder %s10, 0
    %p72 = por %p70, %p71
    %p73 = scmp.ne.s32.totalorder %s65, %s67
    %p74 = scmp.eq.s32.totalorder %s15, 1
    %p75 = por %p73, %p74
    %p76 = scmp.ne.s32.totalorder %s67, %s68
    %p77 = scmp.eq.s32.totalorder %s15, 0
    %p78 = por %p76, %p77
    %p79 = scmp.ne.s32.totalorder %s67, %s68
    %p80 = scmp.eq.s32.totalorder %s16, 1
    %p81 = por %p79, %p80
    %p83 = scmp.ne.s32.totalorder %s68, %s82
    %p84 = scmp.eq.s32.totalorder %s16, 0
    %p85 = por %p83, %p84
    %s87 = sadd.s32 %s86, 1
    %p90 = scmp.eq.s32.totalorder %s10, 1
    %p91 = scmp.ne.s32.totalorder %s86, %s88
    %p92 = scmp.eq.s32.totalorder %s10, 0
    %p93 = por %p91, %p92
    %p94 = scmp.ne.s32.totalorder %s86, %s88
    %p95 = scmp.eq.s32.totalorder %s15, 1
    %p96 = por %p94, %p95
    %p97 = scmp.ne.s32.totalorder %s88, %s89
    %p98 = scmp.eq.s32.totalorder %s15, 0
    %p99 = por %p97, %p98
    %p100 = scmp.ne.s32.totalorder %s88, %s89
    %p101 = scmp.eq.s32.totalorder %s16, 1
    %p102 = por %p100, %p101
    %p104 = scmp.ne.s32.totalorder %s89, %s103
    %p105 = scmp.eq.s32.totalorder %s16, 0
    %p106 = por %p104, %p105
    %s107 = ssub.s32 %s10, %s17
    %p108 = scmp.eq.s32.totalorder %s107, 0
    %s110 = sadd.s32 %s109, 1
    %s111 = scalar_select %p108, %s109, %s110
    %p114 = pneg %p108
    %p115 = scmp.eq.s32.totalorder %s10, 1
    %p116 = por %p114, %p115
    %p117 = scmp.ne.s32.totalorder %s109, %s112
    %p118 = scmp.eq.s32.totalorder %s10, 0
    %p119 = por %p117, %p118
    %p120 = scmp.ne.s32.totalorder %s109, %s112
    %p121 = scmp.eq.s32.totalorder %s15, 1
    %p122 = por %p120, %p121
    %p123 = scmp.ne.s32.totalorder %s112, %s113
    %p124 = scmp.eq.s32.totalorder %s15, 0
    %p125 = por %p123, %p124
    %p126 = scmp.ne.s32.totalorder %s112, %s113
    %p127 = scmp.eq.s32.totalorder %s16, 1
    %p128 = por %p126, %p127
    %p130 = scmp.ne.s32.totalorder %s113, %s129
    %p131 = scmp.eq.s32.totalorder %s16, 0
    %p132 = por %p130, %p131
    %p133 = scmp.le.s32.totalorder 1, %s10
    %p134 = scmp.lt.s32.totalorder %s10, 3
    %p135 = pnand %p133, %p134
    %p136 = pneg %p135
    // Predicated region
    $region9: #{dit_forward.3} parent=5 // pred_check
      _
    $region10: #{dit_forward.3} parent=5 // pred_check_branch
      %138 = sbr.rel (%p135) target = $region12
    $region11: #{dit_forward.3} parent=5 // pred_region
      %s139 = ssub.s32 %s10, 1
      // Predicated region
      $region13: #{dit_forward.3} parent=11 // pred_check
        %p140 = pneg %p57
      $region14: #{dit_forward.3} parent=11 // pred_check_branch
        %142 = sbr.rel (%p140) target = $region16
      $region15: #{dit_forward.3} parent=11 // pred_region
        _
      $region16: #{dit_forward.3} parent=11 // pred_fallthru
        _
      // Predicated region
      $region17: #{dit_forward.3} parent=11 // pred_check
        %p143 = pneg %p78
      $region18: #{dit_forward.3} parent=11 // pred_check_branch
        %145 = sbr.rel (%p143) target = $region20
      $region19: #{dit_forward.3} parent=11 // pred_region
        _
      $region20: #{dit_forward.3} parent=11 // pred_fallthru
        _
      // Predicated region
      $region21: #{dit_forward.3} parent=11 // pred_check
        %p146 = pneg %p99
      $region22: #{dit_forward.3} parent=11 // pred_check_branch
        %148 = sbr.rel (%p146) target = $region24
      $region23: #{dit_forward.3} parent=11 // pred_region
        _
      $region24: #{dit_forward.3} parent=11 // pred_fallthru
        _
    $region12: #{dit_forward.3} parent=5 // pred_fallthru
      _
    %p149 = scmp.lt.s32.totalorder %s10, 2
    // Predicated region
    $region25: #{dit_forward.3} parent=5 // pred_check
      %p150 = pneg %p149
    $region26: #{dit_forward.3} parent=5 // pred_check_branch
      %152 = sbr.rel (%p150) target = $region28
    $region27: #{dit_forward.3} parent=5 // pred_region
      // Predicated region
      $region29: #{dit_forward.3} parent=27 // pred_check
        %p153 = pneg %p30
      $region30: #{dit_forward.3} parent=27 // pred_check_branch
        %155 = sbr.rel (%p153) target = $region32
      $region31: #{dit_forward.3} parent=27 // pred_region
        %p156 = scmp.lt.s32.totalorder %s10, 1
        %s157 = scalar_select %p156, %s10, 1
        %s158 = smul.addr %s157, 2
        %s159 = smul.addr %s158, 4
        %s160 = scalar_lea.vmem %s0, %s159
      $region32: #{dit_forward.3} parent=27 // pred_fallthru
        _
    $region28: #{dit_forward.3} parent=5 // pred_fallthru
      _
    %p161 = scmp.le.s32.totalorder 1, %s10
    %p162 = scmp.lt.s32.totalorder %s10, 3
    %p163 = pnand %p161, %p162
    %p164 = pneg %p163
    // Predicated region
    $region33: #{dit_forward.3} parent=5 // pred_check
      _
    $region34: #{dit_forward.3} parent=5 // pred_check_branch
      %166 = sbr.rel (%p163) target = $region36
    $region35: #{dit_forward.3} parent=5 // pred_region
      %s167 = ssub.s32 %s10, 1
      %p168 = scmp.lt.s32.totalorder %s15, 1
      %s169 = scalar_select %p168, %s15, 1
      %s170 = smul.addr %s169, 2
      %s171 = smul.addr %s170, 4
      %s172 = scalar_lea.vmem %s0, %s171
      %p173 = pneg %p36
      %p174 = pneg %p33
      %p175 = pneg %p57
      %p176 = pneg %p54
      %p177 = pneg %p78
      %p178 = pneg %p75
      %p179 = pneg %p99
      %p180 = pneg %p96
      %p181 = pneg %p125
      %p182 = pneg %p122
      %p183 = scmp.lt.s32.totalorder %s15, 1
      %s184 = scalar_select %p183, %s15, 1
      %s185 = smul.addr %s184, 2
      %s186 = smul.addr %s185, 4
      %s187 = scalar_lea.vmem %s4, %s186
      %p188 = scmp.lt.s32.totalorder %s15, 1
      %s189 = scalar_select %p188, %s15, 1
      %s190 = smul.addr %s189, 2
      %s191 = smul.addr %s190, 4
      %s192 = scalar_lea.vmem %s0, %s191
      %p193 = scmp.lt.s32.totalorder %s15, 1
      %s194 = scalar_select %p193, %s15, 1
      %s195 = smul.addr %s194, 2
      %s196 = smul.addr %s195, 4
      %s197 = scalar_lea.vmem %s4, %s196
      %v199 = vld [vmem:[%s192] sm:$0xf]
      %v200 = vld [vmem:[%s192 + $0x4] sm:$0xf]
      %v201 = vld [vmem:[%s1] sm:$0xf]
      %v202 = vld [vmem:[%s1 + $0x4] sm:$0xf]
      %v203 = vld [vmem:[%s1 + $0x8] sm:$0xf]
      %v204 = vld [vmem:[%s1 + $0xc] sm:$0xf]
      %v205 = vld [vmem:[%s1 + $0x10] sm:$0xf]
      %v206 = vld [vmem:[%s1 + $0x14] sm:$0xf]
      %v207 = vld [vmem:[%s1 + $0x18] sm:$0xf]
      %v208 = vld [vmem:[%s1 + $0x1c] sm:$0xf]
      %v209 = vld [vmem:[%s1 + $0x20] sm:$0xf]
      %v210 = vld [vmem:[%s1 + $0x24] sm:$0xf]
      %v211 = vld [vmem:[%s1 + $0x28] sm:$0xf]
      %v212 = vld [vmem:[%s1 + $0x2c] sm:$0xf]
      %v213 = vld [vmem:[%s1 + $0x30] sm:$0xf]
      %v214 = vld [vmem:[%s1 + $0x34] sm:$0xf]
      %v215 = vld [vmem:[%s1 + $0x38] sm:$0xf]
      %v216 = vld [vmem:[%s1 + $0x3c] sm:$0xf]
      %v217 = vld [vmem:[%s2] sm:$0x1]
      %v219 = vlaneseq
      %v220 = vshrl.u32 %v219, 7
      %v221 = vsub.s32 0, %v220
      %v222 = vrot.slane %v217, %v221
      %v226 = vunpack.c.l.b16 %v199
      %v227 = vunpack.c.l.b16 %v200
      %v228 = vpack.c.b16 %v227, %v226
      %v246 = vunpack.c.l.b16 %v201
      %v247 = vunpack.c.l.b16 %v202
      %v248 = vunpack.c.l.b16 %v203
      %v249 = vunpack.c.l.b16 %v204
      %v250 = vunpack.c.l.b16 %v205
      %v251 = vunpack.c.l.b16 %v206
      %v252 = vunpack.c.l.b16 %v207
      %v253 = vunpack.c.l.b16 %v208
      %v254 = vunpack.c.l.b16 %v209
      %v255 = vunpack.c.l.b16 %v210
      %v256 = vunpack.c.l.b16 %v211
      %v257 = vunpack.c.l.b16 %v212
      %v258 = vunpack.c.l.b16 %v213
      %v259 = vunpack.c.l.b16 %v214
      %v260 = vunpack.c.l.b16 %v215
      %v261 = vunpack.c.l.b16 %v216
      %v262 = vpack.c.b16 %v247, %v246
      %v263 = vpack.c.b16 %v249, %v248
      %v264 = vpack.c.b16 %v251, %v250
      %v265 = vpack.c.b16 %v253, %v252
      %v266 = vpack.c.b16 %v255, %v254
      %v267 = vpack.c.b16 %v257, %v256
      %v268 = vpack.c.b16 %v259, %v258
      %v269 = vpack.c.b16 %v261, %v260
      %278 = vmatprep.subr.bf16.mxu0 0
      %279 = vmatpush1.bf16.msra.mxu0 %v262
      %280 = vmatprep.subr.bf16.mxu0 0
      %281 = vmatpush1.bf16.msra.mxu0 %v263
      %282 = vmatprep.subr.bf16.mxu0 0
      %283 = vmatpush1.bf16.msra.mxu0 %v264
      %284 = vmatprep.subr.bf16.mxu0 0
      %285 = vmatpush1.bf16.msra.mxu0 %v265
      %286 = vmatprep.subr.bf16.mxu0 0
      %287 = vmatpush1.bf16.msra.mxu0 %v266
      %288 = vmatprep.subr.bf16.mxu0 0
      %289 = vmatpush1.bf16.msra.mxu0 %v267
      %290 = vmatprep.subr.bf16.mxu0 0
      %291 = vmatpush1.bf16.msra.mxu0 %v268
      %292 = vmatprep.subr.bf16.mxu0 0
      %293 = vmatpush1.bf16.msra.mxu0 %v269
      %294 = vmatprep.subr.bf16.mxu0 0
      %295 = vmatpush1.bf16.msra.mxu0 0
      %296 = vmatprep.subr.bf16.mxu0 0
      %297 = vmatpush1.bf16.msra.mxu0 0
      %298 = vmatprep.subr.bf16.mxu0 0
      %299 = vmatpush1.bf16.msra.mxu0 0
      %300 = vmatprep.subr.bf16.mxu0 0
      %301 = vmatpush1.bf16.msra.mxu0 0
      %302 = vmatprep.subr.bf16.mxu0 0
      %303 = vmatpush1.bf16.msra.mxu0 0
      %304 = vmatprep.subr.bf16.mxu0 0
      %305 = vmatpush1.bf16.msra.mxu0 0
      %306 = vmatprep.subr.bf16.mxu0 0
      %307 = vmatpush1.bf16.msra.mxu0 0
      %308 = vmatprep.subr.bf16.mxu0 0
      %309 = vmatpush1.bf16.msra.mxu0 0
      %310 = vmatprep.mubr.bf16.mxu0 0
      %311 = vmatmul.mubr.bf16.gmra.mrb[0].mxu0 %v228
      %v312 = vpop.f32.mrb[0].mxu0
      %v313 = vadd.f32 %v222, %v312
      %v314 = vpop.f32.mrb[0].mxu0
      %v315 = vpop.f32.mrb[0].mxu0
      %v316 = vadd.f32 %v222, %v315
      %v317 = vpop.f32.mrb[0].mxu0
      %318 = vdwg.mxu0
      %v319 = vld [vmem:[%s3] sm:$0xff]
      %v320 = vld [vmem:[%s3 + $0x8] sm:$0xff]
      %v321 = vadd.f32 %v313, %v319
      %v322 = vadd.f32 %v316, %v320
      %v323 = vpack.c.bf16 %v322, %v321
      %v325 = vunpack.c.l.b16 %v323
      %v326 = vunpack.c.h.b16 %v323
      %v327 = vpack.c.b16 %v325, %v325
      %v328 = vpack.c.b16 %v326, %v326
      %331 = vst [vmem:[%s197] sm:$0xf] %v327
      %332 = vst [vmem:[%s197 + $0x4] sm:$0xf] %v328
      %p333 = scmp.lt.s32.totalorder %s15, 1
      %s334 = scalar_select %p333, %s15, 1
      %s335 = smul.addr %s334, 2
      %s336 = smul.addr %s335, 4
      %s337 = scalar_lea.vmem %s4, %s336
      // Predicated region
      $region37: #{dit_forward.3} parent=35 // pred_check
        %p338 = pneg %p122
      $region38: #{dit_forward.3} parent=35 // pred_check_branch
        %340 = sbr.rel (%p338) target = $region40
      $region39: #{dit_forward.3} parent=35 // pred_region
        _
      $region40: #{dit_forward.3} parent=35 // pred_fallthru
        _
    $region36: #{dit_forward.3} parent=5 // pred_fallthru
      _
    %p341 = scmp.le.s32.totalorder 2, %s10
    // Predicated region
    $region41: #{dit_forward.3} parent=5 // pred_check
      %p342 = pneg %p341
    $region42: #{dit_forward.3} parent=5 // pred_check_branch
      %344 = sbr.rel (%p342) target = $region44
    $region43: #{dit_forward.3} parent=5 // pred_region
      %s345 = ssub.s32 %s10, 2
      // Predicated region
      $region45: #{dit_forward.3} parent=43 // pred_check
        %p346 = pneg %p128
      $region46: #{dit_forward.3} parent=43 // pred_check_branch
        %348 = sbr.rel (%p346) target = $region48
      $region47: #{dit_forward.3} parent=43 // pred_region
        %p349 = scmp.lt.s32.totalorder %s16, 1
        %s350 = scalar_select %p349, %s16, 1
        %s351 = smul.addr %s350, 2
        %s352 = smul.addr %s351, 4
        %s353 = scalar_lea.vmem %s4, %s352
      $region48: #{dit_forward.3} parent=43 // pred_fallthru
        _
    $region44: #{dit_forward.3} parent=5 // pred_fallthru
      _
  $region6: #{dit_forward.3} parent=0 // loop_footer
    %s14 = sadd.s32 1, %s10
  $region7: #{dit_forward.3} parent=0 // loop_footer_branch
    %9 = sbr.rel target = $region3
  $region8: #{dit_forward.3} parent=0 // loop_exit
    _

// kernel: dit_forward.4
$region0: #{dit_forward.4}
  #allocation0 [shape = 'u32[]', space=smem, size = 0x4, offset = 0x4, fixed_abs, tag = 'smem constant byte address 0x4 - core index']
  #allocation1 [shape = 'u32[144,128]{1,0:T(1,128)}', space=vmem, size = 0x12000, scoped, tag = 'internal scratch']
  #allocation2 [shape = 'f32[1,16,128]{2,1,0:T(8,128)}', space=vmem, size = 0x2000, scoped, tag = 'scratch operand']
  %s0 = inlined_call_operand.vmem [shape: bf16[2,16,128], index: 0, kind: input, shape index: {}]
  %s1 = inlined_call_operand.vmem [shape: f32[2,1,128], index: 1, kind: input, shape index: {}]
  %s2 = inlined_call_operand.vmem [shape: f32[2,1,128], index: 2, kind: input, shape index: {}]
  %s3 = inlined_call_operand.vmem [shape: f32[2,1,128], index: 3, kind: input, shape index: {}]
  %s4 = inlined_call_operand.vmem [shape: bf16[2,128,384], index: 4, kind: input, shape index: {}]
  %s5 = inlined_call_operand.vmem [shape: f32[2,1,384], index: 5, kind: input, shape index: {}]
  %s6 = inlined_call_operand.vmem [shape: bf16[2,128,128], index: 6, kind: input, shape index: {}]
  %s7 = inlined_call_operand.vmem [shape: f32[2,1,128], index: 7, kind: input, shape index: {}]
  %s8 = inlined_call_operand.vmem [shape: f32[2,1,128], index: 8, kind: input, shape index: {}]
  %s9 = inlined_call_operand.vmem [shape: f32[2,1,128], index: 9, kind: input, shape index: {}]
  %s10 = inlined_call_operand.vmem [shape: bf16[2,128,512], index: 10, kind: input, shape index: {}]
  %s11 = inlined_call_operand.vmem [shape: f32[2,1,512], index: 11, kind: input, shape index: {}]
  %s12 = inlined_call_operand.vmem [shape: bf16[2,512,128], index: 12, kind: input, shape index: {}]
  %s13 = inlined_call_operand.vmem [shape: f32[2,1,128], index: 13, kind: input, shape index: {}]
  %s14 = inlined_call_operand.vmem [shape: bf16[2,16,128], index: 14, kind: output, shape index: {}]
  %s15 = sld [smem:[#allocation0]]
  $region97: #{dit_forward.4} parent=0
    _
  %s17 = ssub.s32 1, %s15
  %s18 = scalar_select 0, %s17, %s15
  loop: start=0, step=1, limit=6
  $region2: #{dit_forward.4} parent=0 // loop_pre_header
    _
  $region3: #{dit_forward.4} parent=0 // loop_header
    %s20 = sphi 0, %s24
    %p21 = scmp.ge.s32.totalorder %s20, 6
    %s27 = sphi 0, %s39
    %s28 = sphi 0, %s35
    %s29 = sphi 0, %s27
    %s30 = sphi 0, %s28
    %s31 = sphi 0, %s29
    %s32 = sphi 0, %s30
    %s42 = sphi 0, %s44
    %s45 = sphi 0, %s42
    %s46 = sphi 0, %s45
    %s62 = sphi 0, %s46
    %s68 = sphi 0, %s70
    %s71 = sphi 0, %s68
    %s72 = sphi 0, %s71
    %s88 = sphi 0, %s72
    %s94 = sphi 0, %s96
    %s97 = sphi 0, %s94
    %s98 = sphi 0, %s97
    %s114 = sphi 0, %s98
    %s120 = sphi 0, %s122
    %s123 = sphi 0, %s120
    %s124 = sphi 0, %s123
    %s140 = sphi 0, %s124
    %s146 = sphi 0, %s148
    %s149 = sphi 0, %s146
    %s150 = sphi 0, %s149
    %s166 = sphi 0, %s150
    %s172 = sphi 0, %s174
    %s175 = sphi 0, %s172
    %s176 = sphi 0, %s175
    %s192 = sphi 0, %s176
    %s198 = sphi 0, %s200
    %s201 = sphi 0, %s198
    %s202 = sphi 0, %s201
    %s218 = sphi 0, %s202
    %s224 = sphi 0, %s226
    %s227 = sphi 0, %s224
    %s228 = sphi 0, %s227
    %s244 = sphi 0, %s228
    %s250 = sphi 0, %s252
    %s253 = sphi 0, %s250
    %s254 = sphi 0, %s253
    %s270 = sphi 0, %s254
    %s276 = sphi 0, %s278
    %s279 = sphi 0, %s276
    %s280 = sphi 0, %s279
    %s296 = sphi 0, %s280
    %s302 = sphi 0, %s304
    %s305 = sphi 0, %s302
    %s306 = sphi 0, %s305
    %s322 = sphi 0, %s306
    %s328 = sphi 0, %s330
    %s331 = sphi 0, %s328
    %s332 = sphi 0, %s331
    %s348 = sphi 0, %s332
    %s354 = sphi 0, %s356
    %s357 = sphi 0, %s354
    %s358 = sphi 0, %s357
    %s374 = sphi 0, %s358
    %s380 = sphi 0, %s382
    %s383 = sphi 0, %s380
    %s384 = sphi 0, %s383
    %s400 = sphi 0, %s384
    %s406 = sphi 0, %s408
    %s409 = sphi 0, %s406
    %s410 = sphi 0, %s409
    %s426 = sphi 0, %s410
  $region4: #{dit_forward.4} parent=0 // loop_header_branch
    %23 = sbr.rel (%p21) target = $region8
  $region5: #{dit_forward.4} parent=0 // loop_body
    %s25 = ssub.s32 %s20, 1
    %s26 = ssub.s32 %s20, 2
    %s33 = sadd.s32 1, %s28
    %p34 = scmp.ge.s32.totalorder %s33, 2
    %s35 = scalar_select %p34, 0, %s33
    %s36 = sadd.s32 1, %s27
    %s37 = scalar_select %p34, %s36, %s27
    %p38 = scmp.ge.s32.totalorder %s37, 2
    %s39 = scalar_select %p38, 0, %s37
    %s40 = ssub.s32 %s27, %s39
    %p41 = scmp.eq.s32.totalorder %s40, 0
    %s43 = sadd.s32 %s42, 1
    %s44 = scalar_select %p41, %s42, %s43
    %p47 = pneg %p41
    %p48 = scmp.eq.s32.totalorder %s20, 3
    %p49 = por %p47, %p48
    %p50 = scmp.ne.s32.totalorder %s42, %s45
    %p51 = scmp.eq.s32.totalorder %s20, 0
    %p52 = por %p50, %p51
    %p53 = scmp.ne.s32.totalorder %s42, %s45
    %p54 = scmp.eq.s32.totalorder %s25, 3
    %p55 = por %p53, %p54
    %p56 = scmp.ne.s32.totalorder %s45, %s46
    %p57 = scmp.eq.s32.totalorder %s25, 0
    %p58 = por %p56, %p57
    %p59 = scmp.ne.s32.totalorder %s45, %s46
    %p60 = scmp.eq.s32.totalorder %s26, 3
    %p61 = por %p59, %p60
    %p63 = scmp.ne.s32.totalorder %s46, %s62
    %p64 = scmp.eq.s32.totalorder %s26, 0
    %p65 = por %p63, %p64
    %s66 = ssub.s32 %s27, %s39
    %p67 = scmp.eq.s32.totalorder %s66, 0
    %s69 = sadd.s32 %s68, 1
    %s70 = scalar_select %p67, %s68, %s69
    %p73 = pneg %p67
    %p74 = scmp.eq.s32.totalorder %s20, 3
    %p75 = por %p73, %p74
    %p76 = scmp.ne.s32.totalorder %s68, %s71
    %p77 = scmp.eq.s32.totalorder %s20, 0
    %p78 = por %p76, %p77
    %p79 = scmp.ne.s32.totalorder %s68, %s71
    %p80 = scmp.eq.s32.totalorder %s25, 3
    %p81 = por %p79, %p80
    %p82 = scmp.ne.s32.totalorder %s71, %s72
    %p83 = scmp.eq.s32.totalorder %s25, 0
    %p84 = por %p82, %p83
    %p85 = scmp.ne.s32.totalorder %s71, %s72
    %p86 = scmp.eq.s32.totalorder %s26, 3
    %p87 = por %p85, %p86
    %p89 = scmp.ne.s32.totalorder %s72, %s88
    %p90 = scmp.eq.s32.totalorder %s26, 0
    %p91 = por %p89, %p90
    %s92 = ssub.s32 %s28, %s35
    %p93 = scmp.eq.s32.totalorder %s92, 0
    %s95 = sadd.s32 %s94, 1
    %s96 = scalar_select %p93, %s94, %s95
    %p99 = pneg %p93
    %p100 = scmp.eq.s32.totalorder %s20, 3
    %p101 = por %p99, %p100
    %p102 = scmp.ne.s32.totalorder %s94, %s97
    %p103 = scmp.eq.s32.totalorder %s20, 0
    %p104 = por %p102, %p103
    %p105 = scmp.ne.s32.totalorder %s94, %s97
    %p106 = scmp.eq.s32.totalorder %s25, 3
    %p107 = por %p105, %p106
    %p108 = scmp.ne.s32.totalorder %s97, %s98
    %p109 = scmp.eq.s32.totalorder %s25, 0
    %p110 = por %p108, %p109
    %p111 = scmp.ne.s32.totalorder %s97, %s98
    %p112 = scmp.eq.s32.totalorder %s26, 3
    %p113 = por %p111, %p112
    %p115 = scmp.ne.s32.totalorder %s98, %s114
    %p116 = scmp.eq.s32.totalorder %s26, 0
    %p117 = por %p115, %p116
    %s118 = ssub.s32 %s28, %s35
    %p119 = scmp.eq.s32.totalorder %s118, 0
    %s121 = sadd.s32 %s120, 1
    %s122 = scalar_select %p119, %s120, %s121
    %p125 = pneg %p119
    %p126 = scmp.eq.s32.totalorder %s20, 3
    %p127 = por %p125, %p126
    %p128 = scmp.ne.s32.totalorder %s120, %s123
    %p129 = scmp.eq.s32.totalorder %s20, 0
    %p130 = por %p128, %p129
    %p131 = scmp.ne.s32.totalorder %s120, %s123
    %p132 = scmp.eq.s32.totalorder %s25, 3
    %p133 = por %p131, %p132
    %p134 = scmp.ne.s32.totalorder %s123, %s124
    %p135 = scmp.eq.s32.totalorder %s25, 0
    %p136 = por %p134, %p135
    %p137 = scmp.ne.s32.totalorder %s123, %s124
    %p138 = scmp.eq.s32.totalorder %s26, 3
    %p139 = por %p137, %p138
    %p141 = scmp.ne.s32.totalorder %s124, %s140
    %p142 = scmp.eq.s32.totalorder %s26, 0
    %p143 = por %p141, %p142
    %s144 = ssub.s32 %s28, %s35
    %p145 = scmp.eq.s32.totalorder %s144, 0
    %s147 = sadd.s32 %s146, 1
    %s148 = scalar_select %p145, %s146, %s147
    %p151 = pneg %p145
    %p152 = scmp.eq.s32.totalorder %s20, 3
    %p153 = por %p151, %p152
    %p154 = scmp.ne.s32.totalorder %s146, %s149
    %p155 = scmp.eq.s32.totalorder %s20, 0
    %p156 = por %p154, %p155
    %p157 = scmp.ne.s32.totalorder %s146, %s149
    %p158 = scmp.eq.s32.totalorder %s25, 3
    %p159 = por %p157, %p158
    %p160 = scmp.ne.s32.totalorder %s149, %s150
    %p161 = scmp.eq.s32.totalorder %s25, 0
    %p162 = por %p160, %p161
    %p163 = scmp.ne.s32.totalorder %s149, %s150
    %p164 = scmp.eq.s32.totalorder %s26, 3
    %p165 = por %p163, %p164
    %p167 = scmp.ne.s32.totalorder %s150, %s166
    %p168 = scmp.eq.s32.totalorder %s26, 0
    %p169 = por %p167, %p168
    %s170 = ssub.s32 %s28, %s35
    %p171 = scmp.eq.s32.totalorder %s170, 0
    %s173 = sadd.s32 %s172, 1
    %s174 = scalar_select %p171, %s172, %s173
    %p177 = pneg %p171
    %p178 = scmp.eq.s32.totalorder %s20, 3
    %p179 = por %p177, %p178
    %p180 = scmp.ne.s32.totalorder %s172, %s175
    %p181 = scmp.eq.s32.totalorder %s20, 0
    %p182 = por %p180, %p181
    %p183 = scmp.ne.s32.totalorder %s172, %s175
    %p184 = scmp.eq.s32.totalorder %s25, 3
    %p185 = por %p183, %p184
    %p186 = scmp.ne.s32.totalorder %s175, %s176
    %p187 = scmp.eq.s32.totalorder %s25, 0
    %p188 = por %p186, %p187
    %p189 = scmp.ne.s32.totalorder %s175, %s176
    %p190 = scmp.eq.s32.totalorder %s26, 3
    %p191 = por %p189, %p190
    %p193 = scmp.ne.s32.totalorder %s176, %s192
    %p194 = scmp.eq.s32.totalorder %s26, 0
    %p195 = por %p193, %p194
    %s196 = ssub.s32 %s28, %s35
    %p197 = scmp.eq.s32.totalorder %s196, 0
    %s199 = sadd.s32 %s198, 1
    %s200 = scalar_select %p197, %s198, %s199
    %p203 = pneg %p197
    %p204 = scmp.eq.s32.totalorder %s20, 3
    %p205 = por %p203, %p204
    %p206 = scmp.ne.s32.totalorder %s198, %s201
    %p207 = scmp.eq.s32.totalorder %s20, 0
    %p208 = por %p206, %p207
    %p209 = scmp.ne.s32.totalorder %s198, %s201
    %p210 = scmp.eq.s32.totalorder %s25, 3
    %p211 = por %p209, %p210
    %p212 = scmp.ne.s32.totalorder %s201, %s202
    %p213 = scmp.eq.s32.totalorder %s25, 0
    %p214 = por %p212, %p213
    %p215 = scmp.ne.s32.totalorder %s201, %s202
    %p216 = scmp.eq.s32.totalorder %s26, 3
    %p217 = por %p215, %p216
    %p219 = scmp.ne.s32.totalorder %s202, %s218
    %p220 = scmp.eq.s32.totalorder %s26, 0
    %p221 = por %p219, %p220
    %s222 = ssub.s32 %s28, %s35
    %p223 = scmp.eq.s32.totalorder %s222, 0
    %s225 = sadd.s32 %s224, 1
    %s226 = scalar_select %p223, %s224, %s225
    %p229 = pneg %p223
    %p230 = scmp.eq.s32.totalorder %s20, 3
    %p231 = por %p229, %p230
    %p232 = scmp.ne.s32.totalorder %s224, %s227
    %p233 = scmp.eq.s32.totalorder %s20, 0
    %p234 = por %p232, %p233
    %p235 = scmp.ne.s32.totalorder %s224, %s227
    %p236 = scmp.eq.s32.totalorder %s25, 3
    %p237 = por %p235, %p236
    %p238 = scmp.ne.s32.totalorder %s227, %s228
    %p239 = scmp.eq.s32.totalorder %s25, 0
    %p240 = por %p238, %p239
    %p241 = scmp.ne.s32.totalorder %s227, %s228
    %p242 = scmp.eq.s32.totalorder %s26, 3
    %p243 = por %p241, %p242
    %p245 = scmp.ne.s32.totalorder %s228, %s244
    %p246 = scmp.eq.s32.totalorder %s26, 0
    %p247 = por %p245, %p246
    %s248 = ssub.s32 %s28, %s35
    %p249 = scmp.eq.s32.totalorder %s248, 0
    %s251 = sadd.s32 %s250, 1
    %s252 = scalar_select %p249, %s250, %s251
    %p255 = pneg %p249
    %p256 = scmp.eq.s32.totalorder %s20, 3
    %p257 = por %p255, %p256
    %p258 = scmp.ne.s32.totalorder %s250, %s253
    %p259 = scmp.eq.s32.totalorder %s20, 0
    %p260 = por %p258, %p259
    %p261 = scmp.ne.s32.totalorder %s250, %s253
    %p262 = scmp.eq.s32.totalorder %s25, 3
    %p263 = por %p261, %p262
    %p264 = scmp.ne.s32.totalorder %s253, %s254
    %p265 = scmp.eq.s32.totalorder %s25, 0
    %p266 = por %p264, %p265
    %p267 = scmp.ne.s32.totalorder %s253, %s254
    %p268 = scmp.eq.s32.totalorder %s26, 3
    %p269 = por %p267, %p268
    %p271 = scmp.ne.s32.totalorder %s254, %s270
    %p272 = scmp.eq.s32.totalorder %s26, 0
    %p273 = por %p271, %p272
    %s274 = ssub.s32 %s28, %s35
    %p275 = scmp.eq.s32.totalorder %s274, 0
    %s277 = sadd.s32 %s276, 1
    %s278 = scalar_select %p275, %s276, %s277
    %p281 = pneg %p275
    %p282 = scmp.eq.s32.totalorder %s20, 3
    %p283 = por %p281, %p282
    %p284 = scmp.ne.s32.totalorder %s276, %s279
    %p285 = scmp.eq.s32.totalorder %s20, 0
    %p286 = por %p284, %p285
    %p287 = scmp.ne.s32.totalorder %s276, %s279
    %p288 = scmp.eq.s32.totalorder %s25, 3
    %p289 = por %p287, %p288
    %p290 = scmp.ne.s32.totalorder %s279, %s280
    %p291 = scmp.eq.s32.totalorder %s25, 0
    %p292 = por %p290, %p291
    %p293 = scmp.ne.s32.totalorder %s279, %s280
    %p294 = scmp.eq.s32.totalorder %s26, 3
    %p295 = por %p293, %p294
    %p297 = scmp.ne.s32.totalorder %s280, %s296
    %p298 = scmp.eq.s32.totalorder %s26, 0
    %p299 = por %p297, %p298
    %s300 = ssub.s32 %s28, %s35
    %p301 = scmp.eq.s32.totalorder %s300, 0
    %s303 = sadd.s32 %s302, 1
    %s304 = scalar_select %p301, %s302, %s303
    %p307 = pneg %p301
    %p308 = scmp.eq.s32.totalorder %s20, 3
    %p309 = por %p307, %p308
    %p310 = scmp.ne.s32.totalorder %s302, %s305
    %p311 = scmp.eq.s32.totalorder %s20, 0
    %p312 = por %p310, %p311
    %p313 = scmp.ne.s32.totalorder %s302, %s305
    %p314 = scmp.eq.s32.totalorder %s25, 3
    %p315 = por %p313, %p314
    %p316 = scmp.ne.s32.totalorder %s305, %s306
    %p317 = scmp.eq.s32.totalorder %s25, 0
    %p318 = por %p316, %p317
    %p319 = scmp.ne.s32.totalorder %s305, %s306
    %p320 = scmp.eq.s32.totalorder %s26, 3
    %p321 = por %p319, %p320
    %p323 = scmp.ne.s32.totalorder %s306, %s322
    %p324 = scmp.eq.s32.totalorder %s26, 0
    %p325 = por %p323, %p324
    %s326 = ssub.s32 %s28, %s35
    %p327 = scmp.eq.s32.totalorder %s326, 0
    %s329 = sadd.s32 %s328, 1
    %s330 = scalar_select %p327, %s328, %s329
    %p333 = pneg %p327
    %p334 = scmp.eq.s32.totalorder %s20, 3
    %p335 = por %p333, %p334
    %p336 = scmp.ne.s32.totalorder %s328, %s331
    %p337 = scmp.eq.s32.totalorder %s20, 0
    %p338 = por %p336, %p337
    %p339 = scmp.ne.s32.totalorder %s328, %s331
    %p340 = scmp.eq.s32.totalorder %s25, 3
    %p341 = por %p339, %p340
    %p342 = scmp.ne.s32.totalorder %s331, %s332
    %p343 = scmp.eq.s32.totalorder %s25, 0
    %p344 = por %p342, %p343
    %p345 = scmp.ne.s32.totalorder %s331, %s332
    %p346 = scmp.eq.s32.totalorder %s26, 3
    %p347 = por %p345, %p346
    %p349 = scmp.ne.s32.totalorder %s332, %s348
    %p350 = scmp.eq.s32.totalorder %s26, 0
    %p351 = por %p349, %p350
    %s352 = ssub.s32 %s28, %s35
    %p353 = scmp.eq.s32.totalorder %s352, 0
    %s355 = sadd.s32 %s354, 1
    %s356 = scalar_select %p353, %s354, %s355
    %p359 = pneg %p353
    %p360 = scmp.eq.s32.totalorder %s20, 3
    %p361 = por %p359, %p360
    %p362 = scmp.ne.s32.totalorder %s354, %s357
    %p363 = scmp.eq.s32.totalorder %s20, 0
    %p364 = por %p362, %p363
    %p365 = scmp.ne.s32.totalorder %s354, %s357
    %p366 = scmp.eq.s32.totalorder %s25, 3
    %p367 = por %p365, %p366
    %p368 = scmp.ne.s32.totalorder %s357, %s358
    %p369 = scmp.eq.s32.totalorder %s25, 0
    %p370 = por %p368, %p369
    %p371 = scmp.ne.s32.totalorder %s357, %s358
    %p372 = scmp.eq.s32.totalorder %s26, 3
    %p373 = por %p371, %p372
    %p375 = scmp.ne.s32.totalorder %s358, %s374
    %p376 = scmp.eq.s32.totalorder %s26, 0
    %p377 = por %p375, %p376
    %s378 = ssub.s32 %s28, %s35
    %p379 = scmp.eq.s32.totalorder %s378, 0
    %s381 = sadd.s32 %s380, 1
    %s382 = scalar_select %p379, %s380, %s381
    %p385 = pneg %p379
    %p386 = scmp.eq.s32.totalorder %s20, 3
    %p387 = por %p385, %p386
    %p388 = scmp.ne.s32.totalorder %s380, %s383
    %p389 = scmp.eq.s32.totalorder %s20, 0
    %p390 = por %p388, %p389
    %p391 = scmp.ne.s32.totalorder %s380, %s383
    %p392 = scmp.eq.s32.totalorder %s25, 3
    %p393 = por %p391, %p392
    %p394 = scmp.ne.s32.totalorder %s383, %s384
    %p395 = scmp.eq.s32.totalorder %s25, 0
    %p396 = por %p394, %p395
    %p397 = scmp.ne.s32.totalorder %s383, %s384
    %p398 = scmp.eq.s32.totalorder %s26, 3
    %p399 = por %p397, %p398
    %p401 = scmp.ne.s32.totalorder %s384, %s400
    %p402 = scmp.eq.s32.totalorder %s26, 0
    %p403 = por %p401, %p402
    %s404 = ssub.s32 %s27, %s39
    %p405 = scmp.eq.s32.totalorder %s404, 0
    %s407 = sadd.s32 %s406, 1
    %s408 = scalar_select %p405, %s406, %s407
    %p411 = pneg %p405
    %p412 = scmp.eq.s32.totalorder %s20, 3
    %p413 = por %p411, %p412
    %p414 = scmp.ne.s32.totalorder %s406, %s409
    %p415 = scmp.eq.s32.totalorder %s20, 0
    %p416 = por %p414, %p415
    %p417 = scmp.ne.s32.totalorder %s406, %s409
    %p418 = scmp.eq.s32.totalorder %s25, 3
    %p419 = por %p417, %p418
    %p420 = scmp.ne.s32.totalorder %s409, %s410
    %p421 = scmp.eq.s32.totalorder %s25, 0
    %p422 = por %p420, %p421
    %p423 = scmp.ne.s32.totalorder %s409, %s410
    %p424 = scmp.eq.s32.totalorder %s26, 3
    %p425 = por %p423, %p424
    %p427 = scmp.ne.s32.totalorder %s410, %s426
    %p428 = scmp.eq.s32.totalorder %s26, 0
    %p429 = por %p427, %p428
    %p430 = scmp.le.s32.totalorder 1, %s20
    %p431 = scmp.lt.s32.totalorder %s20, 5
    %p432 = pnand %p430, %p431
    %p433 = pneg %p432
    // Predicated region
    $region9: #{dit_forward.4} parent=5 // pred_check
      _
    $region10: #{dit_forward.4} parent=5 // pred_check_branch
      %435 = sbr.rel (%p432) target = $region12
    $region11: #{dit_forward.4} parent=5 // pred_region
      %s436 = ssub.s32 %s20, 1
    $region12: #{dit_forward.4} parent=5 // pred_fallthru
      _
    %p437 = scmp.lt.s32.totalorder %s20, 4
    // Predicated region
    $region13: #{dit_forward.4} parent=5 // pred_check
      %p438 = pneg %p437
    $region14: #{dit_forward.4} parent=5 // pred_check_branch
      %440 = sbr.rel (%p438) target = $region16
    $region15: #{dit_forward.4} parent=5 // pred_region
      // Predicated region
      $region17: #{dit_forward.4} parent=15 // pred_check
        %p441 = pneg %p52
      $region18: #{dit_forward.4} parent=15 // pred_check_branch
        %443 = sbr.rel (%p441) target = $region20
      $region19: #{dit_forward.4} parent=15 // pred_region
        %p444 = scmp.lt.s32.totalorder %s27, 1
        %s445 = scalar_select %p444, %s27, 1
        %s446 = smul.addr %s445, 2
        %s447 = smul.addr %s446, 4
        %s448 = scalar_lea.vmem %s0, %s447
      $region20: #{dit_forward.4} parent=15 // pred_fallthru
        _
      // Predicated region
      $region21: #{dit_forward.4} parent=15 // pred_check
        %p449 = pneg %p78
      $region22: #{dit_forward.4} parent=15 // pred_check_branch
        %451 = sbr.rel (%p449) target = $region24
      $region23: #{dit_forward.4} parent=15 // pred_region
        %p452 = scmp.lt.s32.totalorder %s27, 1
        %s453 = scalar_select %p452, %s27, 1
        %s454 = scalar_lea.vmem %s1, %s453
      $region24: #{dit_forward.4} parent=15 // pred_fallthru
        _
      // Predicated region
      $region25: #{dit_forward.4} parent=15 // pred_check
        %p455 = pneg %p104
      $region26: #{dit_forward.4} parent=15 // pred_check_branch
        %457 = sbr.rel (%p455) target = $region28
      $region27: #{dit_forward.4} parent=15 // pred_region
        %p458 = scmp.lt.s32.totalorder %s28, 1
        %s459 = scalar_select %p458, %s28, 1
        %s460 = scalar_lea.vmem %s2, %s459
      $region28: #{dit_forward.4} parent=15 // pred_fallthru
        _
      // Predicated region
      $region29: #{dit_forward.4} parent=15 // pred_check
        %p461 = pneg %p130
      $region30: #{dit_forward.4} parent=15 // pred_check_branch
        %463 = sbr.rel (%p461) target = $region32
      $region31: #{dit_forward.4} parent=15 // pred_region
        %p464 = scmp.lt.s32.totalorder %s28, 1
        %s465 = scalar_select %p464, %s28, 1
        %s466 = scalar_lea.vmem %s3, %s465
      $region32: #{dit_forward.4} parent=15 // pred_fallthru
        _
      // Predicated region
      $region33: #{dit_forward.4} parent=15 // pred_check
        %p467 = pneg %p156
      $region34: #{dit_forward.4} parent=15 // pred_check_branch
        %469 = sbr.rel (%p467) target = $region36
      $region35: #{dit_forward.4} parent=15 // pred_region
        %p470 = scmp.lt.s32.totalorder %s28, 1
        %s471 = scalar_select %p470, %s28, 1
        %s472 = smul.addr %s471, 48
        %s473 = smul.addr %s472, 4
        %s474 = scalar_lea.vmem %s4, %s473
      $region36: #{dit_forward.4} parent=15 // pred_fallthru
        _
      // Predicated region
      $region37: #{dit_forward.4} parent=15 // pred_check
        %p475 = pneg %p182
      $region38: #{dit_forward.4} parent=15 // pred_check_branch
        %477 = sbr.rel (%p475) target = $region40
      $region39: #{dit_forward.4} parent=15 // pred_region
        %p478 = scmp.lt.s32.totalorder %s28, 1
        %s479 = scalar_select %p478, %s28, 1
        %s480 = smul.addr %s479, 3
        %s481 = scalar_lea.vmem %s5, %s480
      $region40: #{dit_forward.4} parent=15 // pred_fallthru
        _
      // Predicated region
      $region41: #{dit_forward.4} parent=15 // pred_check
        %p482 = pneg %p208
      $region42: #{dit_forward.4} parent=15 // pred_check_branch
        %484 = sbr.rel (%p482) target = $region44
      $region43: #{dit_forward.4} parent=15 // pred_region
        %p485 = scmp.lt.s32.totalorder %s28, 1
        %s486 = scalar_select %p485, %s28, 1
        %s487 = smul.addr %s486, 16
        %s488 = smul.addr %s487, 4
        %s489 = scalar_lea.vmem %s6, %s488
      $region44: #{dit_forward.4} parent=15 // pred_fallthru
        _
      // Predicated region
      $region45: #{dit_forward.4} parent=15 // pred_check
        %p490 = pneg %p234
      $region46: #{dit_forward.4} parent=15 // pred_check_branch
        %492 = sbr.rel (%p490) target = $region48
      $region47: #{dit_forward.4} parent=15 // pred_region
        %p493 = scmp.lt.s32.totalorder %s28, 1
        %s494 = scalar_select %p493, %s28, 1
        %s495 = scalar_lea.vmem %s7, %s494
      $region48: #{dit_forward.4} parent=15 // pred_fallthru
        _
      // Predicated region
      $region49: #{dit_forward.4} parent=15 // pred_check
        %p496 = pneg %p260
      $region50: #{dit_forward.4} parent=15 // pred_check_branch
        %498 = sbr.rel (%p496) target = $region52
      $region51: #{dit_forward.4} parent=15 // pred_region
        %p499 = scmp.lt.s32.totalorder %s28, 1
        %s500 = scalar_select %p499, %s28, 1
        %s501 = scalar_lea.vmem %s8, %s500
      $region52: #{dit_forward.4} parent=15 // pred_fallthru
        _
      // Predicated region
      $region53: #{dit_forward.4} parent=15 // pred_check
        %p502 = pneg %p286
      $region54: #{dit_forward.4} parent=15 // pred_check_branch
        %504 = sbr.rel (%p502) target = $region56
      $region55: #{dit_forward.4} parent=15 // pred_region
        %p505 = scmp.lt.s32.totalorder %s28, 1
        %s506 = scalar_select %p505, %s28, 1
        %s507 = scalar_lea.vmem %s9, %s506
      $region56: #{dit_forward.4} parent=15 // pred_fallthru
        _
      // Predicated region
      $region57: #{dit_forward.4} parent=15 // pred_check
        %p508 = pneg %p312
      $region58: #{dit_forward.4} parent=15 // pred_check_branch
        %510 = sbr.rel (%p508) target = $region60
      $region59: #{dit_forward.4} parent=15 // pred_region
        %p511 = scmp.lt.s32.totalorder %s28, 1
        %s512 = scalar_select %p511, %s28, 1
        %s513 = smul.addr %s512, 64
        %s514 = smul.addr %s513, 4
        %s515 = scalar_lea.vmem %s10, %s514
      $region60: #{dit_forward.4} parent=15 // pred_fallthru
        _
      // Predicated region
      $region61: #{dit_forward.4} parent=15 // pred_check
        %p516 = pneg %p338
      $region62: #{dit_forward.4} parent=15 // pred_check_branch
        %518 = sbr.rel (%p516) target = $region64
      $region63: #{dit_forward.4} parent=15 // pred_region
        %p519 = scmp.lt.s32.totalorder %s28, 1
        %s520 = scalar_select %p519, %s28, 1
        %s521 = smul.addr %s520, 4
        %s522 = scalar_lea.vmem %s11, %s521
      $region64: #{dit_forward.4} parent=15 // pred_fallthru
        _
      // Predicated region
      $region65: #{dit_forward.4} parent=15 // pred_check
        %p523 = pneg %p364
      $region66: #{dit_forward.4} parent=15 // pred_check_branch
        %525 = sbr.rel (%p523) target = $region68
      $region67: #{dit_forward.4} parent=15 // pred_region
        %p526 = scmp.lt.s32.totalorder %s28, 1
        %s527 = scalar_select %p526, %s28, 1
        %s528 = smul.addr %s527, 64
        %s529 = smul.addr %s528, 4
        %s530 = scalar_lea.vmem %s12, %s529
      $region68: #{dit_forward.4} parent=15 // pred_fallthru
        _
      // Predicated region
      $region69: #{dit_forward.4} parent=15 // pred_check
        %p531 = pneg %p390
      $region70: #{dit_forward.4} parent=15 // pred_check_branch
        %533 = sbr.rel (%p531) target = $region72
      $region71: #{dit_forward.4} parent=15 // pred_region
        %p534 = scmp.lt.s32.totalorder %s28, 1
        %s535 = scalar_select %p534, %s28, 1
        %s536 = scalar_lea.vmem %s13, %s535
      $region72: #{dit_forward.4} parent=15 // pred_fallthru
        _
    $region16: #{dit_forward.4} parent=5 // pred_fallthru
      _
    %p537 = scmp.le.s32.totalorder 1, %s20
    %p538 = scmp.lt.s32.totalorder %s20, 5
    %p539 = pnand %p537, %p538
    %p540 = pneg %p539
    // Predicated region
    $region73: #{dit_forward.4} parent=5 // pred_check
      _
    $region74: #{dit_forward.4} parent=5 // pred_check_branch
      %542 = sbr.rel (%p539) target = $region76
    $region75: #{dit_forward.4} parent=5 // pred_region
      %s543 = ssub.s32 %s20, 1
      %p544 = scmp.lt.s32.totalorder %s29, 1
      %s545 = scalar_select %p544, %s29, 1
      %s546 = smul.addr %s545, 2
      %s547 = smul.addr %s546, 4
      %s548 = scalar_lea.vmem %s0, %s547
      %p549 = pneg %p58
      %p550 = pneg %p55
      %p551 = scmp.lt.s32.totalorder %s29, 1
      %s552 = scalar_select %p551, %s29, 1
      %s553 = scalar_lea.vmem %s1, %s552
      %p554 = pneg %p84
      %p555 = pneg %p81
      %p556 = scmp.lt.s32.totalorder %s30, 1
      %s557 = scalar_select %p556, %s30, 1
      %s558 = scalar_lea.vmem %s2, %s557
      %p559 = pneg %p110
      %p560 = pneg %p107
      %p561 = scmp.lt.s32.totalorder %s30, 1
      %s562 = scalar_select %p561, %s30, 1
      %s563 = scalar_lea.vmem %s3, %s562
      %p564 = pneg %p136
      %p565 = pneg %p133
      %p566 = scmp.lt.s32.totalorder %s30, 1
      %s567 = scalar_select %p566, %s30, 1
      %s568 = smul.addr %s567, 48
      %s569 = smul.addr %s568, 4
      %s570 = scalar_lea.vmem %s4, %s569
      %p571 = pneg %p162
      %p572 = pneg %p159
      %p573 = scmp.lt.s32.totalorder %s30, 1
      %s574 = scalar_select %p573, %s30, 1
      %s575 = smul.addr %s574, 3
      %s576 = scalar_lea.vmem %s5, %s575
      %p577 = pneg %p188
      %p578 = pneg %p185
      %p579 = scmp.lt.s32.totalorder %s30, 1
      %s580 = scalar_select %p579, %s30, 1
      %s581 = smul.addr %s580, 16
      %s582 = smul.addr %s581, 4
      %s583 = scalar_lea.vmem %s6, %s582
      %p584 = pneg %p214
      %p585 = pneg %p211
      %p586 = scmp.lt.s32.totalorder %s30, 1
      %s587 = scalar_select %p586, %s30, 1
      %s588 = scalar_lea.vmem %s7, %s587
      %p589 = pneg %p240
      %p590 = pneg %p237
      %p591 = scmp.lt.s32.totalorder %s30, 1
      %s592 = scalar_select %p591, %s30, 1
      %s593 = scalar_lea.vmem %s8, %s592
      %p594 = pneg %p266
      %p595 = pneg %p263
      %p596 = scmp.lt.s32.totalorder %s30, 1
      %s597 = scalar_select %p596, %s30, 1
      %s598 = scalar_lea.vmem %s9, %s597
      %p599 = pneg %p292
      %p600 = pneg %p289
      %p601 = scmp.lt.s32.totalorder %s30, 1
      %s602 = scalar_select %p601, %s30, 1
      %s603 = smul.addr %s602, 64
      %s604 = smul.addr %s603, 4
      %s605 = scalar_lea.vmem %s10, %s604
      %p606 = pneg %p318
      %p607 = pneg %p315
      %p608 = scmp.lt.s32.totalorder %s30, 1
      %s609 = scalar_select %p608, %s30, 1
      %s610 = smul.addr %s609, 4
      %s611 = scalar_lea.vmem %s11, %s610
      %p612 = pneg %p344
      %p613 = pneg %p341
      %p614 = scmp.lt.s32.totalorder %s30, 1
      %s615 = scalar_select %p614, %s30, 1
      %s616 = smul.addr %s615, 64
      %s617 = smul.addr %s616, 4
      %s618 = scalar_lea.vmem %s12, %s617
      %p619 = pneg %p370
      %p620 = pneg %p367
      %p621 = scmp.lt.s32.totalorder %s30, 1
      %s622 = scalar_select %p621, %s30, 1
      %s623 = scalar_lea.vmem %s13, %s622
      %p624 = pneg %p396
      %p625 = pneg %p393
      %p626 = pneg %p422
      %p627 = pneg %p419
      %p628 = scmp.lt.s32.totalorder %s29, 1
      %s629 = scalar_select %p628, %s29, 1
      %s630 = smul.addr %s629, 2
      %s631 = smul.addr %s630, 4
      %s632 = scalar_lea.vmem %s14, %s631
      %p633 = scmp.lt.s32.totalorder %s29, 1
      %s634 = scalar_select %p633, %s29, 1
      %s635 = smul.addr %s634, 2
      %s636 = smul.addr %s635, 4
      %s637 = scalar_lea.vmem %s0, %s636
      %p638 = scmp.lt.s32.totalorder %s29, 1
      %s639 = scalar_select %p638, %s29, 1
      %s640 = scalar_lea.vmem %s1, %s639
      %p641 = scmp.lt.s32.totalorder %s30, 1
      %s642 = scalar_select %p641, %s30, 1
      %s643 = scalar_lea.vmem %s2, %s642
      %p644 = scmp.lt.s32.totalorder %s30, 1
      %s645 = scalar_select %p644, %s30, 1
      %s646 = scalar_lea.vmem %s3, %s645
      %p647 = scmp.lt.s32.totalorder %s30, 1
      %s648 = scalar_select %p647, %s30, 1
      %s649 = smul.addr %s648, 48
      %s650 = smul.addr %s649, 4
      %s651 = scalar_lea.vmem %s4, %s650
      %p652 = scmp.lt.s32.totalorder %s30, 1
      %s653 = scalar_select %p652, %s30, 1
      %s654 = smul.addr %s653, 3
      %s655 = scalar_lea.vmem %s5, %s654
      %p656 = scmp.lt.s32.totalorder %s30, 1
      %s657 = scalar_select %p656, %s30, 1
      %s658 = smul.addr %s657, 16
      %s659 = smul.addr %s658, 4
      %s660 = scalar_lea.vmem %s6, %s659
      %p661 = scmp.lt.s32.totalorder %s30, 1
      %s662 = scalar_select %p661, %s30, 1
      %s663 = scalar_lea.vmem %s7, %s662
      %p664 = scmp.lt.s32.totalorder %s30, 1
      %s665 = scalar_select %p664, %s30, 1
      %s666 = scalar_lea.vmem %s8, %s665
      %p667 = scmp.lt.s32.totalorder %s30, 1
      %s668 = scalar_select %p667, %s30, 1
      %s669 = scalar_lea.vmem %s9, %s668
      %p670 = scmp.lt.s32.totalorder %s30, 1
      %s671 = scalar_select %p670, %s30, 1
      %s672 = smul.addr %s671, 64
      %s673 = smul.addr %s672, 4
      %s674 = scalar_lea.vmem %s10, %s673
      %p675 = scmp.lt.s32.totalorder %s30, 1
      %s676 = scalar_select %p675, %s30, 1
      %s677 = smul.addr %s676, 4
      %s678 = scalar_lea.vmem %s11, %s677
      %p679 = scmp.lt.s32.totalorder %s30, 1
      %s680 = scalar_select %p679, %s30, 1
      %s681 = smul.addr %s680, 64
      %s682 = smul.addr %s681, 4
      %s683 = scalar_lea.vmem %s12, %s682
      %p684 = scmp.lt.s32.totalorder %s30, 1
      %s685 = scalar_select %p684, %s30, 1
      %s686 = scalar_lea.vmem %s13, %s685
      %p687 = scmp.lt.s32.totalorder %s29, 1
      %s688 = scalar_select %p687, %s29, 1
      %s689 = smul.addr %s688, 2
      %s690 = smul.addr %s689, 4
      %s691 = scalar_lea.vmem %s14, %s690
      %p693 = scmp.eq.s32.totalorder %s30, 0
      // Predicated region
      $region77: #{dit_forward.4} parent=75 // pred_check
        %p694 = pneg %p693
      $region78: #{dit_forward.4} parent=75 // pred_check_branch
        %696 = sbr.rel (%p694) target = $region80
      $region79: #{dit_forward.4} parent=75 // pred_region
        %v697 = vld [vmem:[%s637] sm:$0xf]
        %v698 = vld [vmem:[%s637 + $0x4] sm:$0xf]
        %v699 = vunpack.c.l.bf16 %v697
        %v700 = vunpack.c.l.bf16 %v698
        %701 = vst [vmem:[#allocation2] sm:$0xff] %v699
        %702 = vst [vmem:[#allocation2 + $0x8] sm:$0xff] %v700
      $region80: #{dit_forward.4} parent=75 // pred_fallthru
        _
      %v703 = vld [vmem:[#allocation2] sm:$0xff]
      %v704 = vld [vmem:[#allocation2 + $0x8] sm:$0xff]
      %v705 = vld [vmem:[%s640] sm:$0x1]
      %v707 = vlaneseq
      %v708 = vshrl.u32 %v707, 7
      %v709 = vsub.s32 0, %v708
      %v710 = vrot.slane %v705, %v709
      %v712 = vadd.f32 %v703, %v710
      %v713 = vadd.f32 %v704, %v710
      %v714 = vld [vmem:[%s643] sm:$0x1]
      %v715 = vld [vmem:[%s646] sm:$0x1]
      %716 = vadd.xlane.f32.xlu0 %v712
      %v717 = vpop.xlane.xlu0 %716
      %718 = vadd.xlane.f32.xlu0 %v713
      %v719 = vpop.xlane.xlu0 %718
      %v720 = vrcp.pop 128.0
      %v721 = vmul.f32 %v717, %v720
      %v722 = vmul.f32 %v719, %v720
      %v723 = vsub.f32 %v712, %v721
      %v724 = vsub.f32 %v713, %v722
      %v725 = vmul.f32 %v723, %v723
      %v726 = vmul.f32 %v724, %v724
      %727 = vadd.xlane.f32.xlu0 %v725
      %v728 = vpop.xlane.xlu0 %727
      %729 = vadd.xlane.f32.xlu0 %v726
      %v730 = vpop.xlane.xlu0 %729
      %v731 = vmul.f32 %v728, %v720
      %v732 = vmul.f32 %v730, %v720
      %v733 = vadd.f32 %v731, 1e-05
      %v734 = vadd.f32 %v732, 1e-05
      %v735 = vrsqrt.pop %v733
      %v736 = vrsqrt.pop %v734
      %v737 = vmul.f32 %v723, %v735
      %v738 = vmul.f32 %v724, %v736
      %v740 = vlaneseq
      %v741 = vshrl.u32 %v740, 7
      %v742 = vsub.s32 0, %v741
      %v743 = vrot.slane %v714, %v742
      %v745 = vmul.f32 %v737, %v743
      %v746 = vmul.f32 %v738, %v743
      %v748 = vlaneseq
      %v749 = vshrl.u32 %v748, 7
      %v750 = vsub.s32 0, %v749
      %v751 = vrot.slane %v715, %v750
      %v753 = vadd.f32 %v745, %v751
      %v754 = vadd.f32 %v746, %v751
      %v755 = vpack.c.bf16 %v754, %v753
      %v756 = vld [vmem:[%s651] sm:$0xff]
      %v757 = vld [vmem:[%s651 + $0x8] sm:$0xf]
      %v758 = vld [vmem:[%s651 + $0xc] sm:$0xff]
      %v759 = vld [vmem:[%s651 + $0x14] sm:$0xf]
      %v760 = vld [vmem:[%s651 + $0x18] sm:$0xff]
      %v761 = vld [vmem:[%s651 + $0x20] sm:$0xf]
      %v762 = vld [vmem:[%s651 + $0x24] sm:$0xff]
      %v763 = vld [vmem:[%s651 + $0x2c] sm:$0xf]
      %v764 = vld [vmem:[%s651 + $0x30] sm:$0xff]
      %v765 = vld [vmem:[%s651 + $0x38] sm:$0xf]
      %v766 = vld [vmem:[%s651 + $0x3c] sm:$0xff]
      %v767 = vld [vmem:[%s651 + $0x44] sm:$0xf]
      %v768 = vld [vmem:[%s651 + $0x48] sm:$0xff]
      %v769 = vld [vmem:[%s651 + $0x50] sm:$0xf]
      %v770 = vld [vmem:[%s651 + $0x54] sm:$0xff]
      %v771 = vld [vmem:[%s651 + $0x5c] sm:$0xf]
      %v772 = vld [vmem:[%s651 + $0x60] sm:$0xff]
      %v773 = vld [vmem:[%s651 + $0x68] sm:$0xf]
      %v774 = vld [vmem:[%s651 + $0x6c] sm:$0xff]
      %v775 = vld [vmem:[%s651 + $0x74] sm:$0xf]
      %v776 = vld [vmem:[%s651 + $0x78] sm:$0xff]
      %v777 = vld [vmem:[%s651 + $0x80] sm:$0xf]
      %v778 = vld [vmem:[%s651 + $0x84] sm:$0xff]
      %v779 = vld [vmem:[%s651 + $0x8c] sm:$0xf]
      %v780 = vld [vmem:[%s651 + $0x90] sm:$0xff]
      %v781 = vld [vmem:[%s651 + $0x98] sm:$0xf]
      %v782 = vld [vmem:[%s651 + $0x9c] sm:$0xff]
      %v783 = vld [vmem:[%s651 + $0xa4] sm:$0xf]
      %v784 = vld [vmem:[%s651 + $0xa8] sm:$0xff]
      %v785 = vld [vmem:[%s651 + $0xb0] sm:$0xf]
      %v786 = vld [vmem:[%s651 + $0xb4] sm:$0xff]
      %v787 = vld [vmem:[%s651 + $0xbc] sm:$0xf]
      %v788 = vld [vmem:[%s655] sm:$0x7]
      %v790 = vlaneseq
      %v791 = vshrl.u32 %v790, 7
      %v792 = vsub.s32 0, %v791
      %v793 = vrot.slane %v788, %v792
      %v794 = vlaneseq
      %v795 = vshrl.u32 %v794, 7
      %v796 = vsub.s32 1, %v795
      %v797 = vrot.slane %v788, %v796
      %v798 = vlaneseq
      %v799 = vshrl.u32 %v798, 7
      %v800 = vsub.s32 2, %v799
      %v801 = vrot.slane %v788, %v800
      %v837 = vunpack.c.l.b16 %v756
      %v838 = vunpack.c.h.b16 %v756
      %v839 = vunpack.c.l.b16 %v757
      %v840 = vunpack.c.l.b16 %v758
      %v841 = vunpack.c.h.b16 %v758
      %v842 = vunpack.c.l.b16 %v759
      %v843 = vunpack.c.l.b16 %v760
      %v844 = vunpack.c.h.b16 %v760
      %v845 = vunpack.c.l.b16 %v761
      %v846 = vunpack.c.l.b16 %v762
      %v847 = vunpack.c.h.b16 %v762
      %v848 = vunpack.c.l.b16 %v763
      %v849 = vunpack.c.l.b16 %v764
      %v850 = vunpack.c.h.b16 %v764
      %v851 = vunpack.c.l.b16 %v765
      %v852 = vunpack.c.l.b16 %v766
      %v853 = vunpack.c.h.b16 %v766
      %v854 = vunpack.c.l.b16 %v767
      %v855 = vunpack.c.l.b16 %v768
      %v856 = vunpack.c.h.b16 %v768
      %v857 = vunpack.c.l.b16 %v769
      %v858 = vunpack.c.l.b16 %v770
      %v859 = vunpack.c.h.b16 %v770
      %v860 = vunpack.c.l.b16 %v771
      %v861 = vunpack.c.l.b16 %v772
      %v862 = vunpack.c.h.b16 %v772
      %v863 = vunpack.c.l.b16 %v773
      %v864 = vunpack.c.l.b16 %v774
      %v865 = vunpack.c.h.b16 %v774
      %v866 = vunpack.c.l.b16 %v775
      %v867 = vunpack.c.l.b16 %v776
      %v868 = vunpack.c.h.b16 %v776
      %v869 = vunpack.c.l.b16 %v777
      %v870 = vunpack.c.l.b16 %v778
      %v871 = vunpack.c.h.b16 %v778
      %v872 = vunpack.c.l.b16 %v779
      %v873 = vunpack.c.l.b16 %v780
      %v874 = vunpack.c.h.b16 %v780
      %v875 = vunpack.c.l.b16 %v781
      %v876 = vunpack.c.l.b16 %v782
      %v877 = vunpack.c.h.b16 %v782
      %v878 = vunpack.c.l.b16 %v783
      %v879 = vunpack.c.l.b16 %v784
      %v880 = vunpack.c.h.b16 %v784
      %v881 = vunpack.c.l.b16 %v785
      %v882 = vunpack.c.l.b16 %v786
      %v883 = vunpack.c.h.b16 %v786
      %v884 = vunpack.c.l.b16 %v787
      %v885 = vpack.c.b16 %v840, %v837
      %v886 = vpack.c.b16 %v841, %v838
      %v887 = vpack.c.b16 %v842, %v839
      %v888 = vpack.c.b16 %v846, %v843
      %v889 = vpack.c.b16 %v847, %v844
      %v890 = vpack.c.b16 %v848, %v845
      %v891 = vpack.c.b16 %v852, %v849
      %v892 = vpack.c.b16 %v853, %v850
      %v893 = vpack.c.b16 %v854, %v851
      %v894 = vpack.c.b16 %v858, %v855
      %v895 = vpack.c.b16 %v859, %v856
      %v896 = vpack.c.b16 %v860, %v857
      %v897 = vpack.c.b16 %v864, %v861
      %v898 = vpack.c.b16 %v865, %v862
      %v899 = vpack.c.b16 %v866, %v863
      %v900 = vpack.c.b16 %v870, %v867
      %v901 = vpack.c.b16 %v871, %v868
      %v902 = vpack.c.b16 %v872, %v869
      %v903 = vpack.c.b16 %v876, %v873
      %v904 = vpack.c.b16 %v877, %v874
      %v905 = vpack.c.b16 %v878, %v875
      %v906 = vpack.c.b16 %v882, %v879
      %v907 = vpack.c.b16 %v883, %v880
      %v908 = vpack.c.b16 %v884, %v881
      %933 = vmatprep.subr.bf16.mxu0 %v886
      %934 = vmatpush1.bf16.msra.mxu0 %v885
      %935 = vmatprep.subr.bf16.mxu0 %v889
      %936 = vmatpush1.bf16.msra.mxu0 %v888
      %937 = vmatprep.subr.bf16.mxu0 %v892
      %938 = vmatpush1.bf16.msra.mxu0 %v891
      %939 = vmatprep.subr.bf16.mxu0 %v895
      %940 = vmatpush1.bf16.msra.mxu0 %v894
      %941 = vmatprep.subr.bf16.mxu0 %v898
      %942 = vmatpush1.bf16.msra.mxu0 %v897
      %943 = vmatprep.subr.bf16.mxu0 %v901
      %944 = vmatpush1.bf16.msra.mxu0 %v900
      %945 = vmatprep.subr.bf16.mxu0 %v904
      %946 = vmatpush1.bf16.msra.mxu0 %v903
      %947 = vmatprep.subr.bf16.mxu0 %v907
      %948 = vmatpush1.bf16.msra.mxu0 %v906
      %949 = vmatprep.subr.bf16.mxu0 0
      %950 = vmatpush1.bf16.msra.mxu0 0
      %951 = vmatprep.subr.bf16.mxu0 0
      %952 = vmatpush1.bf16.msra.mxu0 0
      %953 = vmatprep.subr.bf16.mxu0 0
      %954 = vmatpush1.bf16.msra.mxu0 0
      %955 = vmatprep.subr.bf16.mxu0 0
      %956 = vmatpush1.bf16.msra.mxu0 0
      %957 = vmatprep.subr.bf16.mxu0 0
      %958 = vmatpush1.bf16.msra.mxu0 0
      %959 = vmatprep.subr.bf16.mxu0 0
      %960 = vmatpush1.bf16.msra.mxu0 0
      %961 = vmatprep.subr.bf16.mxu0 0
      %962 = vmatpush1.bf16.msra.mxu0 0
      %963 = vmatprep.subr.bf16.mxu0 0
      %964 = vmatpush1.bf16.msra.mxu0 0
      %965 = vmatprep.mubr.bf16.mxu0 0
      %966 = vmatmul.mubr.bf16.gmra.mrb[0].mxu0 %v755
      %v967 = vpop.f32.mrb[0].mxu0
      %v968 = vadd.f32 %v793, %v967
      %v969 = vpop.f32.mrb[0].mxu0
      %v970 = vadd.f32 %v797, %v969
      %v971 = vpop.f32.mrb[0].mxu0
      %v972 = vadd.f32 %v793, %v971
      %v973 = vpop.f32.mrb[0].mxu0
      %v974 = vadd.f32 %v797, %v973
      %975 = vdwg.mxu0
      %976 = vmatprep.subr.bf16.mxu0 0
      %977 = vmatpush1.bf16.msra.mxu0 %v887
      %978 = vmatprep.subr.bf16.mxu0 0
      %979 = vmatpush1.bf16.msra.mxu0 %v890
      %980 = vmatprep.subr.bf16.mxu0 0
      %981 = vmatpush1.bf16.msra.mxu0 %v893
      %982 = vmatprep.subr.bf16.mxu0 0
      %983 = vmatpush1.bf16.msra.mxu0 %v896
      %984 = vmatprep.subr.bf16.mxu0 0
      %985 = vmatpush1.bf16.msra.mxu0 %v899
      %986 = vmatprep.subr.bf16.mxu0 0
      %987 = vmatpush1.bf16.msra.mxu0 %v902
      %988 = vmatprep.subr.bf16.mxu0 0
      %989 = vmatpush1.bf16.msra.mxu0 %v905
      %990 = vmatprep.subr.bf16.mxu0 0
      %991 = vmatpush1.bf16.msra.mxu0 %v908
      %992 = vmatprep.subr.bf16.mxu0 0
      %993 = vmatpush1.bf16.msra.mxu0 0
      %994 = vmatprep.subr.bf16.mxu0 0
      %995 = vmatpush1.bf16.msra.mxu0 0
      %996 = vmatprep.subr.bf16.mxu0 0
      %997 = vmatpush1.bf16.msra.mxu0 0
      %998 = vmatprep.subr.bf16.mxu0 0
      %999 = vmatpush1.bf16.msra.mxu0 0
      %1000 = vmatprep.subr.bf16.mxu0 0
      %1001 = vmatpush1.bf16.msra.mxu0 0
      %1002 = vmatprep.subr.bf16.mxu0 0
      %1003 = vmatpush1.bf16.msra.mxu0 0
      %1004 = vmatprep.subr.bf16.mxu0 0
      %1005 = vmatpush1.bf16.msra.mxu0 0
      %1006 = vmatprep.subr.bf16.mxu0 0
      %1007 = vmatpush1.bf16.msra.mxu0 0
      %1008 = vmatprep.mubr.bf16.mxu0 0
      %1009 = vmatmul.mubr.bf16.gmra.mrb[0].mxu0 %v755
      %v1010 = vpop.f32.mrb[0].mxu0
      %v1011 = vadd.f32 %v801, %v1010
      %v1012 = vpop.f32.mrb[0].mxu0
      %v1013 = vpop.f32.mrb[0].mxu0
      %v1014 = vadd.f32 %v801, %v1013
      %v1015 = vpop.f32.mrb[0].mxu0
      %1016 = vdwg.mxu0
      %v1017 = vpack.c.bf16 %v972, %v968
      %v1018 = vpack.c.bf16 %v974, %v970
      %v1019 = vpack.c.bf16 %v1014, %v1011
      %vm1020 = vcmask 261120
      %v1022 = vsel %vm1020, %v1017, 0
      %v1025 = vsel %vm1020, %v1018, 0
      %1027 = vmatprep.subr.bf16.mxu0 0
      %1028 = vmatpush1.bf16.xpose.msra.mxu0 %v1025
      %1029 = vmatprep.subr.bf16.mxu0 0
      %1030 = vmatpush1.bf16.xpose.msra.mxu0 0
      %1031 = vmatprep.subr.bf16.mxu0 0
      %1032 = vmatpush1.bf16.xpose.msra.mxu0 0
      %1033 = vmatprep.subr.bf16.mxu0 0
      %1034 = vmatpush1.bf16.xpose.msra.mxu0 0
      %1035 = vmatprep.subr.bf16.mxu0 0
      %1036 = vmatpush1.bf16.xpose.msra.mxu0 0
      %1037 = vmatprep.subr.bf16.mxu0 0
      %1038 = vmatpush1.bf16.xpose.msra.mxu0 0
      %1039 = vmatprep.subr.bf16.mxu0 0
      %1040 = vmatpush1.bf16.xpose.msra.mxu0 0
      %1041 = vmatprep.subr.bf16.mxu0 0
      %1042 = vmatpush1.bf16.xpose.msra.mxu0 0
      %1043 = vmatprep.subr.bf16.mxu0 0
      %1044 = vmatpush1.bf16.xpose.msra.mxu0 0
      %1045 = vmatprep.subr.bf16.mxu0 0
      %1046 = vmatpush1.bf16.xpose.msra.mxu0 0
      %1047 = vmatprep.subr.bf16.mxu0 0
      %1048 = vmatpush1.bf16.xpose.msra.mxu0 0
      %1049 = vmatprep.subr.bf16.mxu0 0
      %1050 = vmatpush1.bf16.xpose.msra.mxu0 0
      %1051 = vmatprep.subr.bf16.mxu0 0
      %1052 = vmatpush1.bf16.xpose.msra.mxu0 0
      %1053 = vmatprep.subr.bf16.mxu0 0
      %1054 = vmatpush1.bf16.xpose.msra.mxu0 0
      %1055 = vmatprep.subr.bf16.mxu0 0
      %1056 = vmatpush1.bf16.xpose.msra.mxu0 0
      %1057 = vmatprep.subr.bf16.mxu0 0
      %1058 = vmatpush1.bf16.xpose.msra.mxu0 0
      %1059 = vmatprep.mubr.bf16.mxu0 0
      %1060 = vmatmul.mubr.bf16.gmra.mrb[0].mxu0 %v1022
      %v1061 = vpop.f32.mrb[0].mxu0
      %v1062 = vadd.f32 0.0, %v1061
      %v1063 = vpop.f32.mrb[0].mxu0
      %v1064 = vpop.f32.mrb[0].mxu0
      %v1065 = vadd.f32 0.0, %v1064
      %v1066 = vpop.f32.mrb[0].mxu0
      %1067 = vdwg.mxu0
      %vm1068 = vcmask 130048
      %v1069 = vsel %vm1068, %v1062, -inf
      %1070 = vmax.xlane.f32.xlu0 %v1069
      %v1071 = vpop.xlane.xlu0 %1070
      %v1072 = vsel %vm1068, %v1065, -inf
      %1073 = vmax.xlane.f32.xlu0 %v1072
      %v1074 = vpop.xlane.xlu0 %1073
      %v1075 = vsub.f32 %v1062, %v1071
      %v1076 = vsub.f32 %v1065, %v1074
      %v1077 = vmul.f32 %v1075, 1.442695
      %v1078 = vpow.pop %v1077
      %v1079 = vmul.f32 %v1076, 1.442695
      %v1080 = vpow.pop %v1079
      %v1081 = vsel %vm1068, %v1078, 0.0
      %1082 = vadd.xlane.f32.xlu0 %v1081
      %v1083 = vpop.xlane.xlu0 %1082
      %v1084 = vsel %vm1068, %v1080, 0.0
      %1085 = vadd.xlane.f32.xlu0 %v1084
      %v1086 = vpop.xlane.xlu0 %1085
      %v1087 = vrcp.pop %v1083
      %v1088 = vmul.f32 %v1078, %v1087
      %v1089 = vrcp.pop %v1086
      %v1090 = vmul.f32 %v1080, %v1089
      %v1091 = vpack.c.bf16 %v1090, %v1088
      %v1093 = vsel %vm1068, %v1091, 0
      %1095 = vmatprep.subr.bf16.mxu0 0
      %1096 = vmatpush1.bf16.msra.mxu0 %v1019
      %1097 = vmatprep.subr.bf16.mxu0 0
      %1098 = vmatpush1.bf16.msra.mxu0 0
      %1099 = vmatprep.subr.bf16.mxu0 0
      %1100 = vmatpush1.bf16.msra.mxu0 0
      %1101 = vmatprep.subr.bf16.mxu0 0
      %1102 = vmatpush1.bf16.msra.mxu0 0
      %1103 = vmatprep.subr.bf16.mxu0 0
      %1104 = vmatpush1.bf16.msra.mxu0 0
      %1105 = vmatprep.subr.bf16.mxu0 0
      %1106 = vmatpush1.bf16.msra.mxu0 0
      %1107 = vmatprep.subr.bf16.mxu0 0
      %1108 = vmatpush1.bf16.msra.mxu0 0
      %1109 = vmatprep.subr.bf16.mxu0 0
      %1110 = vmatpush1.bf16.msra.mxu0 0
      %1111 = vmatprep.subr.bf16.mxu0 0
      %1112 = vmatpush1.bf16.msra.mxu0 0
      %1113 = vmatprep.subr.bf16.mxu0 0
      %1114 = vmatpush1.bf16.msra.mxu0 0
      %1115 = vmatprep.subr.bf16.mxu0 0
      %1116 = vmatpush1.bf16.msra.mxu0 0
      %1117 = vmatprep.subr.bf16.mxu0 0
      %1118 = vmatpush1.bf16.msra.mxu0 0
      %1119 = vmatprep.subr.bf16.mxu0 0
      %1120 = vmatpush1.bf16.msra.mxu0 0
      %1121 = vmatprep.subr.bf16.mxu0 0
      %1122 = vmatpush1.bf16.msra.mxu0 0
      %1123 = vmatprep.subr.bf16.mxu0 0
      %1124 = vmatpush1.bf16.msra.mxu0 0
      %1125 = vmatprep.subr.bf16.mxu0 0
      %1126 = vmatpush1.bf16.msra.mxu0 0
      %1127 = vmatprep.mubr.bf16.mxu0 0
      %1128 = vmatmul.mubr.bf16.gmra.mrb[0].mxu0 %v1093
      %v1129 = vpop.f32.mrb[0].mxu0
      %v1130 = vadd.f32 0.0, %v1129
      %v1131 = vpop.f32.mrb[0].mxu0
      %v1132 = vpop.f32.mrb[0].mxu0
      %v1133 = vadd.f32 0.0, %v1132
      %v1134 = vpop.f32.mrb[0].mxu0
      %1135 = vdwg.mxu0
      %1137 = vrot.lane.b32.xlu0 %v1017, 96
      %v1138 = vpop.permute.xlu0 %1137
      %1140 = vrot.lane.b32.xlu0 %v1018, 96
      %v1141 = vpop.permute.xlu0 %1140
      %v1143 = vsel %vm1020, %v1138, 0
      %v1146 = vsel %vm1020, %v1141, 0
      %1148 = vmatprep.subr.bf16.mxu0 0
      %1149 = vmatpush1.bf16.xpose.msra.mxu0 %v1146
      %1150 = vmatprep.subr.bf16.mxu0 0
      %1151 = vmatpush1.bf16.xpose.msra.mxu0 0
      %1152 = vmatprep.subr.bf16.mxu0 0
      %1153 = vmatpush1.bf16.xpose.msra.mxu0 0
      %1154 = vmatprep.subr.bf16.mxu0 0
      %1155 = vmatpush1.bf16.xpose.msra.mxu0 0
      %1156 = vmatprep.subr.bf16.mxu0 0
      %1157 = vmatpush1.bf16.xpose.msra.mxu0 0
      %1158 = vmatprep.subr.bf16.mxu0 0
      %1159 = vmatpush1.bf16.xpose.msra.mxu0 0
      %1160 = vmatprep.subr.bf16.mxu0 0
      %1161 = vmatpush1.bf16.xpose.msra.mxu0 0
      %1162 = vmatprep.subr.bf16.mxu0 0
      %1163 = vmatpush1.bf16.xpose.msra.mxu0 0
      %1164 = vmatprep.subr.bf16.mxu0 0
      %1165 = vmatpush1.bf16.xpose.msra.mxu0 0
      %1166 = vmatprep.subr.bf16.mxu0 0
      %1167 = vmatpush1.bf16.xpose.msra.mxu0 0
      %1168 = vmatprep.subr.bf16.mxu0 0
      %1169 = vmatpush1.bf16.xpose.msra.mxu0 0
      %1170 = vmatprep.subr.bf16.mxu0 0
      %1171 = vmatpush1.bf16.xpose.msra.mxu0 0
      %1172 = vmatprep.subr.bf16.mxu0 0
      %1173 = vmatpush1.bf16.xpose.msra.mxu0 0
      %1174 = vmatprep.subr.bf16.mxu0 0
      %1175 = vmatpush1.bf16.xpose.msra.mxu0 0
      %1176 = vmatprep.subr.bf16.mxu0 0
      %1177 = vmatpush1.bf16.xpose.msra.mxu0 0
      %1178 = vmatprep.subr.bf16.mxu0 0
      %1179 = vmatpush1.bf16.xpose.msra.mxu0 0
      %1180 = vmatprep.mubr.bf16.mxu0 0
      %1181 = vmatmul.mubr.bf16.gmra.mrb[0].mxu0 %v1143
      %v1182 = vpop.f32.mrb[0].mxu0
      %v1183 = vadd.f32 0.0, %v1182
      %v1184 = vpop.f32.mrb[0].mxu0
      %v1185 = vpop.f32.mrb[0].mxu0
      %v1186 = vadd.f32 0.0, %v1185
      %v1187 = vpop.f32.mrb[0].mxu0
      %1188 = vdwg.mxu0
      %v1189 = vsel %vm1068, %v1183, -inf
      %1190 = vmax.xlane.f32.xlu0 %v1189
      %v1191 = vpop.xlane.xlu0 %1190
      %v1192 = vsel %vm1068, %v1186, -inf
      %1193 = vmax.xlane.f32.xlu0 %v1192
      %v1194 = vpop.xlane.xlu0 %1193
      %v1195 = vsub.f32 %v1183, %v1191
      %v1196 = vsub.f32 %v1186, %v1194
      %v1197 = vmul.f32 %v1195, 1.442695
      %v1198 = vpow.pop %v1197
      %v1199 = vmul.f32 %v1196, 1.442695
      %v1200 = vpow.pop %v1199
      %v1201 = vsel %vm1068, %v1198, 0.0
      %1202 = vadd.xlane.f32.xlu0 %v1201
      %v1203 = vpop.xlane.xlu0 %1202
      %v1204 = vsel %vm1068, %v1200, 0.0
      %1205 = vadd.xlane.f32.xlu0 %v1204
      %v1206 = vpop.xlane.xlu0 %1205
      %v1207 = vrcp.pop %v1203
      %v1208 = vmul.f32 %v1198, %v1207
      %v1209 = vrcp.pop %v1206
      %v1210 = vmul.f32 %v1200, %v1209
      %v1211 = vpack.c.bf16 %v1210, %v1208
      %1213 = vrot.lane.b32.xlu0 %v1019, 96
      %v1214 = vpop.permute.xlu0 %1213
      %v1217 = vsel %vm1068, %v1211, 0
      %1219 = vmatprep.subr.bf16.mxu0 0
      %1220 = vmatpush1.bf16.msra.mxu0 %v1214
      %1221 = vmatprep.subr.bf16.mxu0 0
      %1222 = vmatpush1.bf16.msra.mxu0 0
      %1223 = vmatprep.subr.bf16.mxu0 0
      %1224 = vmatpush1.bf16.msra.mxu0 0
      %1225 = vmatprep.subr.bf16.mxu0 0
      %1226 = vmatpush1.bf16.msra.mxu0 0
      %1227 = vmatprep.subr.bf16.mxu0 0
      %1228 = vmatpush1.bf16.msra.mxu0 0
      %1229 = vmatprep.subr.bf16.mxu0 0
      %1230 = vmatpush1.bf16.msra.mxu0 0
      %1231 = vmatprep.subr.bf16.mxu0 0
      %1232 = vmatpush1.bf16.msra.mxu0 0
      %1233 = vmatprep.subr.bf16.mxu0 0
      %1234 = vmatpush1.bf16.msra.mxu0 0
      %1235 = vmatprep.subr.bf16.mxu0 0
      %1236 = vmatpush1.bf16.msra.mxu0 0
      %1237 = vmatprep.subr.bf16.mxu0 0
      %1238 = vmatpush1.bf16.msra.mxu0 0
      %1239 = vmatprep.subr.bf16.mxu0 0
      %1240 = vmatpush1.bf16.msra.mxu0 0
      %1241 = vmatprep.subr.bf16.mxu0 0
      %1242 = vmatpush1.bf16.msra.mxu0 0
      %1243 = vmatprep.subr.bf16.mxu0 0
      %1244 = vmatpush1.bf16.msra.mxu0 0
      %1245 = vmatprep.subr.bf16.mxu0 0
      %1246 = vmatpush1.bf16.msra.mxu0 0
      %1247 = vmatprep.subr.bf16.mxu0 0
      %1248 = vmatpush1.bf16.msra.mxu0 0
      %1249 = vmatprep.subr.bf16.mxu0 0
      %1250 = vmatpush1.bf16.msra.mxu0 0
      %1251 = vmatprep.mubr.bf16.mxu0 0
      %1252 = vmatmul.mubr.bf16.gmra.mrb[0].mxu0 %v1217
      %v1253 = vpop.f32.mrb[0].mxu0
      %v1254 = vadd.f32 0.0, %v1253
      %v1255 = vpop.f32.mrb[0].mxu0
      %v1256 = vpop.f32.mrb[0].mxu0
      %v1257 = vadd.f32 0.0, %v1256
      %v1258 = vpop.f32.mrb[0].mxu0
      %1259 = vdwg.mxu0
      %1260 = vrot.lane.b32.xlu0 %v1017, 64
      %v1261 = vpop.permute.xlu0 %1260
      %1262 = vrot.lane.b32.xlu0 %v1018, 64
      %v1263 = vpop.permute.xlu0 %1262
      %v1265 = vsel %vm1020, %v1261, 0
      %v1268 = vsel %vm1020, %v1263, 0
      %1270 = vmatprep.subr.bf16.mxu0 0
      %1271 = vmatpush1.bf16.xpose.msra.mxu0 %v1268
      %1272 = vmatprep.subr.bf16.mxu0 0
      %1273 = vmatpush1.bf16.xpose.msra.mxu0 0
      %1274 = vmatprep.subr.bf16.mxu0 0
      %1275 = vmatpush1.bf16.xpose.msra.mxu0 0
      %1276 = vmatprep.subr.bf16.mxu0 0
      %1277 = vmatpush1.bf16.xpose.msra.mxu0 0
      %1278 = vmatprep.subr.bf16.mxu0 0
      %1279 = vmatpush1.bf16.xpose.msra.mxu0 0
      %1280 = vmatprep.subr.bf16.mxu0 0
      %1281 = vmatpush1.bf16.xpose.msra.mxu0 0
      %1282 = vmatprep.subr.bf16.mxu0 0
      %1283 = vmatpush1.bf16.xpose.msra.mxu0 0
      %1284 = vmatprep.subr.bf16.mxu0 0
      %1285 = vmatpush1.bf16.xpose.msra.mxu0 0
      %1286 = vmatprep.subr.bf16.mxu0 0
      %1287 = vmatpush1.bf16.xpose.msra.mxu0 0
      %1288 = vmatprep.subr.bf16.mxu0 0
      %1289 = vmatpush1.bf16.xpose.msra.mxu0 0
      %1290 = vmatprep.subr.bf16.mxu0 0
      %1291 = vmatpush1.bf16.xpose.msra.mxu0 0
      %1292 = vmatprep.subr.bf16.mxu0 0
      %1293 = vmatpush1.bf16.xpose.msra.mxu0 0
      %1294 = vmatprep.subr.bf16.mxu0 0
      %1295 = vmatpush1.bf16.xpose.msra.mxu0 0
      %1296 = vmatprep.subr.bf16.mxu0 0
      %1297 = vmatpush1.bf16.xpose.msra.mxu0 0
      %1298 = vmatprep.subr.bf16.mxu0 0
      %1299 = vmatpush1.bf16.xpose.msra.mxu0 0
      %1300 = vmatprep.subr.bf16.mxu0 0
      %1301 = vmatpush1.bf16.xpose.msra.mxu0 0
      %1302 = vmatprep.mubr.bf16.mxu0 0
      %1303 = vmatmul.mubr.bf16.gmra.mrb[0].mxu0 %v1265
      %v1304 = vpop.f32.mrb[0].mxu0
      %v1305 = vadd.f32 0.0, %v1304
      %v1306 = vpop.f32.mrb[0].mxu0
      %v1307 = vpop.f32.mrb[0].mxu0
      %v1308 = vadd.f32 0.0, %v1307
      %v1309 = vpop.f32.mrb[0].mxu0
      %1310 = vdwg.mxu0
      %v1311 = vsel %vm1068, %v1305, -inf
      %1312 = vmax.xlane.f32.xlu0 %v1311
      %v1313 = vpop.xlane.xlu0 %1312
      %v1314 = vsel %vm1068, %v1308, -inf
      %1315 = vmax.xlane.f32.xlu0 %v1314
      %v1316 = vpop.xlane.xlu0 %1315
      %v1317 = vsub.f32 %v1305, %v1313
      %v1318 = vsub.f32 %v1308, %v1316
      %v1319 = vmul.f32 %v1317, 1.442695
      %v1320 = vpow.pop %v1319
      %v1321 = vmul.f32 %v1318, 1.442695
      %v1322 = vpow.pop %v1321
      %v1323 = vsel %vm1068, %v1320, 0.0
      %1324 = vadd.xlane.f32.xlu0 %v1323
      %v1325 = vpop.xlane.xlu0 %1324
      %v1326 = vsel %vm1068, %v1322, 0.0
      %1327 = vadd.xlane.f32.xlu0 %v1326
      %v1328 = vpop.xlane.xlu0 %1327
      %v1329 = vrcp.pop %v1325
      %v1330 = vmul.f32 %v1320, %v1329
      %v1331 = vrcp.pop %v1328
      %v1332 = vmul.f32 %v1322, %v1331
      %v1333 = vpack.c.bf16 %v1332, %v1330
      %1334 = vrot.lane.b32.xlu0 %v1019, 64
      %v1335 = vpop.permute.xlu0 %1334
      %v1338 = vsel %vm1068, %v1333, 0
      %1340 = vmatprep.subr.bf16.mxu0 0
      %1341 = vmatpush1.bf16.msra.mxu0 %v1335
      %1342 = vmatprep.subr.bf16.mxu0 0
      %1343 = vmatpush1.bf16.msra.mxu0 0
      %1344 = vmatprep.subr.bf16.mxu0 0
      %1345 = vmatpush1.bf16.msra.mxu0 0
      %1346 = vmatprep.subr.bf16.mxu0 0
      %1347 = vmatpush1.bf16.msra.mxu0 0
      %1348 = vmatprep.subr.bf16.mxu0 0
      %1349 = vmatpush1.bf16.msra.mxu0 0
      %1350 = vmatprep.subr.bf16.mxu0 0
      %1351 = vmatpush1.bf16.msra.mxu0 0
      %1352 = vmatprep.subr.bf16.mxu0 0
      %1353 = vmatpush1.bf16.msra.mxu0 0
      %1354 = vmatprep.subr.bf16.mxu0 0
      %1355 = vmatpush1.bf16.msra.mxu0 0
      %1356 = vmatprep.subr.bf16.mxu0 0
      %1357 = vmatpush1.bf16.msra.mxu0 0
      %1358 = vmatprep.subr.bf16.mxu0 0
      %1359 = vmatpush1.bf16.msra.mxu0 0
      %1360 = vmatprep.subr.bf16.mxu0 0
      %1361 = vmatpush1.bf16.msra.mxu0 0
      %1362 = vmatprep.subr.bf16.mxu0 0
      %1363 = vmatpush1.bf16.msra.mxu0 0
      %1364 = vmatprep.subr.bf16.mxu0 0
      %1365 = vmatpush1.bf16.msra.mxu0 0
      %1366 = vmatprep.subr.bf16.mxu0 0
      %1367 = vmatpush1.bf16.msra.mxu0 0
      %1368 = vmatprep.subr.bf16.mxu0 0
      %1369 = vmatpush1.bf16.msra.mxu0 0
      %1370 = vmatprep.subr.bf16.mxu0 0
      %1371 = vmatpush1.bf16.msra.mxu0 0
      %1372 = vmatprep.mubr.bf16.mxu0 0
      %1373 = vmatmul.mubr.bf16.gmra.mrb[0].mxu0 %v1338
      %v1374 = vpop.f32.mrb[0].mxu0
      %v1375 = vadd.f32 0.0, %v1374
      %v1376 = vpop.f32.mrb[0].mxu0
      %v1377 = vpop.f32.mrb[0].mxu0
      %v1378 = vadd.f32 0.0, %v1377
      %v1379 = vpop.f32.mrb[0].mxu0
      %1380 = vdwg.mxu0
      %1381 = vrot.lane.b32.xlu0 %v1017, 32
      %v1382 = vpop.permute.xlu0 %1381
      %1383 = vrot.lane.b32.xlu0 %v1018, 32
      %v1384 = vpop.permute.xlu0 %1383
      %v1386 = vsel %vm1020, %v1382, 0
      %v1389 = vsel %vm1020, %v1384, 0
      %1391 = vmatprep.subr.bf16.mxu0 0
      %1392 = vmatpush1.bf16.xpose.msra.mxu0 %v1389
      %1393 = vmatprep.subr.bf16.mxu0 0
      %1394 = vmatpush1.bf16.xpose.msra.mxu0 0
      %1395 = vmatprep.subr.bf16.mxu0 0
      %1396 = vmatpush1.bf16.xpose.msra.mxu0 0
      %1397 = vmatprep.subr.bf16.mxu0 0
      %1398 = vmatpush1.bf16.xpose.msra.mxu0 0
      %1399 = vmatprep.subr.bf16.mxu0 0
      %1400 = vmatpush1.bf16.xpose.msra.mxu0 0
      %1401 = vmatprep.subr.bf16.mxu0 0
      %1402 = vmatpush1.bf16.xpose.msra.mxu0 0
      %1403 = vmatprep.subr.bf16.mxu0 0
      %1404 = vmatpush1.bf16.xpose.msra.mxu0 0
      %1405 = vmatprep.subr.bf16.mxu0 0
      %1406 = vmatpush1.bf16.xpose.msra.mxu0 0
      %1407 = vmatprep.subr.bf16.mxu0 0
      %1408 = vmatpush1.bf16.xpose.msra.mxu0 0
      %1409 = vmatprep.subr.bf16.mxu0 0
      %1410 = vmatpush1.bf16.xpose.msra.mxu0 0
      %1411 = vmatprep.subr.bf16.mxu0 0
      %1412 = vmatpush1.bf16.xpose.msra.mxu0 0
      %1413 = vmatprep.subr.bf16.mxu0 0
      %1414 = vmatpush1.bf16.xpose.msra.mxu0 0
      %1415 = vmatprep.subr.bf16.mxu0 0
      %1416 = vmatpush1.bf16.xpose.msra.mxu0 0
      %1417 = vmatprep.subr.bf16.mxu0 0
      %1418 = vmatpush1.bf16.xpose.msra.mxu0 0
      %1419 = vmatprep.subr.bf16.mxu0 0
      %1420 = vmatpush1.bf16.xpose.msra.mxu0 0
      %1421 = vmatprep.subr.bf16.mxu0 0
      %1422 = vmatpush1.bf16.xpose.msra.mxu0 0
      %1423 = vmatprep.mubr.bf16.mxu0 0
      %1424 = vmatmul.mubr.bf16.gmra.mrb[0].mxu0 %v1386
      %v1425 = vpop.f32.mrb[0].mxu0
      %v1426 = vadd.f32 0.0, %v1425
      %v1427 = vpop.f32.mrb[0].mxu0
      %v1428 = vpop.f32.mrb[0].mxu0
      %v1429 = vadd.f32 0.0, %v1428
      %v1430 = vpop.f32.mrb[0].mxu0
      %1431 = vdwg.mxu0
      %v1432 = vsel %vm1068, %v1426, -inf
      %1433 = vmax.xlane.f32.xlu0 %v1432
      %v1434 = vpop.xlane.xlu0 %1433
      %v1435 = vsel %vm1068, %v1429, -inf
      %1436 = vmax.xlane.f32.xlu0 %v1435
      %v1437 = vpop.xlane.xlu0 %1436
      %v1438 = vsub.f32 %v1426, %v1434
      %v1439 = vsub.f32 %v1429, %v1437
      %v1440 = vmul.f32 %v1438, 1.442695
      %v1441 = vpow.pop %v1440
      %v1442 = vmul.f32 %v1439, 1.442695
      %v1443 = vpow.pop %v1442
      %v1444 = vsel %vm1068, %v1441, 0.0
      %1445 = vadd.xlane.f32.xlu0 %v1444
      %v1446 = vpop.xlane.xlu0 %1445
      %v1447 = vsel %vm1068, %v1443, 0.0
      %1448 = vadd.xlane.f32.xlu0 %v1447
      %v1449 = vpop.xlane.xlu0 %1448
      %v1450 = vrcp.pop %v1446
      %v1451 = vmul.f32 %v1441, %v1450
      %v1452 = vrcp.pop %v1449
      %v1453 = vmul.f32 %v1443, %v1452
      %v1454 = vpack.c.bf16 %v1453, %v1451
      %1455 = vrot.lane.b32.xlu0 %v1019, 32
      %v1456 = vpop.permute.xlu0 %1455
      %v1459 = vsel %vm1068, %v1454, 0
      %1461 = vmatprep.subr.bf16.mxu0 0
      %1462 = vmatpush1.bf16.msra.mxu0 %v1456
      %1463 = vmatprep.subr.bf16.mxu0 0
      %1464 = vmatpush1.bf16.msra.mxu0 0
      %1465 = vmatprep.subr.bf16.mxu0 0
      %1466 = vmatpush1.bf16.msra.mxu0 0
      %1467 = vmatprep.subr.bf16.mxu0 0
      %1468 = vmatpush1.bf16.msra.mxu0 0
      %1469 = vmatprep.subr.bf16.mxu0 0
      %1470 = vmatpush1.bf16.msra.mxu0 0
      %1471 = vmatprep.subr.bf16.mxu0 0
      %1472 = vmatpush1.bf16.msra.mxu0 0
      %1473 = vmatprep.subr.bf16.mxu0 0
      %1474 = vmatpush1.bf16.msra.mxu0 0
      %1475 = vmatprep.subr.bf16.mxu0 0
      %1476 = vmatpush1.bf16.msra.mxu0 0
      %1477 = vmatprep.subr.bf16.mxu0 0
      %1478 = vmatpush1.bf16.msra.mxu0 0
      %1479 = vmatprep.subr.bf16.mxu0 0
      %1480 = vmatpush1.bf16.msra.mxu0 0
      %1481 = vmatprep.subr.bf16.mxu0 0
      %1482 = vmatpush1.bf16.msra.mxu0 0
      %1483 = vmatprep.subr.bf16.mxu0 0
      %1484 = vmatpush1.bf16.msra.mxu0 0
      %1485 = vmatprep.subr.bf16.mxu0 0
      %1486 = vmatpush1.bf16.msra.mxu0 0
      %1487 = vmatprep.subr.bf16.mxu0 0
      %1488 = vmatpush1.bf16.msra.mxu0 0
      %1489 = vmatprep.subr.bf16.mxu0 0
      %1490 = vmatpush1.bf16.msra.mxu0 0
      %1491 = vmatprep.subr.bf16.mxu0 0
      %1492 = vmatpush1.bf16.msra.mxu0 0
      %1493 = vmatprep.mubr.bf16.mxu0 0
      %1494 = vmatmul.mubr.bf16.gmra.mrb[0].mxu0 %v1459
      %v1495 = vpop.f32.mrb[0].mxu0
      %v1496 = vadd.f32 0.0, %v1495
      %v1497 = vpop.f32.mrb[0].mxu0
      %v1498 = vpop.f32.mrb[0].mxu0
      %v1499 = vadd.f32 0.0, %v1498
      %v1500 = vpop.f32.mrb[0].mxu0
      %1501 = vdwg.mxu0
      %1504 = vrot.lane.b32.xlu0 %v1254, 32
      %v1505 = vpop.permute.xlu0 %1504
      %1506 = vrot.lane.b32.xlu0 %v1257, 32
      %v1507 = vpop.permute.xlu0 %1506
      %1512 = vrot.lane.b32.xlu0 %v1375, 64
      %v1513 = vpop.permute.xlu0 %1512
      %1514 = vrot.lane.b32.xlu0 %v1378, 64
      %v1515 = vpop.permute.xlu0 %1514
      %1520 = vrot.lane.b32.xlu0 %v1496, 96
      %v1521 = vpop.permute.xlu0 %1520
      %1522 = vrot.lane.b32.xlu0 %v1499, 96
      %v1523 = vpop.permute.xlu0 %1522
      %v1526 = vsel %vm1020, %v1130, %v1505
      %v1527 = vsel %vm1020, %v1133, %v1507
      %vm1528 = vcmask 523264
      %v1529 = vsel %vm1528, %v1526, %v1513
      %v1530 = vsel %vm1528, %v1527, %v1515
      %vm1531 = vcmask 785408
      %v1532 = vsel %vm1531, %v1529, %v1521
      %v1533 = vsel %vm1531, %v1530, %v1523
      %v1534 = vpack.c.bf16 %v1533, %v1532
      %v1535 = vld [vmem:[%s660] sm:$0xf]
      %v1536 = vld [vmem:[%s660 + $0x4] sm:$0xf]
      %v1537 = vld [vmem:[%s660 + $0x8] sm:$0xf]
      %v1538 = vld [vmem:[%s660 + $0xc] sm:$0xf]
      %v1539 = vld [vmem:[%s660 + $0x10] sm:$0xf]
      %v1540 = vld [vmem:[%s660 + $0x14] sm:$0xf]
      %v1541 = vld [vmem:[%s660 + $0x18] sm:$0xf]
      %v1542 = vld [vmem:[%s660 + $0x1c] sm:$0xf]
      %v1543 = vld [vmem:[%s660 + $0x20] sm:$0xf]
      %v1544 = vld [vmem:[%s660 + $0x24] sm:$0xf]
      %v1545 = vld [vmem:[%s660 + $0x28] sm:$0xf]
      %v1546 = vld [vmem:[%s660 + $0x2c] sm:$0xf]
      %v1547 = vld [vmem:[%s660 + $0x30] sm:$0xf]
      %v1548 = vld [vmem:[%s660 + $0x34] sm:$0xf]
      %v1549 = vld [vmem:[%s660 + $0x38] sm:$0xf]
      %v1550 = vld [vmem:[%s660 + $0x3c] sm:$0xf]
      %v1551 = vld [vmem:[%s663] sm:$0x1]
      %v1553 = vlaneseq
      %v1554 = vshrl.u32 %v1553, 7
      %v1555 = vsub.s32 0, %v1554
      %v1556 = vrot.slane %v1551, %v1555
      %v1574 = vunpack.c.l.b16 %v1535
      %v1575 = vunpack.c.l.b16 %v1536
      %v1576 = vunpack.c.l.b16 %v1537
      %v1577 = vunpack.c.l.b16 %v1538
      %v1578 = vunpack.c.l.b16 %v1539
      %v1579 = vunpack.c.l.b16 %v1540
      %v1580 = vunpack.c.l.b16 %v1541
      %v1581 = vunpack.c.l.b16 %v1542
      %v1582 = vunpack.c.l.b16 %v1543
      %v1583 = vunpack.c.l.b16 %v1544
      %v1584 = vunpack.c.l.b16 %v1545
      %v1585 = vunpack.c.l.b16 %v1546
      %v1586 = vunpack.c.l.b16 %v1547
      %v1587 = vunpack.c.l.b16 %v1548
      %v1588 = vunpack.c.l.b16 %v1549
      %v1589 = vunpack.c.l.b16 %v1550
      %v1590 = vpack.c.b16 %v1575, %v1574
      %v1591 = vpack.c.b16 %v1577, %v1576
      %v1592 = vpack.c.b16 %v1579, %v1578
      %v1593 = vpack.c.b16 %v1581, %v1580
      %v1594 = vpack.c.b16 %v1583, %v1582
      %v1595 = vpack.c.b16 %v1585, %v1584
      %v1596 = vpack.c.b16 %v1587, %v1586
      %v1597 = vpack.c.b16 %v1589, %v1588
      %1606 = vmatprep.subr.bf16.mxu0 0
      %1607 = vmatpush1.bf16.msra.mxu0 %v1590
      %1608 = vmatprep.subr.bf16.mxu0 0
      %1609 = vmatpush1.bf16.msra.mxu0 %v1591
      %1610 = vmatprep.subr.bf16.mxu0 0
      %1611 = vmatpush1.bf16.msra.mxu0 %v1592
      %1612 = vmatprep.subr.bf16.mxu0 0
      %1613 = vmatpush1.bf16.msra.mxu0 %v1593
      %1614 = vmatprep.subr.bf16.mxu0 0
      %1615 = vmatpush1.bf16.msra.mxu0 %v1594
      %1616 = vmatprep.subr.bf16.mxu0 0
      %1617 = vmatpush1.bf16.msra.mxu0 %v1595
      %1618 = vmatprep.subr.bf16.mxu0 0
      %1619 = vmatpush1.bf16.msra.mxu0 %v1596
      %1620 = vmatprep.subr.bf16.mxu0 0
      %1621 = vmatpush1.bf16.msra.mxu0 %v1597
      %1622 = vmatprep.subr.bf16.mxu0 0
      %1623 = vmatpush1.bf16.msra.mxu0 0
      %1624 = vmatprep.subr.bf16.mxu0 0
      %1625 = vmatpush1.bf16.msra.mxu0 0
      %1626 = vmatprep.subr.bf16.mxu0 0
      %1627 = vmatpush1.bf16.msra.mxu0 0
      %1628 = vmatprep.subr.bf16.mxu0 0
      %1629 = vmatpush1.bf16.msra.mxu0 0
      %1630 = vmatprep.subr.bf16.mxu0 0
      %1631 = vmatpush1.bf16.msra.mxu0 0
      %1632 = vmatprep.subr.bf16.mxu0 0
      %1633 = vmatpush1.bf16.msra.mxu0 0
      %1634 = vmatprep.subr.bf16.mxu0 0
      %1635 = vmatpush1.bf16.msra.mxu0 0
      %1636 = vmatprep.subr.bf16.mxu0 0
      %1637 = vmatpush1.bf16.msra.mxu0 0
      %1638 = vmatprep.mubr.bf16.mxu0 0
      %1639 = vmatmul.mubr.bf16.gmra.mrb[0].mxu0 %v1534
      %v1640 = vpop.f32.mrb[0].mxu0
      %v1641 = vadd.f32 %v1556, %v1640
      %v1642 = vpop.f32.mrb[0].mxu0
      %v1643 = vpop.f32.mrb[0].mxu0
      %v1644 = vadd.f32 %v1556, %v1643
      %v1645 = vpop.f32.mrb[0].mxu0
      %1646 = vdwg.mxu0
      %v1647 = vadd.f32 %v703, %v1641
      %v1648 = vadd.f32 %v704, %v1644
      %v1649 = vadd.f32 %v1647, %v710
      %v1650 = vadd.f32 %v1648, %v710
      %v1651 = vld [vmem:[%s666] sm:$0x1]
      %v1652 = vld [vmem:[%s669] sm:$0x1]
      %1653 = vadd.xlane.f32.xlu0 %v1649
      %v1654 = vpop.xlane.xlu0 %1653
      %1655 = vadd.xlane.f32.xlu0 %v1650
      %v1656 = vpop.xlane.xlu0 %1655
      %v1657 = vmul.f32 %v1654, %v720
      %v1658 = vmul.f32 %v1656, %v720
      %v1659 = vsub.f32 %v1649, %v1657
      %v1660 = vsub.f32 %v1650, %v1658
      %v1661 = vmul.f32 %v1659, %v1659
      %v1662 = vmul.f32 %v1660, %v1660
      %1663 = vadd.xlane.f32.xlu0 %v1661
      %v1664 = vpop.xlane.xlu0 %1663
      %1665 = vadd.xlane.f32.xlu0 %v1662
      %v1666 = vpop.xlane.xlu0 %1665
      %v1667 = vmul.f32 %v1664, %v720
      %v1668 = vmul.f32 %v1666, %v720
      %v1669 = vadd.f32 %v1667, 1e-05
      %v1670 = vadd.f32 %v1668, 1e-05
      %v1671 = vrsqrt.pop %v1669
      %v1672 = vrsqrt.pop %v1670
      %v1673 = vmul.f32 %v1659, %v1671
      %v1674 = vmul.f32 %v1660, %v1672
      %v1676 = vlaneseq
      %v1677 = vshrl.u32 %v1676, 7
      %v1678 = vsub.s32 0, %v1677
      %v1679 = vrot.slane %v1651, %v1678
      %v1681 = vmul.f32 %v1673, %v1679
      %v1682 = vmul.f32 %v1674, %v1679
      %v1684 = vlaneseq
      %v1685 = vshrl.u32 %v1684, 7
      %v1686 = vsub.s32 0, %v1685
      %v1687 = vrot.slane %v1652, %v1686
      %v1689 = vadd.f32 %v1681, %v1687
      %v1690 = vadd.f32 %v1682, %v1687
      %v1691 = vpack.c.bf16 %v1690, %v1689
      %v1692 = vld [vmem:[%s674] sm:$0xff]
      %v1693 = vld [vmem:[%s674 + $0x8] sm:$0xff]
      %v1694 = vld [vmem:[%s674 + $0x10] sm:$0xff]
      %v1695 = vld [vmem:[%s674 + $0x18] sm:$0xff]
      %v1696 = vld [vmem:[%s674 + $0x20] sm:$0xff]
      %v1697 = vld [vmem:[%s674 + $0x28] sm:$0xff]
      %v1698 = vld [vmem:[%s674 + $0x30] sm:$0xff]
      %v1699 = vld [vmem:[%s674 + $0x38] sm:$0xff]
      %v1700 = vld [vmem:[%s674 + $0x40] sm:$0xff]
      %v1701 = vld [vmem:[%s674 + $0x48] sm:$0xff]
      %v1702 = vld [vmem:[%s674 + $0x50] sm:$0xff]
      %v1703 = vld [vmem:[%s674 + $0x58] sm:$0xff]
      %v1704 = vld [vmem:[%s674 + $0x60] sm:$0xff]
      %v1705 = vld [vmem:[%s674 + $0x68] sm:$0xff]
      %v1706 = vld [vmem:[%s674 + $0x70] sm:$0xff]
      %v1707 = vld [vmem:[%s674 + $0x78] sm:$0xff]
      %v1708 = vld [vmem:[%s674 + $0x80] sm:$0xff]
      %v1709 = vld [vmem:[%s674 + $0x88] sm:$0xff]
      %v1710 = vld [vmem:[%s674 + $0x90] sm:$0xff]
      %v1711 = vld [vmem:[%s674 + $0x98] sm:$0xff]
      %v1712 = vld [vmem:[%s674 + $0xa0] sm:$0xff]
      %v1713 = vld [vmem:[%s674 + $0xa8] sm:$0xff]
      %v1714 = vld [vmem:[%s674 + $0xb0] sm:$0xff]
      %v1715 = vld [vmem:[%s674 + $0xb8] sm:$0xff]
      %v1716 = vld [vmem:[%s674 + $0xc0] sm:$0xff]
      %v1717 = vld [vmem:[%s674 + $0xc8] sm:$0xff]
      %v1718 = vld [vmem:[%s674 + $0xd0] sm:$0xff]
      %v1719 = vld [vmem:[%s674 + $0xd8] sm:$0xff]
      %v1720 = vld [vmem:[%s674 + $0xe0] sm:$0xff]
      %v1721 = vld [vmem:[%s674 + $0xe8] sm:$0xff]
      %v1722 = vld [vmem:[%s674 + $0xf0] sm:$0xff]
      %v1723 = vld [vmem:[%s674 + $0xf8] sm:$0xff]
      %v1724 = vld [vmem:[%s678] sm:$0xf]
      %v1726 = vlaneseq
      %v1727 = vshrl.u32 %v1726, 7
      %v1728 = vsub.s32 0, %v1727
      %v1729 = vrot.slane %v1724, %v1728
      %v1730 = vlaneseq
      %v1731 = vshrl.u32 %v1730, 7
      %v1732 = vsub.s32 1, %v1731
      %v1733 = vrot.slane %v1724, %v1732
      %v1734 = vlaneseq
      %v1735 = vshrl.u32 %v1734, 7
      %v1736 = vsub.s32 2, %v1735
      %v1737 = vrot.slane %v1724, %v1736
      %v1738 = vlaneseq
      %v1739 = vshrl.u32 %v1738, 7
      %v1740 = vsub.s32 3, %v1739
      %v1741 = vrot.slane %v1724, %v1740
      %v1778 = vunpack.c.l.b16 %v1692
      %v1779 = vunpack.c.h.b16 %v1692
      %v1780 = vunpack.c.l.b16 %v1693
      %v1781 = vunpack.c.h.b16 %v1693
      %v1782 = vunpack.c.l.b16 %v1694
      %v1783 = vunpack.c.h.b16 %v1694
      %v1784 = vunpack.c.l.b16 %v1695
      %v1785 = vunpack.c.h.b16 %v1695
      %v1786 = vunpack.c.l.b16 %v1696
      %v1787 = vunpack.c.h.b16 %v1696
      %v1788 = vunpack.c.l.b16 %v1697
      %v1789 = vunpack.c.h.b16 %v1697
      %v1790 = vunpack.c.l.b16 %v1698
      %v1791 = vunpack.c.h.b16 %v1698
      %v1792 = vunpack.c.l.b16 %v1699
      %v1793 = vunpack.c.h.b16 %v1699
      %v1794 = vunpack.c.l.b16 %v1700
      %v1795 = vunpack.c.h.b16 %v1700
      %v1796 = vunpack.c.l.b16 %v1701
      %v1797 = vunpack.c.h.b16 %v1701
      %v1798 = vunpack.c.l.b16 %v1702
      %v1799 = vunpack.c.h.b16 %v1702
      %v1800 = vunpack.c.l.b16 %v1703
      %v1801 = vunpack.c.h.b16 %v1703
      %v1802 = vunpack.c.l.b16 %v1704
      %v1803 = vunpack.c.h.b16 %v1704
      %v1804 = vunpack.c.l.b16 %v1705
      %v1805 = vunpack.c.h.b16 %v1705
      %v1806 = vunpack.c.l.b16 %v1706
      %v1807 = vunpack.c.h.b16 %v1706
      %v1808 = vunpack.c.l.b16 %v1707
      %v1809 = vunpack.c.h.b16 %v1707
      %v1810 = vunpack.c.l.b16 %v1708
      %v1811 = vunpack.c.h.b16 %v1708
      %v1812 = vunpack.c.l.b16 %v1709
      %v1813 = vunpack.c.h.b16 %v1709
      %v1814 = vunpack.c.l.b16 %v1710
      %v1815 = vunpack.c.h.b16 %v1710
      %v1816 = vunpack.c.l.b16 %v1711
      %v1817 = vunpack.c.h.b16 %v1711
      %v1818 = vunpack.c.l.b16 %v1712
      %v1819 = vunpack.c.h.b16 %v1712
      %v1820 = vunpack.c.l.b16 %v1713
      %v1821 = vunpack.c.h.b16 %v1713
      %v1822 = vunpack.c.l.b16 %v1714
      %v1823 = vunpack.c.h.b16 %v1714
      %v1824 = vunpack.c.l.b16 %v1715
      %v1825 = vunpack.c.h.b16 %v1715
      %v1826 = vunpack.c.l.b16 %v1716
      %v1827 = vunpack.c.h.b16 %v1716
      %v1828 = vunpack.c.l.b16 %v1717
      %v1829 = vunpack.c.h.b16 %v1717
      %v1830 = vunpack.c.l.b16 %v1718
      %v1831 = vunpack.c.h.b16 %v1718
      %v1832 = vunpack.c.l.b16 %v1719
      %v1833 = vunpack.c.h.b16 %v1719
      %v1834 = vunpack.c.l.b16 %v1720
      %v1835 = vunpack.c.h.b16 %v1720
      %v1836 = vunpack.c.l.b16 %v1721
      %v1837 = vunpack.c.h.b16 %v1721
      %v1838 = vunpack.c.l.b16 %v1722
      %v1839 = vunpack.c.h.b16 %v1722
      %v1840 = vunpack.c.l.b16 %v1723
      %v1841 = vunpack.c.h.b16 %v1723
      %v1842 = vpack.c.b16 %v1782, %v1778
      %v1843 = vpack.c.b16 %v1783, %v1779
      %v1844 = vpack.c.b16 %v1784, %v1780
      %v1845 = vpack.c.b16 %v1785, %v1781
      %v1846 = vpack.c.b16 %v1790, %v1786
      %v1847 = vpack.c.b16 %v1791, %v1787
      %v1848 = vpack.c.b16 %v1792, %v1788
      %v1849 = vpack.c.b16 %v1793, %v1789
      %v1850 = vpack.c.b16 %v1798, %v1794
      %v1851 = vpack.c.b16 %v1799, %v1795
      %v1852 = vpack.c.b16 %v1800, %v1796
      %v1853 = vpack.c.b16 %v1801, %v1797
      %v1854 = vpack.c.b16 %v1806, %v1802
      %v1855 = vpack.c.b16 %v1807, %v1803
      %v1856 = vpack.c.b16 %v1808, %v1804
      %v1857 = vpack.c.b16 %v1809, %v1805
      %v1858 = vpack.c.b16 %v1814, %v1810
      %v1859 = vpack.c.b16 %v1815, %v1811
      %v1860 = vpack.c.b16 %v1816, %v1812
      %v1861 = vpack.c.b16 %v1817, %v1813
      %v1862 = vpack.c.b16 %v1822, %v1818
      %v1863 = vpack.c.b16 %v1823, %v1819
      %v1864 = vpack.c.b16 %v1824, %v1820
      %v1865 = vpack.c.b16 %v1825, %v1821
      %v1866 = vpack.c.b16 %v1830, %v1826
      %v1867 = vpack.c.b16 %v1831, %v1827
      %v1868 = vpack.c.b16 %v1832, %v1828
      %v1869 = vpack.c.b16 %v1833, %v1829
      %v1870 = vpack.c.b16 %v1838, %v1834
      %v1871 = vpack.c.b16 %v1839, %v1835
      %v1872 = vpack.c.b16 %v1840, %v1836
      %v1873 = vpack.c.b16 %v1841, %v1837
      %1906 = vmatprep.subr.bf16.mxu0 %v1843
      %1907 = vmatpush1.bf16.msra.mxu0 %v1842
      %1908 = vmatprep.subr.bf16.mxu0 %v1847
      %1909 = vmatpush1.bf16.msra.mxu0 %v1846
      %1910 = vmatprep.subr.bf16.mxu0 %v1851
      %1911 = vmatpush1.bf16.msra.mxu0 %v1850
      %1912 = vmatprep.subr.bf16.mxu0 %v1855
      %1913 = vmatpush1.bf16.msra.mxu0 %v1854
      %1914 = vmatprep.subr.bf16.mxu0 %v1859
      %1915 = vmatpush1.bf16.msra.mxu0 %v1858
      %1916 = vmatprep.subr.bf16.mxu0 %v1863
      %1917 = vmatpush1.bf16.msra.mxu0 %v1862
      %1918 = vmatprep.subr.bf16.mxu0 %v1867
      %1919 = vmatpush1.bf16.msra.mxu0 %v1866
      %1920 = vmatprep.subr.bf16.mxu0 %v1871
      %1921 = vmatpush1.bf16.msra.mxu0 %v1870
      %1922 = vmatprep.subr.bf16.mxu0 0
      %1923 = vmatpush1.bf16.msra.mxu0 0
      %1924 = vmatprep.subr.bf16.mxu0 0
      %1925 = vmatpush1.bf16.msra.mxu0 0
      %1926 = vmatprep.subr.bf16.mxu0 0
      %1927 = vmatpush1.bf16.msra.mxu0 0
      %1928 = vmatprep.subr.bf16.mxu0 0
      %1929 = vmatpush1.bf16.msra.mxu0 0
      %1930 = vmatprep.subr.bf16.mxu0 0
      %1931 = vmatpush1.bf16.msra.mxu0 0
      %1932 = vmatprep.subr.bf16.mxu0 0
      %1933 = vmatpush1.bf16.msra.mxu0 0
      %1934 = vmatprep.subr.bf16.mxu0 0
      %1935 = vmatpush1.bf16.msra.mxu0 0
      %1936 = vmatprep.subr.bf16.mxu0 0
      %1937 = vmatpush1.bf16.msra.mxu0 0
      %1938 = vmatprep.mubr.bf16.mxu0 0
      %1939 = vmatmul.mubr.bf16.gmra.mrb[0].mxu0 %v1691
      %v1940 = vpop.f32.mrb[0].mxu0
      %v1941 = vadd.f32 %v1729, %v1940
      %v1942 = vpop.f32.mrb[0].mxu0
      %v1943 = vadd.f32 %v1733, %v1942
      %v1944 = vpop.f32.mrb[0].mxu0
      %v1945 = vadd.f32 %v1729, %v1944
      %v1946 = vpop.f32.mrb[0].mxu0
      %v1947 = vadd.f32 %v1733, %v1946
      %1948 = vdwg.mxu0
      %1949 = vmatprep.subr.bf16.mxu0 %v1845
      %1950 = vmatpush1.bf16.msra.mxu0 %v1844
      %1951 = vmatprep.subr.bf16.mxu0 %v1849
      %1952 = vmatpush1.bf16.msra.mxu0 %v1848
      %1953 = vmatprep.subr.bf16.mxu0 %v1853
      %1954 = vmatpush1.bf16.msra.mxu0 %v1852
      %1955 = vmatprep.subr.bf16.mxu0 %v1857
      %1956 = vmatpush1.bf16.msra.mxu0 %v1856
      %1957 = vmatprep.subr.bf16.mxu0 %v1861
      %1958 = vmatpush1.bf16.msra.mxu0 %v1860
      %1959 = vmatprep.subr.bf16.mxu0 %v1865
      %1960 = vmatpush1.bf16.msra.mxu0 %v1864
      %1961 = vmatprep.subr.bf16.mxu0 %v1869
      %1962 = vmatpush1.bf16.msra.mxu0 %v1868
      %1963 = vmatprep.subr.bf16.mxu0 %v1873
      %1964 = vmatpush1.bf16.msra.mxu0 %v1872
      %1965 = vmatprep.subr.bf16.mxu0 0
      %1966 = vmatpush1.bf16.msra.mxu0 0
      %1967 = vmatprep.subr.bf16.mxu0 0
      %1968 = vmatpush1.bf16.msra.mxu0 0
      %1969 = vmatprep.subr.bf16.mxu0 0
      %1970 = vmatpush1.bf16.msra.mxu0 0
      %1971 = vmatprep.subr.bf16.mxu0 0
      %1972 = vmatpush1.bf16.msra.mxu0 0
      %1973 = vmatprep.subr.bf16.mxu0 0
      %1974 = vmatpush1.bf16.msra.mxu0 0
      %1975 = vmatprep.subr.bf16.mxu0 0
      %1976 = vmatpush1.bf16.msra.mxu0 0
      %1977 = vmatprep.subr.bf16.mxu0 0
      %1978 = vmatpush1.bf16.msra.mxu0 0
      %1979 = vmatprep.subr.bf16.mxu0 0
      %1980 = vmatpush1.bf16.msra.mxu0 0
      %1981 = vmatprep.mubr.bf16.mxu0 0
      %1982 = vmatmul.mubr.bf16.gmra.mrb[0].mxu0 %v1691
      %v1983 = vpop.f32.mrb[0].mxu0
      %v1984 = vadd.f32 %v1737, %v1983
      %v1985 = vpop.f32.mrb[0].mxu0
      %v1986 = vadd.f32 %v1741, %v1985
      %v1987 = vpop.f32.mrb[0].mxu0
      %v1988 = vadd.f32 %v1737, %v1987
      %v1989 = vpop.f32.mrb[0].mxu0
      %v1990 = vadd.f32 %v1741, %v1989
      %1991 = vdwg.mxu0
      %v1992 = vmul.f32 %v1941, %v1941
      %v1993 = vmul.f32 %v1943, %v1943
      %v1994 = vmul.f32 %v1984, %v1984
      %v1995 = vmul.f32 %v1986, %v1986
      %v1996 = vmul.f32 %v1945, %v1945
      %v1997 = vmul.f32 %v1947, %v1947
      %v1998 = vmul.f32 %v1988, %v1988
      %v1999 = vmul.f32 %v1990, %v1990
      %v2000 = vmul.f32 %v1941, %v1992
      %v2001 = vmul.f32 %v1943, %v1993
      %v2002 = vmul.f32 %v1984, %v1994
      %v2003 = vmul.f32 %v1986, %v1995
      %v2004 = vmul.f32 %v1945, %v1996
      %v2005 = vmul.f32 %v1947, %v1997
      %v2006 = vmul.f32 %v1988, %v1998
      %v2007 = vmul.f32 %v1990, %v1999
      %v2008 = vmul.f32 %v2000, 0.044715
      %v2009 = vmul.f32 %v2001, 0.044715
      %v2010 = vmul.f32 %v2002, 0.044715
      %v2011 = vmul.f32 %v2003, 0.044715
      %v2012 = vmul.f32 %v2004, 0.044715
      %v2013 = vmul.f32 %v2005, 0.044715
      %v2014 = vmul.f32 %v2006, 0.044715
      %v2015 = vmul.f32 %v2007, 0.044715
      %v2016 = vadd.f32 %v1941, %v2008
      %v2017 = vadd.f32 %v1943, %v2009
      %v2018 = vadd.f32 %v1984, %v2010
      %v2019 = vadd.f32 %v1986, %v2011
      %v2020 = vadd.f32 %v1945, %v2012
      %v2021 = vadd.f32 %v1947, %v2013
      %v2022 = vadd.f32 %v1988, %v2014
      %v2023 = vadd.f32 %v1990, %v2015
      %v2024 = vmul.f32 %v2016, 0.7978846
      %v2025 = vmul.f32 %v2017, 0.7978846
      %v2026 = vmul.f32 %v2018, 0.7978846
      %v2027 = vmul.f32 %v2019, 0.7978846
      %v2028 = vmul.f32 %v2020, 0.7978846
      %v2029 = vmul.f32 %v2021, 0.7978846
      %v2030 = vmul.f32 %v2022, 0.7978846
      %v2031 = vmul.f32 %v2023, 0.7978846
      %v2032 = vtanh.pop %v2024
      %v2033 = vtanh.pop %v2025
      %v2034 = vtanh.pop %v2026
      %v2035 = vtanh.pop %v2027
      %v2036 = vtanh.pop %v2028
      %v2037 = vtanh.pop %v2029
      %v2038 = vtanh.pop %v2030
      %v2039 = vtanh.pop %v2031
      %v2040 = vadd.f32 %v2032, 1.0
      %v2041 = vadd.f32 %v2033, 1.0
      %v2042 = vadd.f32 %v2034, 1.0
      %v2043 = vadd.f32 %v2035, 1.0
      %v2044 = vadd.f32 %v2036, 1.0
      %v2045 = vadd.f32 %v2037, 1.0
      %v2046 = vadd.f32 %v2038, 1.0
      %v2047 = vadd.f32 %v2039, 1.0
      %v2048 = vmul.f32 %v2040, 0.5
      %v2049 = vmul.f32 %v2041, 0.5
      %v2050 = vmul.f32 %v2042, 0.5
      %v2051 = vmul.f32 %v2043, 0.5
      %v2052 = vmul.f32 %v2044, 0.5
      %v2053 = vmul.f32 %v2045, 0.5
      %v2054 = vmul.f32 %v2046, 0.5
      %v2055 = vmul.f32 %v2047, 0.5
      %v2056 = vmul.f32 %v1941, %v2048
      %v2057 = vmul.f32 %v1943, %v2049
      %v2058 = vmul.f32 %v1984, %v2050
      %v2059 = vmul.f32 %v1986, %v2051
      %v2060 = vmul.f32 %v1945, %v2052
      %v2061 = vmul.f32 %v1947, %v2053
      %v2062 = vmul.f32 %v1988, %v2054
      %v2063 = vmul.f32 %v1990, %v2055
      %v2064 = vpack.c.bf16 %v2060, %v2056
      %v2065 = vpack.c.bf16 %v2061, %v2057
      %v2066 = vpack.c.bf16 %v2062, %v2058
      %v2067 = vpack.c.bf16 %v2063, %v2059
      %v2068 = vld [vmem:[%s683] sm:$0xf]
      %v2069 = vld [vmem:[%s683 + $0x4] sm:$0xf]
      %v2070 = vld [vmem:[%s683 + $0x8] sm:$0xf]
      %v2071 = vld [vmem:[%s683 + $0xc] sm:$0xf]
      %v2072 = vld [vmem:[%s683 + $0x10] sm:$0xf]
      %v2073 = vld [vmem:[%s683 + $0x14] sm:$0xf]
      %v2074 = vld [vmem:[%s683 + $0x18] sm:$0xf]
      %v2075 = vld [vmem:[%s683 + $0x1c] sm:$0xf]
      %v2076 = vld [vmem:[%s683 + $0x20] sm:$0xf]
      %v2077 = vld [vmem:[%s683 + $0x24] sm:$0xf]
      %v2078 = vld [vmem:[%s683 + $0x28] sm:$0xf]
      %v2079 = vld [vmem:[%s683 + $0x2c] sm:$0xf]
      %v2080 = vld [vmem:[%s683 + $0x30] sm:$0xf]
      %v2081 = vld [vmem:[%s683 + $0x34] sm:$0xf]
      %v2082 = vld [vmem:[%s683 + $0x38] sm:$0xf]
      %v2083 = vld [vmem:[%s683 + $0x3c] sm:$0xf]
      %v2084 = vld [vmem:[%s683 + $0x40] sm:$0xf]
      %v2085 = vld [vmem:[%s683 + $0x44] sm:$0xf]
      %v2086 = vld [vmem:[%s683 + $0x48] sm:$0xf]
      %v2087 = vld [vmem:[%s683 + $0x4c] sm:$0xf]
      %v2088 = vld [vmem:[%s683 + $0x50] sm:$0xf]
      %v2089 = vld [vmem:[%s683 + $0x54] sm:$0xf]
      %v2090 = vld [vmem:[%s683 + $0x58] sm:$0xf]
      %v2091 = vld [vmem:[%s683 + $0x5c] sm:$0xf]
      %v2092 = vld [vmem:[%s683 + $0x60] sm:$0xf]
      %v2093 = vld [vmem:[%s683 + $0x64] sm:$0xf]
      %v2094 = vld [vmem:[%s683 + $0x68] sm:$0xf]
      %v2095 = vld [vmem:[%s683 + $0x6c] sm:$0xf]
      %v2096 = vld [vmem:[%s683 + $0x70] sm:$0xf]
      %v2097 = vld [vmem:[%s683 + $0x74] sm:$0xf]
      %v2098 = vld [vmem:[%s683 + $0x78] sm:$0xf]
      %v2099 = vld [vmem:[%s683 + $0x7c] sm:$0xf]
      %v2100 = vld [vmem:[%s683 + $0x80] sm:$0xf]
      %v2101 = vld [vmem:[%s683 + $0x84] sm:$0xf]
      %v2102 = vld [vmem:[%s683 + $0x88] sm:$0xf]
      %v2103 = vld [vmem:[%s683 + $0x8c] sm:$0xf]
      %v2104 = vld [vmem:[%s683 + $0x90] sm:$0xf]
      %v2105 = vld [vmem:[%s683 + $0x94] sm:$0xf]
      %v2106 = vld [vmem:[%s683 + $0x98] sm:$0xf]
      %v2107 = vld [vmem:[%s683 + $0x9c] sm:$0xf]
      %v2108 = vld [vmem:[%s683 + $0xa0] sm:$0xf]
      %v2109 = vld [vmem:[%s683 + $0xa4] sm:$0xf]
      %v2110 = vld [vmem:[%s683 + $0xa8] sm:$0xf]
      %v2111 = vld [vmem:[%s683 + $0xac] sm:$0xf]
      %v2112 = vld [vmem:[%s683 + $0xb0] sm:$0xf]
      %v2113 = vld [vmem:[%s683 + $0xb4] sm:$0xf]
      %v2114 = vld [vmem:[%s683 + $0xb8] sm:$0xf]
      %v2115 = vld [vmem:[%s683 + $0xbc] sm:$0xf]
      %v2116 = vld [vmem:[%s683 + $0xc0] sm:$0xf]
      %v2117 = vld [vmem:[%s683 + $0xc4] sm:$0xf]
      %v2118 = vld [vmem:[%s683 + $0xc8] sm:$0xf]
      %v2119 = vld [vmem:[%s683 + $0xcc] sm:$0xf]
      %v2120 = vld [vmem:[%s683 + $0xd0] sm:$0xf]
      %v2121 = vld [vmem:[%s683 + $0xd4] sm:$0xf]
      %v2122 = vld [vmem:[%s683 + $0xd8] sm:$0xf]
      %v2123 = vld [vmem:[%s683 + $0xdc] sm:$0xf]
      %v2124 = vld [vmem:[%s683 + $0xe0] sm:$0xf]
      %v2125 = vld [vmem:[%s683 + $0xe4] sm:$0xf]
      %v2126 = vld [vmem:[%s683 + $0xe8] sm:$0xf]
      %v2127 = vld [vmem:[%s683 + $0xec] sm:$0xf]
      %v2128 = vld [vmem:[%s683 + $0xf0] sm:$0xf]
      %v2129 = vld [vmem:[%s683 + $0xf4] sm:$0xf]
      %v2130 = vld [vmem:[%s683 + $0xf8] sm:$0xf]
      %v2131 = vld [vmem:[%s683 + $0xfc] sm:$0xf]
      %v2132 = vld [vmem:[%s686] sm:$0x1]
      %v2134 = vlaneseq
      %v2135 = vshrl.u32 %v2134, 7
      %v2136 = vsub.s32 0, %v2135
      %v2137 = vrot.slane %v2132, %v2136
      %v2203 = vunpack.c.l.b16 %v2068
      %v2204 = vunpack.c.l.b16 %v2069
      %v2205 = vunpack.c.l.b16 %v2070
      %v2206 = vunpack.c.l.b16 %v2071
      %v2207 = vunpack.c.l.b16 %v2072
      %v2208 = vunpack.c.l.b16 %v2073
      %v2209 = vunpack.c.l.b16 %v2074
      %v2210 = vunpack.c.l.b16 %v2075
      %v2211 = vunpack.c.l.b16 %v2076
      %v2212 = vunpack.c.l.b16 %v2077
      %v2213 = vunpack.c.l.b16 %v2078
      %v2214 = vunpack.c.l.b16 %v2079
      %v2215 = vunpack.c.l.b16 %v2080
      %v2216 = vunpack.c.l.b16 %v2081
      %v2217 = vunpack.c.l.b16 %v2082
      %v2218 = vunpack.c.l.b16 %v2083
      %v2219 = vunpack.c.l.b16 %v2084
      %v2220 = vunpack.c.l.b16 %v2085
      %v2221 = vunpack.c.l.b16 %v2086
      %v2222 = vunpack.c.l.b16 %v2087
      %v2223 = vunpack.c.l.b16 %v2088
      %v2224 = vunpack.c.l.b16 %v2089
      %v2225 = vunpack.c.l.b16 %v2090
      %v2226 = vunpack.c.l.b16 %v2091
      %v2227 = vunpack.c.l.b16 %v2092
      %v2228 = vunpack.c.l.b16 %v2093
      %v2229 = vunpack.c.l.b16 %v2094
      %v2230 = vunpack.c.l.b16 %v2095
      %v2231 = vunpack.c.l.b16 %v2096
      %v2232 = vunpack.c.l.b16 %v2097
      %v2233 = vunpack.c.l.b16 %v2098
      %v2234 = vunpack.c.l.b16 %v2099
      %v2235 = vunpack.c.l.b16 %v2100
      %v2236 = vunpack.c.l.b16 %v2101
      %v2237 = vunpack.c.l.b16 %v2102
      %v2238 = vunpack.c.l.b16 %v2103
      %v2239 = vunpack.c.l.b16 %v2104
      %v2240 = vunpack.c.l.b16 %v2105
      %v2241 = vunpack.c.l.b16 %v2106
      %v2242 = vunpack.c.l.b16 %v2107
      %v2243 = vunpack.c.l.b16 %v2108
      %v2244 = vunpack.c.l.b16 %v2109
      %v2245 = vunpack.c.l.b16 %v2110
      %v2246 = vunpack.c.l.b16 %v2111
      %v2247 = vunpack.c.l.b16 %v2112
      %v2248 = vunpack.c.l.b16 %v2113
      %v2249 = vunpack.c.l.b16 %v2114
      %v2250 = vunpack.c.l.b16 %v2115
      %v2251 = vunpack.c.l.b16 %v2116
      %v2252 = vunpack.c.l.b16 %v2117
      %v2253 = vunpack.c.l.b16 %v2118
      %v2254 = vunpack.c.l.b16 %v2119
      %v2255 = vunpack.c.l.b16 %v2120
      %v2256 = vunpack.c.l.b16 %v2121
      %v2257 = vunpack.c.l.b16 %v2122
      %v2258 = vunpack.c.l.b16 %v2123
      %v2259 = vunpack.c.l.b16 %v2124
      %v2260 = vunpack.c.l.b16 %v2125
      %v2261 = vunpack.c.l.b16 %v2126
      %v2262 = vunpack.c.l.b16 %v2127
      %v2263 = vunpack.c.l.b16 %v2128
      %v2264 = vunpack.c.l.b16 %v2129
      %v2265 = vunpack.c.l.b16 %v2130
      %v2266 = vunpack.c.l.b16 %v2131
      %v2267 = vpack.c.b16 %v2204, %v2203
      %v2268 = vpack.c.b16 %v2206, %v2205
      %v2269 = vpack.c.b16 %v2208, %v2207
      %v2270 = vpack.c.b16 %v2210, %v2209
      %v2271 = vpack.c.b16 %v2212, %v2211
      %v2272 = vpack.c.b16 %v2214, %v2213
      %v2273 = vpack.c.b16 %v2216, %v2215
      %v2274 = vpack.c.b16 %v2218, %v2217
      %v2275 = vpack.c.b16 %v2220, %v2219
      %v2276 = vpack.c.b16 %v2222, %v2221
      %v2277 = vpack.c.b16 %v2224, %v2223
      %v2278 = vpack.c.b16 %v2226, %v2225
      %v2279 = vpack.c.b16 %v2228, %v2227
      %v2280 = vpack.c.b16 %v2230, %v2229
      %v2281 = vpack.c.b16 %v2232, %v2231
      %v2282 = vpack.c.b16 %v2234, %v2233
      %v2283 = vpack.c.b16 %v2236, %v2235
      %v2284 = vpack.c.b16 %v2238, %v2237
      %v2285 = vpack.c.b16 %v2240, %v2239
      %v2286 = vpack.c.b16 %v2242, %v2241
      %v2287 = vpack.c.b16 %v2244, %v2243
      %v2288 = vpack.c.b16 %v2246, %v2245
      %v2289 = vpack.c.b16 %v2248, %v2247
      %v2290 = vpack.c.b16 %v2250, %v2249
      %v2291 = vpack.c.b16 %v2252, %v2251
      %v2292 = vpack.c.b16 %v2254, %v2253
      %v2293 = vpack.c.b16 %v2256, %v2255
      %v2294 = vpack.c.b16 %v2258, %v2257
      %v2295 = vpack.c.b16 %v2260, %v2259
      %v2296 = vpack.c.b16 %v2262, %v2261
      %v2297 = vpack.c.b16 %v2264, %v2263
      %v2298 = vpack.c.b16 %v2266, %v2265
      %2331 = vmatprep.subr.bf16.mxu0 0
      %2332 = vmatpush1.bf16.msra.mxu0 %v2267
      %2333 = vmatprep.subr.bf16.mxu0 0
      %2334 = vmatpush1.bf16.msra.mxu0 %v2268
      %2335 = vmatprep.subr.bf16.mxu0 0
      %2336 = vmatpush1.bf16.msra.mxu0 %v2269
      %2337 = vmatprep.subr.bf16.mxu0 0
      %2338 = vmatpush1.bf16.msra.mxu0 %v2270
      %2339 = vmatprep.subr.bf16.mxu0 0
      %2340 = vmatpush1.bf16.msra.mxu0 %v2271
      %2341 = vmatprep.subr.bf16.mxu0 0
      %2342 = vmatpush1.bf16.msra.mxu0 %v2272
      %2343 = vmatprep.subr.bf16.mxu0 0
      %2344 = vmatpush1.bf16.msra.mxu0 %v2273
      %2345 = vmatprep.subr.bf16.mxu0 0
      %2346 = vmatpush1.bf16.msra.mxu0 %v2274
      %2347 = vmatprep.subr.bf16.mxu0 0
      %2348 = vmatpush1.bf16.msra.mxu0 %v2275
      %2349 = vmatprep.subr.bf16.mxu0 0
      %2350 = vmatpush1.bf16.msra.mxu0 %v2276
      %2351 = vmatprep.subr.bf16.mxu0 0
      %2352 = vmatpush1.bf16.msra.mxu0 %v2277
      %2353 = vmatprep.subr.bf16.mxu0 0
      %2354 = vmatpush1.bf16.msra.mxu0 %v2278
      %2355 = vmatprep.subr.bf16.mxu0 0
      %2356 = vmatpush1.bf16.msra.mxu0 %v2279
      %2357 = vmatprep.subr.bf16.mxu0 0
      %2358 = vmatpush1.bf16.msra.mxu0 %v2280
      %2359 = vmatprep.subr.bf16.mxu0 0
      %2360 = vmatpush1.bf16.msra.mxu0 %v2281
      %2361 = vmatprep.subr.bf16.mxu0 0
      %2362 = vmatpush1.bf16.msra.mxu0 %v2282
      %2363 = vmatprep.mubr.bf16.mxu0 %v2065
      %2364 = vmatmul.mubr.bf16.gmra.mrb[0].mxu0 %v2064
      %v2365 = vpop.f32.mrb[0].mxu0
      %v2366 = vadd.f32 %v2137, %v2365
      %v2367 = vpop.f32.mrb[0].mxu0
      %v2368 = vpop.f32.mrb[0].mxu0
      %v2369 = vadd.f32 %v2137, %v2368
      %v2370 = vpop.f32.mrb[0].mxu0
      %2371 = vdwg.mxu0
      %2372 = vmatprep.subr.bf16.mxu0 0
      %2373 = vmatpush1.bf16.msra.mxu0 %v2283
      %2374 = vmatprep.subr.bf16.mxu0 0
      %2375 = vmatpush1.bf16.msra.mxu0 %v2284
      %2376 = vmatprep.subr.bf16.mxu0 0
      %2377 = vmatpush1.bf16.msra.mxu0 %v2285
      %2378 = vmatprep.subr.bf16.mxu0 0
      %2379 = vmatpush1.bf16.msra.mxu0 %v2286
      %2380 = vmatprep.subr.bf16.mxu0 0
      %2381 = vmatpush1.bf16.msra.mxu0 %v2287
      %2382 = vmatprep.subr.bf16.mxu0 0
      %2383 = vmatpush1.bf16.msra.mxu0 %v2288
      %2384 = vmatprep.subr.bf16.mxu0 0
      %2385 = vmatpush1.bf16.msra.mxu0 %v2289
      %2386 = vmatprep.subr.bf16.mxu0 0
      %2387 = vmatpush1.bf16.msra.mxu0 %v2290
      %2388 = vmatprep.subr.bf16.mxu0 0
      %2389 = vmatpush1.bf16.msra.mxu0 %v2291
      %2390 = vmatprep.subr.bf16.mxu0 0
      %2391 = vmatpush1.bf16.msra.mxu0 %v2292
      %2392 = vmatprep.subr.bf16.mxu0 0
      %2393 = vmatpush1.bf16.msra.mxu0 %v2293
      %2394 = vmatprep.subr.bf16.mxu0 0
      %2395 = vmatpush1.bf16.msra.mxu0 %v2294
      %2396 = vmatprep.subr.bf16.mxu0 0
      %2397 = vmatpush1.bf16.msra.mxu0 %v2295
      %2398 = vmatprep.subr.bf16.mxu0 0
      %2399 = vmatpush1.bf16.msra.mxu0 %v2296
      %2400 = vmatprep.subr.bf16.mxu0 0
      %2401 = vmatpush1.bf16.msra.mxu0 %v2297
      %2402 = vmatprep.subr.bf16.mxu0 0
      %2403 = vmatpush1.bf16.msra.mxu0 %v2298
      %2404 = vmatprep.mubr.bf16.mxu0 %v2067
      %2405 = vmatmul.mubr.bf16.gmra.mrb[0].mxu0 %v2066
      %v2406 = vpop.f32.mrb[0].mxu0
      %v2407 = vadd.f32 %v2366, %v2406
      %v2408 = vpop.f32.mrb[0].mxu0
      %v2409 = vpop.f32.mrb[0].mxu0
      %v2410 = vadd.f32 %v2369, %v2409
      %v2411 = vpop.f32.mrb[0].mxu0
      %2412 = vdwg.mxu0
      %v2413 = vadd.f32 %v1647, %v2407
      %v2414 = vadd.f32 %v1648, %v2410
      %2415 = vst [vmem:[#allocation2] sm:$0xff] %v2413
      %2416 = vst [vmem:[#allocation2 + $0x8] sm:$0xff] %v2414
      %p2417 = scmp.eq.s32.totalorder %s30, 1
      // Predicated region
      $region81: #{dit_forward.4} parent=75 // pred_check
        %p2418 = pneg %p2417
      $region82: #{dit_forward.4} parent=75 // pred_check_branch
        %2420 = sbr.rel (%p2418) target = $region84
      $region83: #{dit_forward.4} parent=75 // pred_region
        %v2421 = vpack.c.bf16 %v2414, %v2413
        %v2423 = vunpack.c.l.b16 %v2421
        %v2424 = vunpack.c.h.b16 %v2421
        %v2425 = vpack.c.b16 %v2423, %v2423
        %v2426 = vpack.c.b16 %v2424, %v2424
        %2429 = vst [vmem:[%s691] sm:$0xf] %v2425
        %2430 = vst [vmem:[%s691 + $0x4] sm:$0xf] %v2426
      $region84: #{dit_forward.4} parent=75 // pred_fallthru
        _
      %p2431 = scmp.lt.s32.totalorder %s29, 1
      %s2432 = scalar_select %p2431, %s29, 1
      %s2433 = smul.addr %s2432, 2
      %s2434 = smul.addr %s2433, 4
      %s2435 = scalar_lea.vmem %s14, %s2434
      // Predicated region
      $region85: #{dit_forward.4} parent=75 // pred_check
        %p2436 = pneg %p419
      $region86: #{dit_forward.4} parent=75 // pred_check_branch
        %2438 = sbr.rel (%p2436) target = $region88
      $region87: #{dit_forward.4} parent=75 // pred_region
        _
      $region88: #{dit_forward.4} parent=75 // pred_fallthru
        _
    $region76: #{dit_forward.4} parent=5 // pred_fallthru
      _
    %p2439 = scmp.le.s32.totalorder 2, %s20
    // Predicated region
    $region89: #{dit_forward.4} parent=5 // pred_check
      %p2440 = pneg %p2439
    $region90: #{dit_forward.4} parent=5 // pred_check_branch
      %2442 = sbr.rel (%p2440) target = $region92
    $region91: #{dit_forward.4} parent=5 // pred_region
      %s2443 = ssub.s32 %s20, 2
      // Predicated region
      $region93: #{dit_forward.4} parent=91 // pred_check
        %p2444 = pneg %p425
      $region94: #{dit_forward.4} parent=91 // pred_check_branch
        %2446 = sbr.rel (%p2444) target = $region96
      $region95: #{dit_forward.4} parent=91 // pred_region
        %p2447 = scmp.lt.s32.totalorder %s31, 1
        %s2448 = scalar_select %p2447, %s31, 1
        %s2449 = smul.addr %s2448, 2
        %s2450 = smul.addr %s2449, 4
        %s2451 = scalar_lea.vmem %s14, %s2450
      $region96: #{dit_forward.4} parent=91 // pred_fallthru
        _
    $region92: #{dit_forward.4} parent=5 // pred_fallthru
      _
  $region6: #{dit_forward.4} parent=0 // loop_footer
    %s24 = sadd.s32 1, %s20
  $region7: #{dit_forward.4} parent=0 // loop_footer_branch
    %19 = sbr.rel target = $region3
  $region8: #{dit_forward.4} parent=0 // loop_exit
    _

</llo_original>
